<compile_context>
chip_gen: v6e
topology: v6e:2x2x1
jax: 0.10.0
libtpu: 0.0.40
codegen_flags: <defaults>
</compile_context>

<pallas_src>
import jax
import jax.numpy as jnp
import numpy as np
from jax.experimental import pallas as pl
from jax.experimental.pallas import tpu as pltpu

# ---------------------------------------------------------------------------
# Model hyper-parameters (mirror ResnetFC.__init__)
# ---------------------------------------------------------------------------
D_IN = 3
D_LATENT = 8
D_HIDDEN = 128
D_OUT = 4
N_BLOCKS = 5
ALPHA = 1.0

TILE = 256                      # row tile (M side of the MXU)
K_PAD = 128                     # zx lanes padded 11 -> 128 (lane-dense input)
D_OUT_PAD = 128                 # output lanes padded 4 -> 128 (lane-dense store)
D_COMB = (N_BLOCKS + 1) * D_HIDDEN   # fused lin_in + lin_z output width (768)


# ---------------------------------------------------------------------------
# Pallas kernel: full ResnetFC forward for one tile of rows
# ---------------------------------------------------------------------------
def resnetfc_kernel(
    zx_ref,      # (TILE, K_PAD)                 f32, [z | x_in | 0-pad]
    w_comb_ref,  # (K_PAD, D_COMB)               bf16, fused lin_in + alpha*lin_z[*]
    b_comb_ref,  # (1, D_COMB)                   f32
    w0_ref,      # (N_BLOCKS, D_HIDDEN, D_HIDDEN) bf16, fc_0 of each block
    b0_ref,      # (N_BLOCKS, D_HIDDEN)           f32
    w1_ref,      # (N_BLOCKS, D_HIDDEN, D_HIDDEN) bf16, fc_1 of each block
    b1_ref,      # (N_BLOCKS, D_HIDDEN)           f32
    w_out_ref,   # (D_HIDDEN, D_OUT_PAD)          bf16
    b_out_ref,   # (1, D_OUT_PAD)                 f32
    out_ref,     # (TILE, D_OUT_PAD)              f32
):
    # One big matmul computes lin_in(x_in) and alpha*lin_z[blk](z) for every block
    # (alpha was folded into the lin_z columns/biases wrapper-side).
    zx = zx_ref[...].astype(jnp.bfloat16)
    h_all = jnp.dot(zx, w_comb_ref[...],
                    preferred_element_type=jnp.float32) + b_comb_ref[...]

    x = h_all[:, :D_HIDDEN]                                   # lin_in(x_in)

    # n_blocks resnet blocks (static unroll; n_blocks is small)
    for blk in range(N_BLOCKS):
        # latent injection: x = x + alpha * lin_z[blk](z)  (precomputed, lane-aligned slice)
        c0 = (blk + 1) * D_HIDDEN
        x = x + h_all[:, c0:c0 + D_HIDDEN]

        # ResnetBlockFC: net = fc_0(relu(x)); dx = fc_1(relu(net)); x = x + dx
        net = jnp.dot(jnp.maximum(x, 0.0).astype(jnp.bfloat16), w0_ref[blk],
                      preferred_element_type=jnp.float32) + b0_ref[blk][None, :]
        dx = jnp.dot(jnp.maximum(net, 0.0).astype(jnp.bfloat16), w1_ref[blk],
                     preferred_element_type=jnp.float32) + b1_ref[blk][None, :]
        x = x + dx

    # lin_out(relu(x))  (lane-dense 128-wide padded head)
    out = jnp.dot(jnp.maximum(x, 0.0).astype(jnp.bfloat16), w_out_ref[...],
                  preferred_element_type=jnp.float32) + b_out_ref[...]
    out_ref[...] = out.astype(out_ref.dtype)


# ---------------------------------------------------------------------------
# Wrapper
# ---------------------------------------------------------------------------
@jax.jit
def resnetfc_forward(zx_flat, params):
    n_rows = zx_flat.shape[0]
    d_zx = D_LATENT + D_IN
    n_pad_rows = ((n_rows + TILE - 1) // TILE) * TILE

    # Lane-dense, row-padded input: (n_pad_rows, 128), zero-filled.
    zx_p = jnp.zeros((n_pad_rows, K_PAD), jnp.float32)
    zx_p = zx_p.at[:n_rows, :d_zx].set(zx_flat)

    alpha = params["alpha"][0, 0]            # traced -> trainable alpha flows correctly

    # Fused lin_in + lin_z weight (block structured):
    #   cols [0:128)            fed only by the x_in rows -> lin_in
    #   cols [(b+1)*128:(b+2)*128) fed only by the z rows -> alpha * lin_z[b]
    w_comb = jnp.zeros((K_PAD, D_COMB), jnp.float32)
    w_comb = w_comb.at[D_LATENT:D_LATENT + D_IN, :D_HIDDEN].set(params["w_in"])
    for blk in range(N_BLOCKS):
        c0 = (blk + 1) * D_HIDDEN
        w_comb = w_comb.at[:D_LATENT, c0:c0 + D_HIDDEN].set(alpha * params["wz"][blk])
    b_comb = jnp.concatenate(
        [params["b_in"].reshape(1, D_HIDDEN)]
        + [(alpha * params["bz"][blk]).reshape(1, D_HIDDEN) for blk in range(N_BLOCKS)],
        axis=1,
    )

    # Lane-dense (128-wide) output head; real D_OUT columns sliced out after the call.
    w_out_p = jnp.zeros((D_HIDDEN, D_OUT_PAD), jnp.float32).at[:, :D_OUT].set(params["w_out"])
    b_out_p = jnp.zeros((1, D_OUT_PAD), jnp.float32).at[:, :D_OUT].set(params["b_out"])

    bf16 = lambda a: a.astype(jnp.bfloat16)

    grid = (n_pad_rows // TILE,)
    in_specs = [
        pl.BlockSpec((TILE, K_PAD), lambda i: (i, 0)),                      # zx
        pl.BlockSpec((K_PAD, D_COMB), lambda i: (0, 0)),                    # w_comb
        pl.BlockSpec((1, D_COMB), lambda i: (0, 0)),                        # b_comb
        pl.BlockSpec((N_BLOCKS, D_HIDDEN, D_HIDDEN), lambda i: (0, 0, 0)),  # w0
        pl.BlockSpec((N_BLOCKS, D_HIDDEN), lambda i: (0, 0)),               # b0
        pl.BlockSpec((N_BLOCKS, D_HIDDEN, D_HIDDEN), lambda i: (0, 0, 0)),  # w1
        pl.BlockSpec((N_BLOCKS, D_HIDDEN), lambda i: (0, 0)),               # b1
        pl.BlockSpec((D_HIDDEN, D_OUT_PAD), lambda i: (0, 0)),              # w_out
        pl.BlockSpec((1, D_OUT_PAD), lambda i: (0, 0)),                     # b_out
    ]
    out_specs = pl.BlockSpec((TILE, D_OUT_PAD), lambda i: (i, 0))

    out_p = pl.pallas_call(
        resnetfc_kernel,
        out_shape=jax.ShapeDtypeStruct((n_pad_rows, D_OUT_PAD), jnp.float32),
        grid=grid,
        in_specs=in_specs,
        out_specs=out_specs,
        compiler_params=pltpu.CompilerParams(
            dimension_semantics=("parallel",)),
    )(
        zx_p,
        bf16(w_comb), b_comb,
        bf16(params["w0"]), params["b0"],
        bf16(params["w1"]), params["b1"],
        bf16(w_out_p), b_out_p,
    )
    return out_p[:n_rows, :D_OUT]


# ---------------------------------------------------------------------------
# Pure-JAX reference (mirrors the PyTorch forward; bf16 matmul operands with
# f32 accumulation to match the kernel's precision) for correctness check
# ---------------------------------------------------------------------------
def resnetfc_ref(zx_flat, params):
    bf = lambda a: a.astype(jnp.bfloat16)
    z = zx_flat[:, :D_LATENT]
    x_in = zx_flat[:, D_LATENT:]
    alpha = params["alpha"][0, 0]
    x = jnp.dot(bf(x_in), bf(params["w_in"]),
                preferred_element_type=jnp.float32) + params["b_in"]
    for blk in range(N_BLOCKS):
        tz = jnp.dot(bf(z), bf(params["wz"][blk]),
                     preferred_element_type=jnp.float32) + params["bz"][blk]
        x = x + alpha * tz
        net = jnp.dot(bf(jnp.maximum(x, 0.0)), bf(params["w0"][blk]),
                      preferred_element_type=jnp.float32) + params["b0"][blk]
        dx = jnp.dot(bf(jnp.maximum(net, 0.0)), bf(params["w1"][blk]),
                     preferred_element_type=jnp.float32) + params["b1"][blk]
        x = x + dx
    return jnp.dot(bf(jnp.maximum(x, 0.0)), bf(params["w_out"]),
                   preferred_element_type=jnp.float32) + params["b_out"]


# ---------------------------------------------------------------------------
# Deterministic synthetic parameter init (shapes per ResnetFC.__init__)
# ---------------------------------------------------------------------------
def init_params(key):
    ks = jax.random.split(key, 5)

    def kaiming(k, fan_in, shape):
        return jax.random.normal(k, shape, jnp.float32) * jnp.sqrt(2.0 / fan_in)

    return {
        # lin_in: (d_in -> d_hidden)
        "w_in": kaiming(ks[0], D_IN, (D_IN, D_HIDDEN)),
        "b_in": jnp.zeros((1, D_HIDDEN), jnp.float32),
        # lin_z[i]: (d_latent -> d_hidden)
        "wz": kaiming(ks[1], D_LATENT, (N_BLOCKS, D_LATENT, D_HIDDEN)),
        "bz": jnp.zeros((N_BLOCKS, D_HIDDEN), jnp.float32),
        # blocks[i].fc_0: (d_hidden -> d_hidden)
        "w0": kaiming(ks[2], D_HIDDEN, (N_BLOCKS, D_HIDDEN, D_HIDDEN)),
        "b0": jnp.zeros((N_BLOCKS, D_HIDDEN), jnp.float32),
        # blocks[i].fc_1: PyTorch inits these to zero; use small random values
        # so the kernel compute is non-trivial.
        "w1": 0.01 * jax.random.normal(ks[3], (N_BLOCKS, D_HIDDEN, D_HIDDEN), jnp.float32),
        "b1": jnp.zeros((N_BLOCKS, D_HIDDEN), jnp.float32),
        # lin_out: (d_hidden -> d_out)
        "w_out": kaiming(ks[4], D_HIDDEN, (D_HIDDEN, D_OUT)),
        "b_out": jnp.zeros((1, D_OUT), jnp.float32),
        # alpha (scalar nn.Parameter)
        "alpha": jnp.full((1, 1), ALPHA, jnp.float32),
    }


if __name__ == "__main__":
    key = jax.random.PRNGKey(0)
    k_zx, k_par = jax.random.split(key)

    # Input: (batch=2, points=256, d_latent + d_in) -> 512 rows -> grid of 2 row tiles.
    B, P = 2, 256
    zx = jax.random.normal(k_zx, (B, P, D_LATENT + D_IN), jnp.float32)
    zx_flat = zx.reshape(-1, D_LATENT + D_IN)

    params = init_params(k_par)

    out = resnetfc_forward(zx_flat, params)
    out = jax.block_until_ready(out)

    ref = resnetfc_ref(zx_flat, params)
    # bf16-operand matmuls in both paths; tolerance covers accumulation-order drift.
    np.testing.assert_allclose(np.asarray(out), np.asarray(ref), rtol=1e-2, atol=1e-2)

    out = out.reshape(B, P, D_OUT)  # restore leading dims like the PyTorch module
    assert out.shape == (B, P, D_OUT)
    print("KERNEL_OK")
</pallas_src>

<mosaic_0001>
module attributes {stable_mosaic.version = 11 : i64} {
  func.func @resnetfc_kernel(%arg0: i32, %arg1: memref<256x128xf32, #tpu.memory_space<vmem>>, %arg2: memref<128x768xbf16, #tpu.memory_space<vmem>>, %arg3: memref<1x768xf32, #tpu.memory_space<vmem>>, %arg4: memref<5x128x128xbf16, #tpu.memory_space<vmem>>, %arg5: memref<5x128xf32, #tpu.memory_space<vmem>>, %arg6: memref<5x128x128xbf16, #tpu.memory_space<vmem>>, %arg7: memref<5x128xf32, #tpu.memory_space<vmem>>, %arg8: memref<128x128xbf16, #tpu.memory_space<vmem>>, %arg9: memref<1x128xf32, #tpu.memory_space<vmem>>, %arg10: memref<256x128xf32, #tpu.memory_space<vmem>>) attributes {dimension_semantics = [#tpu.dimension_semantics<parallel>], iteration_bounds = array<i64: 2>, scalar_prefetch = 0 : i64, scratch_operands = 0 : i64, tpu.core_type = #tpu.core_type<tc>, window_params = [{transform_indices = @transform_0, window_bounds = array<i64: 256, 128>}, {pipeline_mode = #tpu.pipeline_mode<synchronous>, transform_indices = @transform_1, window_bounds = array<i64: 128, 768>}, {pipeline_mode = #tpu.pipeline_mode<synchronous>, transform_indices = @transform_2, window_bounds = array<i64: 1, 768>}, {pipeline_mode = #tpu.pipeline_mode<synchronous>, transform_indices = @transform_3, window_bounds = array<i64: 5, 128, 128>}, {pipeline_mode = #tpu.pipeline_mode<synchronous>, transform_indices = @transform_4, window_bounds = array<i64: 5, 128>}, {pipeline_mode = #tpu.pipeline_mode<synchronous>, transform_indices = @transform_5, window_bounds = array<i64: 5, 128, 128>}, {pipeline_mode = #tpu.pipeline_mode<synchronous>, transform_indices = @transform_6, window_bounds = array<i64: 5, 128>}, {pipeline_mode = #tpu.pipeline_mode<synchronous>, transform_indices = @transform_7, window_bounds = array<i64: 128, 128>}, {pipeline_mode = #tpu.pipeline_mode<synchronous>, transform_indices = @transform_8, window_bounds = array<i64: 1, 128>}, {transform_indices = @transform_9, window_bounds = array<i64: 256, 128>}]} {
    %c0 = arith.constant 0 : index
    %c0_0 = arith.constant 0 : index
    %0 = vector.load %arg1[%c0, %c0_0] : memref<256x128xf32, #tpu.memory_space<vmem>>, vector<256x128xf32>
    %1 = arith.truncf %0 : vector<256x128xf32> to vector<256x128xbf16>
    %c0_1 = arith.constant 0 : index
    %c0_2 = arith.constant 0 : index
    %2 = vector.load %arg2[%c0_1, %c0_2] : memref<128x768xbf16, #tpu.memory_space<vmem>>, vector<128x768xbf16>
    %cst = arith.constant dense<0.000000e+00> : vector<256x768xf32>
    %3 = tpu.matmul %1, %2, %cst {dimension_numbers = #tpu.dot_dimension_numbers<[1], [0], [0], [1], [0, 0, 1, 1], [], []>} : vector<256x128xbf16>, vector<128x768xbf16>, vector<256x768xf32> -> vector<256x768xf32>
    %c0_3 = arith.constant 0 : index
    %c0_4 = arith.constant 0 : index
    %4 = vector.load %arg3[%c0_3, %c0_4] : memref<1x768xf32, #tpu.memory_space<vmem>>, vector<1x768xf32>
    %5 = vector.broadcast %4 : vector<1x768xf32> to vector<256x768xf32>
    %6 = arith.addf %3, %5 : vector<256x768xf32>
    %7 = vector.extract_strided_slice %6 {offsets = [0, 0], sizes = [256, 128], strides = [1, 1]} : vector<256x768xf32> to vector<256x128xf32>
    %8 = vector.extract_strided_slice %6 {offsets = [0, 128], sizes = [256, 128], strides = [1, 1]} : vector<256x768xf32> to vector<256x128xf32>
    %9 = arith.addf %7, %8 : vector<256x128xf32>
    %cst_5 = arith.constant 0.000000e+00 : f32
    %10 = vector.broadcast %cst_5 : f32 to vector<256x128xf32>
    %11 = arith.maximumf %9, %10 : vector<256x128xf32>
    %12 = arith.truncf %11 : vector<256x128xf32> to vector<256x128xbf16>
    %c0_6 = arith.constant 0 : index
    %c0_7 = arith.constant 0 : index
    %c0_8 = arith.constant 0 : index
    %13 = vector.load %arg4[%c0_6, %c0_7, %c0_8] : memref<5x128x128xbf16, #tpu.memory_space<vmem>>, vector<1x128x128xbf16>
    %14 = vector.shape_cast %13 : vector<1x128x128xbf16> to vector<128x128xbf16>
    %cst_9 = arith.constant dense<0.000000e+00> : vector<256x128xf32>
    %15 = tpu.matmul %12, %14, %cst_9 {dimension_numbers = #tpu.dot_dimension_numbers<[1], [0], [0], [1], [0, 0, 1, 1], [], []>} : vector<256x128xbf16>, vector<128x128xbf16>, vector<256x128xf32> -> vector<256x128xf32>
    %c0_10 = arith.constant 0 : index
    %c0_11 = arith.constant 0 : index
    %16 = vector.load %arg5[%c0_10, %c0_11] : memref<5x128xf32, #tpu.memory_space<vmem>>, vector<1x128xf32>
    %17 = vector.shape_cast %16 : vector<1x128xf32> to vector<128xf32>
    %18 = vector.shape_cast %17 : vector<128xf32> to vector<1x128xf32>
    %19 = vector.broadcast %18 : vector<1x128xf32> to vector<256x128xf32>
    %20 = arith.addf %15, %19 : vector<256x128xf32>
    %cst_12 = arith.constant 0.000000e+00 : f32
    %21 = vector.broadcast %cst_12 : f32 to vector<256x128xf32>
    %22 = arith.maximumf %20, %21 : vector<256x128xf32>
    %23 = arith.truncf %22 : vector<256x128xf32> to vector<256x128xbf16>
    %c0_13 = arith.constant 0 : index
    %c0_14 = arith.constant 0 : index
    %c0_15 = arith.constant 0 : index
    %24 = vector.load %arg6[%c0_13, %c0_14, %c0_15] : memref<5x128x128xbf16, #tpu.memory_space<vmem>>, vector<1x128x128xbf16>
    %25 = vector.shape_cast %24 : vector<1x128x128xbf16> to vector<128x128xbf16>
    %cst_16 = arith.constant dense<0.000000e+00> : vector<256x128xf32>
    %26 = tpu.matmul %23, %25, %cst_16 {dimension_numbers = #tpu.dot_dimension_numbers<[1], [0], [0], [1], [0, 0, 1, 1], [], []>} : vector<256x128xbf16>, vector<128x128xbf16>, vector<256x128xf32> -> vector<256x128xf32>
    %c0_17 = arith.constant 0 : index
    %c0_18 = arith.constant 0 : index
    %27 = vector.load %arg7[%c0_17, %c0_18] : memref<5x128xf32, #tpu.memory_space<vmem>>, vector<1x128xf32>
    %28 = vector.shape_cast %27 : vector<1x128xf32> to vector<128xf32>
    %29 = vector.shape_cast %28 : vector<128xf32> to vector<1x128xf32>
    %30 = vector.broadcast %29 : vector<1x128xf32> to vector<256x128xf32>
    %31 = arith.addf %26, %30 : vector<256x128xf32>
    %32 = arith.addf %9, %31 : vector<256x128xf32>
    %33 = vector.extract_strided_slice %6 {offsets = [0, 256], sizes = [256, 128], strides = [1, 1]} : vector<256x768xf32> to vector<256x128xf32>
    %34 = arith.addf %32, %33 : vector<256x128xf32>
    %cst_19 = arith.constant 0.000000e+00 : f32
    %35 = vector.broadcast %cst_19 : f32 to vector<256x128xf32>
    %36 = arith.maximumf %34, %35 : vector<256x128xf32>
    %37 = arith.truncf %36 : vector<256x128xf32> to vector<256x128xbf16>
    %c1 = arith.constant 1 : index
    %c0_20 = arith.constant 0 : index
    %c0_21 = arith.constant 0 : index
    %38 = vector.load %arg4[%c1, %c0_20, %c0_21] : memref<5x128x128xbf16, #tpu.memory_space<vmem>>, vector<1x128x128xbf16>
    %39 = vector.shape_cast %38 : vector<1x128x128xbf16> to vector<128x128xbf16>
    %cst_22 = arith.constant dense<0.000000e+00> : vector<256x128xf32>
    %40 = tpu.matmul %37, %39, %cst_22 {dimension_numbers = #tpu.dot_dimension_numbers<[1], [0], [0], [1], [0, 0, 1, 1], [], []>} : vector<256x128xbf16>, vector<128x128xbf16>, vector<256x128xf32> -> vector<256x128xf32>
    %c1_23 = arith.constant 1 : index
    %c0_24 = arith.constant 0 : index
    %41 = vector.load %arg5[%c1_23, %c0_24] : memref<5x128xf32, #tpu.memory_space<vmem>>, vector<1x128xf32>
    %42 = vector.shape_cast %41 : vector<1x128xf32> to vector<128xf32>
    %43 = vector.shape_cast %42 : vector<128xf32> to vector<1x128xf32>
    %44 = vector.broadcast %43 : vector<1x128xf32> to vector<256x128xf32>
    %45 = arith.addf %40, %44 : vector<256x128xf32>
    %cst_25 = arith.constant 0.000000e+00 : f32
    %46 = vector.broadcast %cst_25 : f32 to vector<256x128xf32>
    %47 = arith.maximumf %45, %46 : vector<256x128xf32>
    %48 = arith.truncf %47 : vector<256x128xf32> to vector<256x128xbf16>
    %c1_26 = arith.constant 1 : index
    %c0_27 = arith.constant 0 : index
    %c0_28 = arith.constant 0 : index
    %49 = vector.load %arg6[%c1_26, %c0_27, %c0_28] : memref<5x128x128xbf16, #tpu.memory_space<vmem>>, vector<1x128x128xbf16>
    %50 = vector.shape_cast %49 : vector<1x128x128xbf16> to vector<128x128xbf16>
    %cst_29 = arith.constant dense<0.000000e+00> : vector<256x128xf32>
    %51 = tpu.matmul %48, %50, %cst_29 {dimension_numbers = #tpu.dot_dimension_numbers<[1], [0], [0], [1], [0, 0, 1, 1], [], []>} : vector<256x128xbf16>, vector<128x128xbf16>, vector<256x128xf32> -> vector<256x128xf32>
    %c1_30 = arith.constant 1 : index
    %c0_31 = arith.constant 0 : index
    %52 = vector.load %arg7[%c1_30, %c0_31] : memref<5x128xf32, #tpu.memory_space<vmem>>, vector<1x128xf32>
    %53 = vector.shape_cast %52 : vector<1x128xf32> to vector<128xf32>
    %54 = vector.shape_cast %53 : vector<128xf32> to vector<1x128xf32>
    %55 = vector.broadcast %54 : vector<1x128xf32> to vector<256x128xf32>
    %56 = arith.addf %51, %55 : vector<256x128xf32>
    %57 = arith.addf %34, %56 : vector<256x128xf32>
    %58 = vector.extract_strided_slice %6 {offsets = [0, 384], sizes = [256, 128], strides = [1, 1]} : vector<256x768xf32> to vector<256x128xf32>
    %59 = arith.addf %57, %58 : vector<256x128xf32>
    %cst_32 = arith.constant 0.000000e+00 : f32
    %60 = vector.broadcast %cst_32 : f32 to vector<256x128xf32>
    %61 = arith.maximumf %59, %60 : vector<256x128xf32>
    %62 = arith.truncf %61 : vector<256x128xf32> to vector<256x128xbf16>
    %c2 = arith.constant 2 : index
    %c0_33 = arith.constant 0 : index
    %c0_34 = arith.constant 0 : index
    %63 = vector.load %arg4[%c2, %c0_33, %c0_34] : memref<5x128x128xbf16, #tpu.memory_space<vmem>>, vector<1x128x128xbf16>
    %64 = vector.shape_cast %63 : vector<1x128x128xbf16> to vector<128x128xbf16>
    %cst_35 = arith.constant dense<0.000000e+00> : vector<256x128xf32>
    %65 = tpu.matmul %62, %64, %cst_35 {dimension_numbers = #tpu.dot_dimension_numbers<[1], [0], [0], [1], [0, 0, 1, 1], [], []>} : vector<256x128xbf16>, vector<128x128xbf16>, vector<256x128xf32> -> vector<256x128xf32>
    %c2_36 = arith.constant 2 : index
    %c0_37 = arith.constant 0 : index
    %66 = vector.load %arg5[%c2_36, %c0_37] : memref<5x128xf32, #tpu.memory_space<vmem>>, vector<1x128xf32>
    %67 = vector.shape_cast %66 : vector<1x128xf32> to vector<128xf32>
    %68 = vector.shape_cast %67 : vector<128xf32> to vector<1x128xf32>
    %69 = vector.broadcast %68 : vector<1x128xf32> to vector<256x128xf32>
    %70 = arith.addf %65, %69 : vector<256x128xf32>
    %cst_38 = arith.constant 0.000000e+00 : f32
    %71 = vector.broadcast %cst_38 : f32 to vector<256x128xf32>
    %72 = arith.maximumf %70, %71 : vector<256x128xf32>
    %73 = arith.truncf %72 : vector<256x128xf32> to vector<256x128xbf16>
    %c2_39 = arith.constant 2 : index
    %c0_40 = arith.constant 0 : index
    %c0_41 = arith.constant 0 : index
    %74 = vector.load %arg6[%c2_39, %c0_40, %c0_41] : memref<5x128x128xbf16, #tpu.memory_space<vmem>>, vector<1x128x128xbf16>
    %75 = vector.shape_cast %74 : vector<1x128x128xbf16> to vector<128x128xbf16>
    %cst_42 = arith.constant dense<0.000000e+00> : vector<256x128xf32>
    %76 = tpu.matmul %73, %75, %cst_42 {dimension_numbers = #tpu.dot_dimension_numbers<[1], [0], [0], [1], [0, 0, 1, 1], [], []>} : vector<256x128xbf16>, vector<128x128xbf16>, vector<256x128xf32> -> vector<256x128xf32>
    %c2_43 = arith.constant 2 : index
    %c0_44 = arith.constant 0 : index
    %77 = vector.load %arg7[%c2_43, %c0_44] : memref<5x128xf32, #tpu.memory_space<vmem>>, vector<1x128xf32>
    %78 = vector.shape_cast %77 : vector<1x128xf32> to vector<128xf32>
    %79 = vector.shape_cast %78 : vector<128xf32> to vector<1x128xf32>
    %80 = vector.broadcast %79 : vector<1x128xf32> to vector<256x128xf32>
    %81 = arith.addf %76, %80 : vector<256x128xf32>
    %82 = arith.addf %59, %81 : vector<256x128xf32>
    %83 = vector.extract_strided_slice %6 {offsets = [0, 512], sizes = [256, 128], strides = [1, 1]} : vector<256x768xf32> to vector<256x128xf32>
    %84 = arith.addf %82, %83 : vector<256x128xf32>
    %cst_45 = arith.constant 0.000000e+00 : f32
    %85 = vector.broadcast %cst_45 : f32 to vector<256x128xf32>
    %86 = arith.maximumf %84, %85 : vector<256x128xf32>
    %87 = arith.truncf %86 : vector<256x128xf32> to vector<256x128xbf16>
    %c3 = arith.constant 3 : index
    %c0_46 = arith.constant 0 : index
    %c0_47 = arith.constant 0 : index
    %88 = vector.load %arg4[%c3, %c0_46, %c0_47] : memref<5x128x128xbf16, #tpu.memory_space<vmem>>, vector<1x128x128xbf16>
    %89 = vector.shape_cast %88 : vector<1x128x128xbf16> to vector<128x128xbf16>
    %cst_48 = arith.constant dense<0.000000e+00> : vector<256x128xf32>
    %90 = tpu.matmul %87, %89, %cst_48 {dimension_numbers = #tpu.dot_dimension_numbers<[1], [0], [0], [1], [0, 0, 1, 1], [], []>} : vector<256x128xbf16>, vector<128x128xbf16>, vector<256x128xf32> -> vector<256x128xf32>
    %c3_49 = arith.constant 3 : index
    %c0_50 = arith.constant 0 : index
    %91 = vector.load %arg5[%c3_49, %c0_50] : memref<5x128xf32, #tpu.memory_space<vmem>>, vector<1x128xf32>
    %92 = vector.shape_cast %91 : vector<1x128xf32> to vector<128xf32>
    %93 = vector.shape_cast %92 : vector<128xf32> to vector<1x128xf32>
    %94 = vector.broadcast %93 : vector<1x128xf32> to vector<256x128xf32>
    %95 = arith.addf %90, %94 : vector<256x128xf32>
    %cst_51 = arith.constant 0.000000e+00 : f32
    %96 = vector.broadcast %cst_51 : f32 to vector<256x128xf32>
    %97 = arith.maximumf %95, %96 : vector<256x128xf32>
    %98 = arith.truncf %97 : vector<256x128xf32> to vector<256x128xbf16>
    %c3_52 = arith.constant 3 : index
    %c0_53 = arith.constant 0 : index
    %c0_54 = arith.constant 0 : index
    %99 = vector.load %arg6[%c3_52, %c0_53, %c0_54] : memref<5x128x128xbf16, #tpu.memory_space<vmem>>, vector<1x128x128xbf16>
    %100 = vector.shape_cast %99 : vector<1x128x128xbf16> to vector<128x128xbf16>
    %cst_55 = arith.constant dense<0.000000e+00> : vector<256x128xf32>
    %101 = tpu.matmul %98, %100, %cst_55 {dimension_numbers = #tpu.dot_dimension_numbers<[1], [0], [0], [1], [0, 0, 1, 1], [], []>} : vector<256x128xbf16>, vector<128x128xbf16>, vector<256x128xf32> -> vector<256x128xf32>
    %c3_56 = arith.constant 3 : index
    %c0_57 = arith.constant 0 : index
    %102 = vector.load %arg7[%c3_56, %c0_57] : memref<5x128xf32, #tpu.memory_space<vmem>>, vector<1x128xf32>
    %103 = vector.shape_cast %102 : vector<1x128xf32> to vector<128xf32>
    %104 = vector.shape_cast %103 : vector<128xf32> to vector<1x128xf32>
    %105 = vector.broadcast %104 : vector<1x128xf32> to vector<256x128xf32>
    %106 = arith.addf %101, %105 : vector<256x128xf32>
    %107 = arith.addf %84, %106 : vector<256x128xf32>
    %108 = vector.extract_strided_slice %6 {offsets = [0, 640], sizes = [256, 128], strides = [1, 1]} : vector<256x768xf32> to vector<256x128xf32>
    %109 = arith.addf %107, %108 : vector<256x128xf32>
    %cst_58 = arith.constant 0.000000e+00 : f32
    %110 = vector.broadcast %cst_58 : f32 to vector<256x128xf32>
    %111 = arith.maximumf %109, %110 : vector<256x128xf32>
    %112 = arith.truncf %111 : vector<256x128xf32> to vector<256x128xbf16>
    %c4 = arith.constant 4 : index
    %c0_59 = arith.constant 0 : index
    %c0_60 = arith.constant 0 : index
    %113 = vector.load %arg4[%c4, %c0_59, %c0_60] : memref<5x128x128xbf16, #tpu.memory_space<vmem>>, vector<1x128x128xbf16>
    %114 = vector.shape_cast %113 : vector<1x128x128xbf16> to vector<128x128xbf16>
    %cst_61 = arith.constant dense<0.000000e+00> : vector<256x128xf32>
    %115 = tpu.matmul %112, %114, %cst_61 {dimension_numbers = #tpu.dot_dimension_numbers<[1], [0], [0], [1], [0, 0, 1, 1], [], []>} : vector<256x128xbf16>, vector<128x128xbf16>, vector<256x128xf32> -> vector<256x128xf32>
    %c4_62 = arith.constant 4 : index
    %c0_63 = arith.constant 0 : index
    %116 = vector.load %arg5[%c4_62, %c0_63] : memref<5x128xf32, #tpu.memory_space<vmem>>, vector<1x128xf32>
    %117 = vector.shape_cast %116 : vector<1x128xf32> to vector<128xf32>
    %118 = vector.shape_cast %117 : vector<128xf32> to vector<1x128xf32>
    %119 = vector.broadcast %118 : vector<1x128xf32> to vector<256x128xf32>
    %120 = arith.addf %115, %119 : vector<256x128xf32>
    %cst_64 = arith.constant 0.000000e+00 : f32
    %121 = vector.broadcast %cst_64 : f32 to vector<256x128xf32>
    %122 = arith.maximumf %120, %121 : vector<256x128xf32>
    %123 = arith.truncf %122 : vector<256x128xf32> to vector<256x128xbf16>
    %c4_65 = arith.constant 4 : index
    %c0_66 = arith.constant 0 : index
    %c0_67 = arith.constant 0 : index
    %124 = vector.load %arg6[%c4_65, %c0_66, %c0_67] : memref<5x128x128xbf16, #tpu.memory_space<vmem>>, vector<1x128x128xbf16>
    %125 = vector.shape_cast %124 : vector<1x128x128xbf16> to vector<128x128xbf16>
    %cst_68 = arith.constant dense<0.000000e+00> : vector<256x128xf32>
    %126 = tpu.matmul %123, %125, %cst_68 {dimension_numbers = #tpu.dot_dimension_numbers<[1], [0], [0], [1], [0, 0, 1, 1], [], []>} : vector<256x128xbf16>, vector<128x128xbf16>, vector<256x128xf32> -> vector<256x128xf32>
    %c4_69 = arith.constant 4 : index
    %c0_70 = arith.constant 0 : index
    %127 = vector.load %arg7[%c4_69, %c0_70] : memref<5x128xf32, #tpu.memory_space<vmem>>, vector<1x128xf32>
    %128 = vector.shape_cast %127 : vector<1x128xf32> to vector<128xf32>
    %129 = vector.shape_cast %128 : vector<128xf32> to vector<1x128xf32>
    %130 = vector.broadcast %129 : vector<1x128xf32> to vector<256x128xf32>
    %131 = arith.addf %126, %130 : vector<256x128xf32>
    %132 = arith.addf %109, %131 : vector<256x128xf32>
    %cst_71 = arith.constant 0.000000e+00 : f32
    %133 = vector.broadcast %cst_71 : f32 to vector<256x128xf32>
    %134 = arith.maximumf %132, %133 : vector<256x128xf32>
    %135 = arith.truncf %134 : vector<256x128xf32> to vector<256x128xbf16>
    %c0_72 = arith.constant 0 : index
    %c0_73 = arith.constant 0 : index
    %136 = vector.load %arg8[%c0_72, %c0_73] : memref<128x128xbf16, #tpu.memory_space<vmem>>, vector<128x128xbf16>
    %cst_74 = arith.constant dense<0.000000e+00> : vector<256x128xf32>
    %137 = tpu.matmul %135, %136, %cst_74 {dimension_numbers = #tpu.dot_dimension_numbers<[1], [0], [0], [1], [0, 0, 1, 1], [], []>} : vector<256x128xbf16>, vector<128x128xbf16>, vector<256x128xf32> -> vector<256x128xf32>
    %c0_75 = arith.constant 0 : index
    %c0_76 = arith.constant 0 : index
    %138 = vector.load %arg9[%c0_75, %c0_76] : memref<1x128xf32, #tpu.memory_space<vmem>>, vector<1x128xf32>
    %139 = vector.broadcast %138 : vector<1x128xf32> to vector<256x128xf32>
    %140 = arith.addf %137, %139 : vector<256x128xf32>
    %c0_77 = arith.constant 0 : index
    %c0_78 = arith.constant 0 : index
    %141 = vector.load %arg10[%c0_77, %c0_78] : memref<256x128xf32, #tpu.memory_space<vmem>>, vector<256x128xf32>
    tpu.vector_store %arg10[%c0_77, %c0_78], %140 {strides = array<i32>} : memref<256x128xf32, #tpu.memory_space<vmem>>, vector<256x128xf32>,
    return
  }
  func.func @transform_0(%arg0: i32) -> (i32, i32) {
    %c0_i32 = arith.constant 0 : i32
    %c0_i32_0 = arith.constant 0 : i32
    return %arg0, %c0_i32 : i32, i32
  }
  func.func @transform_1(%arg0: i32) -> (i32, i32) {
    %c0_i32 = arith.constant 0 : i32
    %c0_i32_0 = arith.constant 0 : i32
    %c0_i32_1 = arith.constant 0 : i32
    return %c0_i32, %c0_i32_0 : i32, i32
  }
  func.func @transform_2(%arg0: i32) -> (i32, i32) {
    %c0_i32 = arith.constant 0 : i32
    %c0_i32_0 = arith.constant 0 : i32
    %c0_i32_1 = arith.constant 0 : i32
    return %c0_i32, %c0_i32_0 : i32, i32
  }
  func.func @transform_3(%arg0: i32) -> (i32, i32, i32) {
    %c0_i32 = arith.constant 0 : i32
    %c0_i32_0 = arith.constant 0 : i32
    %c0_i32_1 = arith.constant 0 : i32
    %c0_i32_2 = arith.constant 0 : i32
    return %c0_i32, %c0_i32_0, %c0_i32_1 : i32, i32, i32
  }
  func.func @transform_4(%arg0: i32) -> (i32, i32) {
    %c0_i32 = arith.constant 0 : i32
    %c0_i32_0 = arith.constant 0 : i32
    %c0_i32_1 = arith.constant 0 : i32
    return %c0_i32, %c0_i32_0 : i32, i32
  }
  func.func @transform_5(%arg0: i32) -> (i32, i32, i32) {
    %c0_i32 = arith.constant 0 : i32
    %c0_i32_0 = arith.constant 0 : i32
    %c0_i32_1 = arith.constant 0 : i32
    %c0_i32_2 = arith.constant 0 : i32
    return %c0_i32, %c0_i32_0, %c0_i32_1 : i32, i32, i32
  }
  func.func @transform_6(%arg0: i32) -> (i32, i32) {
    %c0_i32 = arith.constant 0 : i32
    %c0_i32_0 = arith.constant 0 : i32
    %c0_i32_1 = arith.constant 0 : i32
    return %c0_i32, %c0_i32_0 : i32, i32
  }
  func.func @transform_7(%arg0: i32) -> (i32, i32) {
    %c0_i32 = arith.constant 0 : i32
    %c0_i32_0 = arith.constant 0 : i32
    %c0_i32_1 = arith.constant 0 : i32
    return %c0_i32, %c0_i32_0 : i32, i32
  }
  func.func @transform_8(%arg0: i32) -> (i32, i32) {
    %c0_i32 = arith.constant 0 : i32
    %c0_i32_0 = arith.constant 0 : i32
    %c0_i32_1 = arith.constant 0 : i32
    return %c0_i32, %c0_i32_0 : i32, i32
  }
  func.func @transform_9(%arg0: i32) -> (i32, i32) {
    %c0_i32 = arith.constant 0 : i32
    %c0_i32_0 = arith.constant 0 : i32
    return %arg0, %c0_i32 : i32, i32
  }
}

</mosaic_0001>

<llo_original>
// kernel: resnetfc_forward.1
$region0: #{resnetfc_forward.1}
  #allocation0 [shape = 'u32[]', space=smem, size = 0x4, offset = 0x4, fixed_abs, tag = 'smem constant byte address 0x4 - core index']
  #allocation1 [shape = 'u32[144,128]{1,0:T(1,128)}', space=vmem, size = 0x12000, scoped, tag = 'internal scratch']
  %s0 = inlined_call_operand.vmem [shape: f32[512,128], index: 0, kind: input, shape index: {}]
  %s1 = inlined_call_operand.vmem [shape: bf16[128,768], index: 1, kind: input, shape index: {}]
  %s2 = inlined_call_operand.vmem [shape: f32[1,768], index: 2, kind: input, shape index: {}]
  %s3 = inlined_call_operand.vmem [shape: bf16[5,128,128], index: 3, kind: input, shape index: {}]
  %s4 = inlined_call_operand.vmem [shape: f32[5,128], index: 4, kind: input, shape index: {}]
  %s5 = inlined_call_operand.vmem [shape: bf16[5,128,128], index: 5, kind: input, shape index: {}]
  %s6 = inlined_call_operand.vmem [shape: f32[5,128], index: 6, kind: input, shape index: {}]
  %s7 = inlined_call_operand.vmem [shape: bf16[128,128], index: 7, kind: input, shape index: {}]
  %s8 = inlined_call_operand.vmem [shape: f32[1,128], index: 8, kind: input, shape index: {}]
  %s9 = inlined_call_operand.vmem [shape: f32[512,128], index: 9, kind: output, shape index: {}]
  %s10 = sld [smem:[#allocation0]]
  $region69: #{resnetfc_forward.1} parent=0
    _
  %s12 = ssub.s32 1, %s10
  %s13 = scalar_select 0, %s12, %s10
  loop: start=0, step=1, limit=4
  $region2: #{resnetfc_forward.1} parent=0 // loop_pre_header
    _
  $region3: #{resnetfc_forward.1} parent=0 // loop_header
    %s15 = sphi 0, %s19
    %p16 = scmp.ge.s32.totalorder %s15, 4
    %s25 = sphi 0, %s27
    %s28 = sphi 0, %s25
    %s29 = sphi 0, %s28
    %s45 = sphi 0, %s29
    %s49 = sphi 0, %s49
    %s51 = sphi 0, %s49
    %s52 = sphi 0, %s51
    %s66 = sphi 0, %s52
    %s70 = sphi 0, %s70
    %s72 = sphi 0, %s70
    %s73 = sphi 0, %s72
    %s87 = sphi 0, %s73
    %s91 = sphi 0, %s91
    %s93 = sphi 0, %s91
    %s94 = sphi 0, %s93
    %s108 = sphi 0, %s94
    %s112 = sphi 0, %s112
    %s114 = sphi 0, %s112
    %s115 = sphi 0, %s114
    %s129 = sphi 0, %s115
    %s133 = sphi 0, %s133
    %s135 = sphi 0, %s133
    %s136 = sphi 0, %s135
    %s150 = sphi 0, %s136
    %s154 = sphi 0, %s154
    %s156 = sphi 0, %s154
    %s157 = sphi 0, %s156
    %s171 = sphi 0, %s157
    %s175 = sphi 0, %s175
    %s177 = sphi 0, %s175
    %s178 = sphi 0, %s177
    %s192 = sphi 0, %s178
    %s196 = sphi 0, %s196
    %s198 = sphi 0, %s196
    %s199 = sphi 0, %s198
    %s213 = sphi 0, %s199
    %s219 = sphi 0, %s221
    %s222 = sphi 0, %s219
    %s223 = sphi 0, %s222
    %s239 = sphi 0, %s223
  $region4: #{resnetfc_forward.1} parent=0 // loop_header_branch
    %18 = sbr.rel (%p16) target = $region8
  $region5: #{resnetfc_forward.1} parent=0 // loop_body
    %s20 = ssub.s32 %s15, 1
    %s21 = ssub.s32 %s15, 2
    %s22 = sadd.s32 %s15, 1
    %s23 = ssub.s32 %s15, %s22
    %p24 = scmp.eq.s32.totalorder %s23, 0
    %s26 = sadd.s32 %s25, 1
    %s27 = scalar_select %p24, %s25, %s26
    %p30 = pneg %p24
    %p31 = scmp.eq.s32.totalorder %s15, 1
    %p32 = por %p30, %p31
    %p33 = scmp.ne.s32.totalorder %s25, %s28
    %p34 = scmp.eq.s32.totalorder %s15, 0
    %p35 = por %p33, %p34
    %p36 = scmp.ne.s32.totalorder %s25, %s28
    %p37 = scmp.eq.s32.totalorder %s20, 1
    %p38 = por %p36, %p37
    %p39 = scmp.ne.s32.totalorder %s28, %s29
    %p40 = scmp.eq.s32.totalorder %s20, 0
    %p41 = por %p39, %p40
    %p42 = scmp.ne.s32.totalorder %s28, %s29
    %p43 = scmp.eq.s32.totalorder %s21, 1
    %p44 = por %p42, %p43
    %p46 = scmp.ne.s32.totalorder %s29, %s45
    %p47 = scmp.eq.s32.totalorder %s21, 0
    %p48 = por %p46, %p47
    %s50 = sadd.s32 %s49, 1
    %p53 = scmp.eq.s32.totalorder %s15, 1
    %p54 = scmp.ne.s32.totalorder %s49, %s51
    %p55 = scmp.eq.s32.totalorder %s15, 0
    %p56 = por %p54, %p55
    %p57 = scmp.ne.s32.totalorder %s49, %s51
    %p58 = scmp.eq.s32.totalorder %s20, 1
    %p59 = por %p57, %p58
    %p60 = scmp.ne.s32.totalorder %s51, %s52
    %p61 = scmp.eq.s32.totalorder %s20, 0
    %p62 = por %p60, %p61
    %p63 = scmp.ne.s32.totalorder %s51, %s52
    %p64 = scmp.eq.s32.totalorder %s21, 1
    %p65 = por %p63, %p64
    %p67 = scmp.ne.s32.totalorder %s52, %s66
    %p68 = scmp.eq.s32.totalorder %s21, 0
    %p69 = por %p67, %p68
    %s71 = sadd.s32 %s70, 1
    %p74 = scmp.eq.s32.totalorder %s15, 1
    %p75 = scmp.ne.s32.totalorder %s70, %s72
    %p76 = scmp.eq.s32.totalorder %s15, 0
    %p77 = por %p75, %p76
    %p78 = scmp.ne.s32.totalorder %s70, %s72
    %p79 = scmp.eq.s32.totalorder %s20, 1
    %p80 = por %p78, %p79
    %p81 = scmp.ne.s32.totalorder %s72, %s73
    %p82 = scmp.eq.s32.totalorder %s20, 0
    %p83 = por %p81, %p82
    %p84 = scmp.ne.s32.totalorder %s72, %s73
    %p85 = scmp.eq.s32.totalorder %s21, 1
    %p86 = por %p84, %p85
    %p88 = scmp.ne.s32.totalorder %s73, %s87
    %p89 = scmp.eq.s32.totalorder %s21, 0
    %p90 = por %p88, %p89
    %s92 = sadd.s32 %s91, 1
    %p95 = scmp.eq.s32.totalorder %s15, 1
    %p96 = scmp.ne.s32.totalorder %s91, %s93
    %p97 = scmp.eq.s32.totalorder %s15, 0
    %p98 = por %p96, %p97
    %p99 = scmp.ne.s32.totalorder %s91, %s93
    %p100 = scmp.eq.s32.totalorder %s20, 1
    %p101 = por %p99, %p100
    %p102 = scmp.ne.s32.totalorder %s93, %s94
    %p103 = scmp.eq.s32.totalorder %s20, 0
    %p104 = por %p102, %p103
    %p105 = scmp.ne.s32.totalorder %s93, %s94
    %p106 = scmp.eq.s32.totalorder %s21, 1
    %p107 = por %p105, %p106
    %p109 = scmp.ne.s32.totalorder %s94, %s108
    %p110 = scmp.eq.s32.totalorder %s21, 0
    %p111 = por %p109, %p110
    %s113 = sadd.s32 %s112, 1
    %p116 = scmp.eq.s32.totalorder %s15, 1
    %p117 = scmp.ne.s32.totalorder %s112, %s114
    %p118 = scmp.eq.s32.totalorder %s15, 0
    %p119 = por %p117, %p118
    %p120 = scmp.ne.s32.totalorder %s112, %s114
    %p121 = scmp.eq.s32.totalorder %s20, 1
    %p122 = por %p120, %p121
    %p123 = scmp.ne.s32.totalorder %s114, %s115
    %p124 = scmp.eq.s32.totalorder %s20, 0
    %p125 = por %p123, %p124
    %p126 = scmp.ne.s32.totalorder %s114, %s115
    %p127 = scmp.eq.s32.totalorder %s21, 1
    %p128 = por %p126, %p127
    %p130 = scmp.ne.s32.totalorder %s115, %s129
    %p131 = scmp.eq.s32.totalorder %s21, 0
    %p132 = por %p130, %p131
    %s134 = sadd.s32 %s133, 1
    %p137 = scmp.eq.s32.totalorder %s15, 1
    %p138 = scmp.ne.s32.totalorder %s133, %s135
    %p139 = scmp.eq.s32.totalorder %s15, 0
    %p140 = por %p138, %p139
    %p141 = scmp.ne.s32.totalorder %s133, %s135
    %p142 = scmp.eq.s32.totalorder %s20, 1
    %p143 = por %p141, %p142
    %p144 = scmp.ne.s32.totalorder %s135, %s136
    %p145 = scmp.eq.s32.totalorder %s20, 0
    %p146 = por %p144, %p145
    %p147 = scmp.ne.s32.totalorder %s135, %s136
    %p148 = scmp.eq.s32.totalorder %s21, 1
    %p149 = por %p147, %p148
    %p151 = scmp.ne.s32.totalorder %s136, %s150
    %p152 = scmp.eq.s32.totalorder %s21, 0
    %p153 = por %p151, %p152
    %s155 = sadd.s32 %s154, 1
    %p158 = scmp.eq.s32.totalorder %s15, 1
    %p159 = scmp.ne.s32.totalorder %s154, %s156
    %p160 = scmp.eq.s32.totalorder %s15, 0
    %p161 = por %p159, %p160
    %p162 = scmp.ne.s32.totalorder %s154, %s156
    %p163 = scmp.eq.s32.totalorder %s20, 1
    %p164 = por %p162, %p163
    %p165 = scmp.ne.s32.totalorder %s156, %s157
    %p166 = scmp.eq.s32.totalorder %s20, 0
    %p167 = por %p165, %p166
    %p168 = scmp.ne.s32.totalorder %s156, %s157
    %p169 = scmp.eq.s32.totalorder %s21, 1
    %p170 = por %p168, %p169
    %p172 = scmp.ne.s32.totalorder %s157, %s171
    %p173 = scmp.eq.s32.totalorder %s21, 0
    %p174 = por %p172, %p173
    %s176 = sadd.s32 %s175, 1
    %p179 = scmp.eq.s32.totalorder %s15, 1
    %p180 = scmp.ne.s32.totalorder %s175, %s177
    %p181 = scmp.eq.s32.totalorder %s15, 0
    %p182 = por %p180, %p181
    %p183 = scmp.ne.s32.totalorder %s175, %s177
    %p184 = scmp.eq.s32.totalorder %s20, 1
    %p185 = por %p183, %p184
    %p186 = scmp.ne.s32.totalorder %s177, %s178
    %p187 = scmp.eq.s32.totalorder %s20, 0
    %p188 = por %p186, %p187
    %p189 = scmp.ne.s32.totalorder %s177, %s178
    %p190 = scmp.eq.s32.totalorder %s21, 1
    %p191 = por %p189, %p190
    %p193 = scmp.ne.s32.totalorder %s178, %s192
    %p194 = scmp.eq.s32.totalorder %s21, 0
    %p195 = por %p193, %p194
    %s197 = sadd.s32 %s196, 1
    %p200 = scmp.eq.s32.totalorder %s15, 1
    %p201 = scmp.ne.s32.totalorder %s196, %s198
    %p202 = scmp.eq.s32.totalorder %s15, 0
    %p203 = por %p201, %p202
    %p204 = scmp.ne.s32.totalorder %s196, %s198
    %p205 = scmp.eq.s32.totalorder %s20, 1
    %p206 = por %p204, %p205
    %p207 = scmp.ne.s32.totalorder %s198, %s199
    %p208 = scmp.eq.s32.totalorder %s20, 0
    %p209 = por %p207, %p208
    %p210 = scmp.ne.s32.totalorder %s198, %s199
    %p211 = scmp.eq.s32.totalorder %s21, 1
    %p212 = por %p210, %p211
    %p214 = scmp.ne.s32.totalorder %s199, %s213
    %p215 = scmp.eq.s32.totalorder %s21, 0
    %p216 = por %p214, %p215
    %s217 = ssub.s32 %s15, %s22
    %p218 = scmp.eq.s32.totalorder %s217, 0
    %s220 = sadd.s32 %s219, 1
    %s221 = scalar_select %p218, %s219, %s220
    %p224 = pneg %p218
    %p225 = scmp.eq.s32.totalorder %s15, 1
    %p226 = por %p224, %p225
    %p227 = scmp.ne.s32.totalorder %s219, %s222
    %p228 = scmp.eq.s32.totalorder %s15, 0
    %p229 = por %p227, %p228
    %p230 = scmp.ne.s32.totalorder %s219, %s222
    %p231 = scmp.eq.s32.totalorder %s20, 1
    %p232 = por %p230, %p231
    %p233 = scmp.ne.s32.totalorder %s222, %s223
    %p234 = scmp.eq.s32.totalorder %s20, 0
    %p235 = por %p233, %p234
    %p236 = scmp.ne.s32.totalorder %s222, %s223
    %p237 = scmp.eq.s32.totalorder %s21, 1
    %p238 = por %p236, %p237
    %p240 = scmp.ne.s32.totalorder %s223, %s239
    %p241 = scmp.eq.s32.totalorder %s21, 0
    %p242 = por %p240, %p241
    %p243 = scmp.le.s32.totalorder 1, %s15
    %p244 = scmp.lt.s32.totalorder %s15, 3
    %p245 = pnand %p243, %p244
    %p246 = pneg %p245
    // Predicated region
    $region9: #{resnetfc_forward.1} parent=5 // pred_check
      _
    $region10: #{resnetfc_forward.1} parent=5 // pred_check_branch
      %248 = sbr.rel (%p245) target = $region12
    $region11: #{resnetfc_forward.1} parent=5 // pred_region
      %s249 = ssub.s32 %s15, 1
      // Predicated region
      $region13: #{resnetfc_forward.1} parent=11 // pred_check
        %p250 = pneg %p62
      $region14: #{resnetfc_forward.1} parent=11 // pred_check_branch
        %252 = sbr.rel (%p250) target = $region16
      $region15: #{resnetfc_forward.1} parent=11 // pred_region
        _
      $region16: #{resnetfc_forward.1} parent=11 // pred_fallthru
        _
      // Predicated region
      $region17: #{resnetfc_forward.1} parent=11 // pred_check
        %p253 = pneg %p83
      $region18: #{resnetfc_forward.1} parent=11 // pred_check_branch
        %255 = sbr.rel (%p253) target = $region20
      $region19: #{resnetfc_forward.1} parent=11 // pred_region
        _
      $region20: #{resnetfc_forward.1} parent=11 // pred_fallthru
        _
      // Predicated region
      $region21: #{resnetfc_forward.1} parent=11 // pred_check
        %p256 = pneg %p104
      $region22: #{resnetfc_forward.1} parent=11 // pred_check_branch
        %258 = sbr.rel (%p256) target = $region24
      $region23: #{resnetfc_forward.1} parent=11 // pred_region
        _
      $region24: #{resnetfc_forward.1} parent=11 // pred_fallthru
        _
      // Predicated region
      $region25: #{resnetfc_forward.1} parent=11 // pred_check
        %p259 = pneg %p125
      $region26: #{resnetfc_forward.1} parent=11 // pred_check_branch
        %261 = sbr.rel (%p259) target = $region28
      $region27: #{resnetfc_forward.1} parent=11 // pred_region
        _
      $region28: #{resnetfc_forward.1} parent=11 // pred_fallthru
        _
      // Predicated region
      $region29: #{resnetfc_forward.1} parent=11 // pred_check
        %p262 = pneg %p146
      $region30: #{resnetfc_forward.1} parent=11 // pred_check_branch
        %264 = sbr.rel (%p262) target = $region32
      $region31: #{resnetfc_forward.1} parent=11 // pred_region
        _
      $region32: #{resnetfc_forward.1} parent=11 // pred_fallthru
        _
      // Predicated region
      $region33: #{resnetfc_forward.1} parent=11 // pred_check
        %p265 = pneg %p167
      $region34: #{resnetfc_forward.1} parent=11 // pred_check_branch
        %267 = sbr.rel (%p265) target = $region36
      $region35: #{resnetfc_forward.1} parent=11 // pred_region
        _
      $region36: #{resnetfc_forward.1} parent=11 // pred_fallthru
        _
      // Predicated region
      $region37: #{resnetfc_forward.1} parent=11 // pred_check
        %p268 = pneg %p188
      $region38: #{resnetfc_forward.1} parent=11 // pred_check_branch
        %270 = sbr.rel (%p268) target = $region40
      $region39: #{resnetfc_forward.1} parent=11 // pred_region
        _
      $region40: #{resnetfc_forward.1} parent=11 // pred_fallthru
        _
      // Predicated region
      $region41: #{resnetfc_forward.1} parent=11 // pred_check
        %p271 = pneg %p209
      $region42: #{resnetfc_forward.1} parent=11 // pred_check_branch
        %273 = sbr.rel (%p271) target = $region44
      $region43: #{resnetfc_forward.1} parent=11 // pred_region
        _
      $region44: #{resnetfc_forward.1} parent=11 // pred_fallthru
        _
    $region12: #{resnetfc_forward.1} parent=5 // pred_fallthru
      _
    %p274 = scmp.lt.s32.totalorder %s15, 2
    // Predicated region
    $region45: #{resnetfc_forward.1} parent=5 // pred_check
      %p275 = pneg %p274
    $region46: #{resnetfc_forward.1} parent=5 // pred_check_branch
      %277 = sbr.rel (%p275) target = $region48
    $region47: #{resnetfc_forward.1} parent=5 // pred_region
      // Predicated region
      $region49: #{resnetfc_forward.1} parent=47 // pred_check
        %p278 = pneg %p35
      $region50: #{resnetfc_forward.1} parent=47 // pred_check_branch
        %280 = sbr.rel (%p278) target = $region52
      $region51: #{resnetfc_forward.1} parent=47 // pred_region
        %s281 = smul.u32 32, %s15
        %p282 = scmp.lt.s32.totalorder %s281, 63
        %s283 = scalar_select %p282, %s281, 63
        %s284 = smul.addr %s283, 8
        %s285 = scalar_lea.vmem %s0, %s284
        %s286 = smul.u32 32, %s15
      $region52: #{resnetfc_forward.1} parent=47 // pred_fallthru
        _
    $region48: #{resnetfc_forward.1} parent=5 // pred_fallthru
      _
    %p287 = scmp.le.s32.totalorder 1, %s15
    %p288 = scmp.lt.s32.totalorder %s15, 3
    %p289 = pnand %p287, %p288
    %p290 = pneg %p289
    // Predicated region
    $region53: #{resnetfc_forward.1} parent=5 // pred_check
      _
    $region54: #{resnetfc_forward.1} parent=5 // pred_check_branch
      %292 = sbr.rel (%p289) target = $region56
    $region55: #{resnetfc_forward.1} parent=5 // pred_region
      %s293 = ssub.s32 %s15, 1
      %s294 = smul.u32 32, %s20
      %p295 = scmp.lt.s32.totalorder %s294, 63
      %s296 = scalar_select %p295, %s294, 63
      %s297 = smul.addr %s296, 8
      %s298 = scalar_lea.vmem %s0, %s297
      %p299 = pneg %p41
      %p300 = pneg %p38
      %p301 = pneg %p62
      %p302 = pneg %p59
      %p303 = pneg %p83
      %p304 = pneg %p80
      %p305 = pneg %p104
      %p306 = pneg %p101
      %p307 = pneg %p125
      %p308 = pneg %p122
      %p309 = pneg %p146
      %p310 = pneg %p143
      %p311 = pneg %p167
      %p312 = pneg %p164
      %p313 = pneg %p188
      %p314 = pneg %p185
      %p315 = pneg %p209
      %p316 = pneg %p206
      %p317 = pneg %p235
      %p318 = pneg %p232
      %s319 = smul.u32 32, %s20
      %p320 = scmp.lt.s32.totalorder %s319, 63
      %s321 = scalar_select %p320, %s319, 63
      %s322 = smul.addr %s321, 8
      %s323 = scalar_lea.vmem %s9, %s322
      %s324 = smul.u32 32, %s20
      %p325 = scmp.lt.s32.totalorder %s324, 63
      %s326 = scalar_select %p325, %s324, 63
      %s327 = smul.addr %s326, 8
      %s328 = scalar_lea.vmem %s0, %s327
      %s329 = smul.u32 32, %s20
      %s330 = smul.u32 32, %s20
      %p331 = scmp.lt.s32.totalorder %s330, 63
      %s332 = scalar_select %p331, %s330, 63
      %s333 = smul.addr %s332, 8
      %s334 = scalar_lea.vmem %s9, %s333
      %s335 = smul.u32 32, %s20
      %v337 = vld [vmem:[%s328] sm:$0xff]
      %v338 = vld [vmem:[%s328 + $0x8] sm:$0xff]
      %v339 = vld [vmem:[%s328 + $0x10] sm:$0xff]
      %v340 = vld [vmem:[%s328 + $0x18] sm:$0xff]
      %v341 = vld [vmem:[%s328 + $0x20] sm:$0xff]
      %v342 = vld [vmem:[%s328 + $0x28] sm:$0xff]
      %v343 = vld [vmem:[%s328 + $0x30] sm:$0xff]
      %v344 = vld [vmem:[%s328 + $0x38] sm:$0xff]
      %v345 = vld [vmem:[%s328 + $0x40] sm:$0xff]
      %v346 = vld [vmem:[%s328 + $0x48] sm:$0xff]
      %v347 = vld [vmem:[%s328 + $0x50] sm:$0xff]
      %v348 = vld [vmem:[%s328 + $0x58] sm:$0xff]
      %v349 = vld [vmem:[%s328 + $0x60] sm:$0xff]
      %v350 = vld [vmem:[%s328 + $0x68] sm:$0xff]
      %v351 = vld [vmem:[%s328 + $0x70] sm:$0xff]
      %v352 = vld [vmem:[%s328 + $0x78] sm:$0xff]
      %v353 = vld [vmem:[%s328 + $0x80] sm:$0xff]
      %v354 = vld [vmem:[%s328 + $0x88] sm:$0xff]
      %v355 = vld [vmem:[%s328 + $0x90] sm:$0xff]
      %v356 = vld [vmem:[%s328 + $0x98] sm:$0xff]
      %v357 = vld [vmem:[%s328 + $0xa0] sm:$0xff]
      %v358 = vld [vmem:[%s328 + $0xa8] sm:$0xff]
      %v359 = vld [vmem:[%s328 + $0xb0] sm:$0xff]
      %v360 = vld [vmem:[%s328 + $0xb8] sm:$0xff]
      %v361 = vld [vmem:[%s328 + $0xc0] sm:$0xff]
      %v362 = vld [vmem:[%s328 + $0xc8] sm:$0xff]
      %v363 = vld [vmem:[%s328 + $0xd0] sm:$0xff]
      %v364 = vld [vmem:[%s328 + $0xd8] sm:$0xff]
      %v365 = vld [vmem:[%s328 + $0xe0] sm:$0xff]
      %v366 = vld [vmem:[%s328 + $0xe8] sm:$0xff]
      %v367 = vld [vmem:[%s328 + $0xf0] sm:$0xff]
      %v368 = vld [vmem:[%s328 + $0xf8] sm:$0xff]
      %v369 = vpack.c.bf16 %v338, %v337
      %v370 = vpack.c.bf16 %v340, %v339
      %v371 = vpack.c.bf16 %v342, %v341
      %v372 = vpack.c.bf16 %v344, %v343
      %v373 = vpack.c.bf16 %v346, %v345
      %v374 = vpack.c.bf16 %v348, %v347
      %v375 = vpack.c.bf16 %v350, %v349
      %v376 = vpack.c.bf16 %v352, %v351
      %v377 = vpack.c.bf16 %v354, %v353
      %v378 = vpack.c.bf16 %v356, %v355
      %v379 = vpack.c.bf16 %v358, %v357
      %v380 = vpack.c.bf16 %v360, %v359
      %v381 = vpack.c.bf16 %v362, %v361
      %v382 = vpack.c.bf16 %v364, %v363
      %v383 = vpack.c.bf16 %v366, %v365
      %v384 = vpack.c.bf16 %v368, %v367
      %v385 = vld [vmem:[%s1] sm:$0xff]
      %v386 = vld [vmem:[%s1 + $0x8] sm:$0xff]
      %v387 = vld [vmem:[%s1 + $0x10] sm:$0xff]
      %v388 = vld [vmem:[%s1 + $0x18] sm:$0xff]
      %v389 = vld [vmem:[%s1 + $0x20] sm:$0xff]
      %v390 = vld [vmem:[%s1 + $0x28] sm:$0xff]
      %v391 = vld [vmem:[%s1 + $0x30] sm:$0xff]
      %v392 = vld [vmem:[%s1 + $0x38] sm:$0xff]
      %v393 = vld [vmem:[%s1 + $0x40] sm:$0xff]
      %v394 = vld [vmem:[%s1 + $0x48] sm:$0xff]
      %v395 = vld [vmem:[%s1 + $0x50] sm:$0xff]
      %v396 = vld [vmem:[%s1 + $0x58] sm:$0xff]
      %v397 = vld [vmem:[%s1 + $0x60] sm:$0xff]
      %v398 = vld [vmem:[%s1 + $0x68] sm:$0xff]
      %v399 = vld [vmem:[%s1 + $0x70] sm:$0xff]
      %v400 = vld [vmem:[%s1 + $0x78] sm:$0xff]
      %v401 = vld [vmem:[%s1 + $0x80] sm:$0xff]
      %v402 = vld [vmem:[%s1 + $0x88] sm:$0xff]
      %v403 = vld [vmem:[%s1 + $0x90] sm:$0xff]
      %v404 = vld [vmem:[%s1 + $0x98] sm:$0xff]
      %v405 = vld [vmem:[%s1 + $0xa0] sm:$0xff]
      %v406 = vld [vmem:[%s1 + $0xa8] sm:$0xff]
      %v407 = vld [vmem:[%s1 + $0xb0] sm:$0xff]
      %v408 = vld [vmem:[%s1 + $0xb8] sm:$0xff]
      %v409 = vld [vmem:[%s1 + $0xc0] sm:$0xff]
      %v410 = vld [vmem:[%s1 + $0xc8] sm:$0xff]
      %v411 = vld [vmem:[%s1 + $0xd0] sm:$0xff]
      %v412 = vld [vmem:[%s1 + $0xd8] sm:$0xff]
      %v413 = vld [vmem:[%s1 + $0xe0] sm:$0xff]
      %v414 = vld [vmem:[%s1 + $0xe8] sm:$0xff]
      %v415 = vld [vmem:[%s1 + $0xf0] sm:$0xff]
      %v416 = vld [vmem:[%s1 + $0xf8] sm:$0xff]
      %v417 = vld [vmem:[%s1 + $0x100] sm:$0xff]
      %v418 = vld [vmem:[%s1 + $0x108] sm:$0xff]
      %v419 = vld [vmem:[%s1 + $0x110] sm:$0xff]
      %v420 = vld [vmem:[%s1 + $0x118] sm:$0xff]
      %v421 = vld [vmem:[%s1 + $0x120] sm:$0xff]
      %v422 = vld [vmem:[%s1 + $0x128] sm:$0xff]
      %v423 = vld [vmem:[%s1 + $0x130] sm:$0xff]
      %v424 = vld [vmem:[%s1 + $0x138] sm:$0xff]
      %v425 = vld [vmem:[%s1 + $0x140] sm:$0xff]
      %v426 = vld [vmem:[%s1 + $0x148] sm:$0xff]
      %v427 = vld [vmem:[%s1 + $0x150] sm:$0xff]
      %v428 = vld [vmem:[%s1 + $0x158] sm:$0xff]
      %v429 = vld [vmem:[%s1 + $0x160] sm:$0xff]
      %v430 = vld [vmem:[%s1 + $0x168] sm:$0xff]
      %v431 = vld [vmem:[%s1 + $0x170] sm:$0xff]
      %v432 = vld [vmem:[%s1 + $0x178] sm:$0xff]
      %v433 = vld [vmem:[%s2] sm:$0x3f]
      %v435 = vlaneseq
      %v436 = vshrl.u32 %v435, 7
      %v437 = vsub.s32 0, %v436
      %v438 = vrot.slane %v433, %v437
      %v439 = vlaneseq
      %v440 = vshrl.u32 %v439, 7
      %v441 = vsub.s32 1, %v440
      %v442 = vrot.slane %v433, %v441
      %v443 = vlaneseq
      %v444 = vshrl.u32 %v443, 7
      %v445 = vsub.s32 2, %v444
      %v446 = vrot.slane %v433, %v445
      %v447 = vlaneseq
      %v448 = vshrl.u32 %v447, 7
      %v449 = vsub.s32 3, %v448
      %v450 = vrot.slane %v433, %v449
      %v451 = vlaneseq
      %v452 = vshrl.u32 %v451, 7
      %v453 = vsub.s32 4, %v452
      %v454 = vrot.slane %v433, %v453
      %v455 = vlaneseq
      %v456 = vshrl.u32 %v455, 7
      %v457 = vsub.s32 5, %v456
      %v458 = vrot.slane %v433, %v457
      %v513 = vunpack.c.l.b16 %v385
      %v514 = vunpack.c.h.b16 %v385
      %v515 = vunpack.c.l.b16 %v386
      %v516 = vunpack.c.h.b16 %v386
      %v517 = vunpack.c.l.b16 %v387
      %v518 = vunpack.c.h.b16 %v387
      %v519 = vunpack.c.l.b16 %v388
      %v520 = vunpack.c.h.b16 %v388
      %v521 = vunpack.c.l.b16 %v389
      %v522 = vunpack.c.h.b16 %v389
      %v523 = vunpack.c.l.b16 %v390
      %v524 = vunpack.c.h.b16 %v390
      %v525 = vunpack.c.l.b16 %v391
      %v526 = vunpack.c.h.b16 %v391
      %v527 = vunpack.c.l.b16 %v392
      %v528 = vunpack.c.h.b16 %v392
      %v529 = vunpack.c.l.b16 %v393
      %v530 = vunpack.c.h.b16 %v393
      %v531 = vunpack.c.l.b16 %v394
      %v532 = vunpack.c.h.b16 %v394
      %v533 = vunpack.c.l.b16 %v395
      %v534 = vunpack.c.h.b16 %v395
      %v535 = vunpack.c.l.b16 %v396
      %v536 = vunpack.c.h.b16 %v396
      %v537 = vunpack.c.l.b16 %v397
      %v538 = vunpack.c.h.b16 %v397
      %v539 = vunpack.c.l.b16 %v398
      %v540 = vunpack.c.h.b16 %v398
      %v541 = vunpack.c.l.b16 %v399
      %v542 = vunpack.c.h.b16 %v399
      %v543 = vunpack.c.l.b16 %v400
      %v544 = vunpack.c.h.b16 %v400
      %v545 = vunpack.c.l.b16 %v401
      %v546 = vunpack.c.h.b16 %v401
      %v547 = vunpack.c.l.b16 %v402
      %v548 = vunpack.c.h.b16 %v402
      %v549 = vunpack.c.l.b16 %v403
      %v550 = vunpack.c.h.b16 %v403
      %v551 = vunpack.c.l.b16 %v404
      %v552 = vunpack.c.h.b16 %v404
      %v553 = vunpack.c.l.b16 %v405
      %v554 = vunpack.c.h.b16 %v405
      %v555 = vunpack.c.l.b16 %v406
      %v556 = vunpack.c.h.b16 %v406
      %v557 = vunpack.c.l.b16 %v407
      %v558 = vunpack.c.h.b16 %v407
      %v559 = vunpack.c.l.b16 %v408
      %v560 = vunpack.c.h.b16 %v408
      %v561 = vunpack.c.l.b16 %v409
      %v562 = vunpack.c.h.b16 %v409
      %v563 = vunpack.c.l.b16 %v410
      %v564 = vunpack.c.h.b16 %v410
      %v565 = vunpack.c.l.b16 %v411
      %v566 = vunpack.c.h.b16 %v411
      %v567 = vunpack.c.l.b16 %v412
      %v568 = vunpack.c.h.b16 %v412
      %v569 = vunpack.c.l.b16 %v413
      %v570 = vunpack.c.h.b16 %v413
      %v571 = vunpack.c.l.b16 %v414
      %v572 = vunpack.c.h.b16 %v414
      %v573 = vunpack.c.l.b16 %v415
      %v574 = vunpack.c.h.b16 %v415
      %v575 = vunpack.c.l.b16 %v416
      %v576 = vunpack.c.h.b16 %v416
      %v577 = vunpack.c.l.b16 %v417
      %v578 = vunpack.c.h.b16 %v417
      %v579 = vunpack.c.l.b16 %v418
      %v580 = vunpack.c.h.b16 %v418
      %v581 = vunpack.c.l.b16 %v419
      %v582 = vunpack.c.h.b16 %v419
      %v583 = vunpack.c.l.b16 %v420
      %v584 = vunpack.c.h.b16 %v420
      %v585 = vunpack.c.l.b16 %v421
      %v586 = vunpack.c.h.b16 %v421
      %v587 = vunpack.c.l.b16 %v422
      %v588 = vunpack.c.h.b16 %v422
      %v589 = vunpack.c.l.b16 %v423
      %v590 = vunpack.c.h.b16 %v423
      %v591 = vunpack.c.l.b16 %v424
      %v592 = vunpack.c.h.b16 %v424
      %v593 = vunpack.c.l.b16 %v425
      %v594 = vunpack.c.h.b16 %v425
      %v595 = vunpack.c.l.b16 %v426
      %v596 = vunpack.c.h.b16 %v426
      %v597 = vunpack.c.l.b16 %v427
      %v598 = vunpack.c.h.b16 %v427
      %v599 = vunpack.c.l.b16 %v428
      %v600 = vunpack.c.h.b16 %v428
      %v601 = vunpack.c.l.b16 %v429
      %v602 = vunpack.c.h.b16 %v429
      %v603 = vunpack.c.l.b16 %v430
      %v604 = vunpack.c.h.b16 %v430
      %v605 = vunpack.c.l.b16 %v431
      %v606 = vunpack.c.h.b16 %v431
      %v607 = vunpack.c.l.b16 %v432
      %v608 = vunpack.c.h.b16 %v432
      %v609 = vpack.c.b16 %v519, %v513
      %v610 = vpack.c.b16 %v520, %v514
      %v611 = vpack.c.b16 %v521, %v515
      %v612 = vpack.c.b16 %v522, %v516
      %v613 = vpack.c.b16 %v523, %v517
      %v614 = vpack.c.b16 %v524, %v518
      %v615 = vpack.c.b16 %v531, %v525
      %v616 = vpack.c.b16 %v532, %v526
      %v617 = vpack.c.b16 %v533, %v527
      %v618 = vpack.c.b16 %v534, %v528
      %v619 = vpack.c.b16 %v535, %v529
      %v620 = vpack.c.b16 %v536, %v530
      %v621 = vpack.c.b16 %v543, %v537
      %v622 = vpack.c.b16 %v544, %v538
      %v623 = vpack.c.b16 %v545, %v539
      %v624 = vpack.c.b16 %v546, %v540
      %v625 = vpack.c.b16 %v547, %v541
      %v626 = vpack.c.b16 %v548, %v542
      %v627 = vpack.c.b16 %v555, %v549
      %v628 = vpack.c.b16 %v556, %v550
      %v629 = vpack.c.b16 %v557, %v551
      %v630 = vpack.c.b16 %v558, %v552
      %v631 = vpack.c.b16 %v559, %v553
      %v632 = vpack.c.b16 %v560, %v554
      %v633 = vpack.c.b16 %v567, %v561
      %v634 = vpack.c.b16 %v568, %v562
      %v635 = vpack.c.b16 %v569, %v563
      %v636 = vpack.c.b16 %v570, %v564
      %v637 = vpack.c.b16 %v571, %v565
      %v638 = vpack.c.b16 %v572, %v566
      %v639 = vpack.c.b16 %v579, %v573
      %v640 = vpack.c.b16 %v580, %v574
      %v641 = vpack.c.b16 %v581, %v575
      %v642 = vpack.c.b16 %v582, %v576
      %v643 = vpack.c.b16 %v583, %v577
      %v644 = vpack.c.b16 %v584, %v578
      %v645 = vpack.c.b16 %v591, %v585
      %v646 = vpack.c.b16 %v592, %v586
      %v647 = vpack.c.b16 %v593, %v587
      %v648 = vpack.c.b16 %v594, %v588
      %v649 = vpack.c.b16 %v595, %v589
      %v650 = vpack.c.b16 %v596, %v590
      %v651 = vpack.c.b16 %v603, %v597
      %v652 = vpack.c.b16 %v604, %v598
      %v653 = vpack.c.b16 %v605, %v599
      %v654 = vpack.c.b16 %v606, %v600
      %v655 = vpack.c.b16 %v607, %v601
      %v656 = vpack.c.b16 %v608, %v602
      %705 = vmatprep.subr.bf16.mxu0 %v652
      %706 = vmatpush1.bf16.msra.mxu0 %v651
      %707 = vmatprep.subr.bf16.mxu0 %v646
      %708 = vmatpush1.bf16.msra.mxu0 %v645
      %709 = vmatprep.subr.bf16.mxu0 %v640
      %710 = vmatpush1.bf16.msra.mxu0 %v639
      %711 = vmatprep.subr.bf16.mxu0 %v634
      %712 = vmatpush1.bf16.msra.mxu0 %v633
      %713 = vmatprep.subr.bf16.mxu0 %v628
      %714 = vmatpush1.bf16.msra.mxu0 %v627
      %715 = vmatprep.subr.bf16.mxu0 %v622
      %716 = vmatpush1.bf16.msra.mxu0 %v621
      %717 = vmatprep.subr.bf16.mxu0 %v616
      %718 = vmatpush1.bf16.msra.mxu0 %v615
      %719 = vmatprep.subr.bf16.mxu0 %v610
      %720 = vmatpush1.bf16.msra.mxu0 %v609
      %721 = vmatprep.subr.bf16.mxu0 0
      %722 = vmatpush2.bf16.msra.mxu0 0
      %723 = vmatprep.subr.bf16.mxu0 0
      %724 = vmatpush2.bf16.msra.mxu0 0
      %725 = vmatprep.subr.bf16.mxu0 0
      %726 = vmatpush2.bf16.msra.mxu0 0
      %727 = vmatprep.subr.bf16.mxu0 0
      %728 = vmatpush2.bf16.msra.mxu0 0
      %729 = vmatprep.subr.bf16.mxu0 0
      %730 = vmatpush2.bf16.msra.mxu0 0
      %731 = vmatprep.subr.bf16.mxu0 0
      %732 = vmatpush2.bf16.msra.mxu0 0
      %733 = vmatprep.subr.bf16.mxu0 0
      %734 = vmatpush2.bf16.msra.mxu0 0
      %735 = vmatprep.subr.bf16.mxu0 0
      %736 = vmatpush2.bf16.msra.mxu0 0
      %737 = vmatprep.mubr.bf16.mxu0 0
      %738 = vmatmul.mubr.bf16.gmra.mxu0 %v369
      %v739 = vpop.f32.mrf.mxu0
      %v740 = vadd.f32 %v438, %v739
      %v741 = vpop.f32.mrf.mxu0
      %v742 = vadd.f32 %v442, %v741
      %v743 = vpop.f32.mrf.mxu0
      %v744 = vadd.f32 %v438, %v743
      %v745 = vpop.f32.mrf.mxu0
      %v746 = vadd.f32 %v442, %v745
      %747 = vmatprep.mubr.bf16.mxu0 0
      %748 = vmatmul.mubr.bf16.gmra.mxu0 %v370
      %v749 = vpop.f32.mrf.mxu0
      %v750 = vadd.f32 %v438, %v749
      %v751 = vpop.f32.mrf.mxu0
      %v752 = vadd.f32 %v442, %v751
      %v753 = vpop.f32.mrf.mxu0
      %v754 = vadd.f32 %v438, %v753
      %v755 = vpop.f32.mrf.mxu0
      %v756 = vadd.f32 %v442, %v755
      %757 = vmatprep.mubr.bf16.mxu0 0
      %758 = vmatmul.mubr.bf16.gmra.mxu0 %v371
      %v759 = vpop.f32.mrf.mxu0
      %v760 = vadd.f32 %v438, %v759
      %v761 = vpop.f32.mrf.mxu0
      %v762 = vadd.f32 %v442, %v761
      %v763 = vpop.f32.mrf.mxu0
      %v764 = vadd.f32 %v438, %v763
      %v765 = vpop.f32.mrf.mxu0
      %v766 = vadd.f32 %v442, %v765
      %767 = vmatprep.mubr.bf16.mxu0 0
      %768 = vmatmul.mubr.bf16.gmra.mxu0 %v372
      %v769 = vpop.f32.mrf.mxu0
      %v770 = vadd.f32 %v438, %v769
      %v771 = vpop.f32.mrf.mxu0
      %v772 = vadd.f32 %v442, %v771
      %v773 = vpop.f32.mrf.mxu0
      %v774 = vadd.f32 %v438, %v773
      %v775 = vpop.f32.mrf.mxu0
      %v776 = vadd.f32 %v442, %v775
      %777 = vmatprep.mubr.bf16.mxu0 0
      %778 = vmatmul.mubr.bf16.gmra.mxu0 %v373
      %v779 = vpop.f32.mrf.mxu0
      %v780 = vadd.f32 %v438, %v779
      %v781 = vpop.f32.mrf.mxu0
      %v782 = vadd.f32 %v442, %v781
      %v783 = vpop.f32.mrf.mxu0
      %v784 = vadd.f32 %v438, %v783
      %v785 = vpop.f32.mrf.mxu0
      %v786 = vadd.f32 %v442, %v785
      %787 = vmatprep.mubr.bf16.mxu0 0
      %788 = vmatmul.mubr.bf16.gmra.mxu0 %v374
      %v789 = vpop.f32.mrf.mxu0
      %v790 = vadd.f32 %v438, %v789
      %v791 = vpop.f32.mrf.mxu0
      %v792 = vadd.f32 %v442, %v791
      %v793 = vpop.f32.mrf.mxu0
      %v794 = vadd.f32 %v438, %v793
      %v795 = vpop.f32.mrf.mxu0
      %v796 = vadd.f32 %v442, %v795
      %797 = vmatprep.mubr.bf16.mxu0 0
      %798 = vmatmul.mubr.bf16.gmra.mxu0 %v375
      %v799 = vpop.f32.mrf.mxu0
      %v800 = vadd.f32 %v438, %v799
      %v801 = vpop.f32.mrf.mxu0
      %v802 = vadd.f32 %v442, %v801
      %v803 = vpop.f32.mrf.mxu0
      %v804 = vadd.f32 %v438, %v803
      %v805 = vpop.f32.mrf.mxu0
      %v806 = vadd.f32 %v442, %v805
      %807 = vmatprep.mubr.bf16.mxu0 0
      %808 = vmatmul.mubr.bf16.gmra.mxu0 %v376
      %v809 = vpop.f32.mrf.mxu0
      %v810 = vadd.f32 %v438, %v809
      %v811 = vpop.f32.mrf.mxu0
      %v812 = vadd.f32 %v442, %v811
      %v813 = vpop.f32.mrf.mxu0
      %v814 = vadd.f32 %v438, %v813
      %v815 = vpop.f32.mrf.mxu0
      %v816 = vadd.f32 %v442, %v815
      %817 = vmatprep.mubr.bf16.mxu0 0
      %818 = vmatmul.mubr.bf16.gmra.mxu0 %v377
      %v819 = vpop.f32.mrf.mxu0
      %v820 = vadd.f32 %v438, %v819
      %v821 = vpop.f32.mrf.mxu0
      %v822 = vadd.f32 %v442, %v821
      %v823 = vpop.f32.mrf.mxu0
      %v824 = vadd.f32 %v438, %v823
      %v825 = vpop.f32.mrf.mxu0
      %v826 = vadd.f32 %v442, %v825
      %827 = vmatprep.mubr.bf16.mxu0 0
      %828 = vmatmul.mubr.bf16.gmra.mxu0 %v378
      %v829 = vpop.f32.mrf.mxu0
      %v830 = vadd.f32 %v438, %v829
      %v831 = vpop.f32.mrf.mxu0
      %v832 = vadd.f32 %v442, %v831
      %v833 = vpop.f32.mrf.mxu0
      %v834 = vadd.f32 %v438, %v833
      %v835 = vpop.f32.mrf.mxu0
      %v836 = vadd.f32 %v442, %v835
      %837 = vmatprep.mubr.bf16.mxu0 0
      %838 = vmatmul.mubr.bf16.gmra.mxu0 %v379
      %v839 = vpop.f32.mrf.mxu0
      %v840 = vadd.f32 %v438, %v839
      %v841 = vpop.f32.mrf.mxu0
      %v842 = vadd.f32 %v442, %v841
      %v843 = vpop.f32.mrf.mxu0
      %v844 = vadd.f32 %v438, %v843
      %v845 = vpop.f32.mrf.mxu0
      %v846 = vadd.f32 %v442, %v845
      %847 = vmatprep.mubr.bf16.mxu0 0
      %848 = vmatmul.mubr.bf16.gmra.mxu0 %v380
      %v849 = vpop.f32.mrf.mxu0
      %v850 = vadd.f32 %v438, %v849
      %v851 = vpop.f32.mrf.mxu0
      %v852 = vadd.f32 %v442, %v851
      %v853 = vpop.f32.mrf.mxu0
      %v854 = vadd.f32 %v438, %v853
      %v855 = vpop.f32.mrf.mxu0
      %v856 = vadd.f32 %v442, %v855
      %857 = vmatprep.mubr.bf16.mxu0 0
      %858 = vmatmul.mubr.bf16.gmra.mxu0 %v381
      %v859 = vpop.f32.mrf.mxu0
      %v860 = vadd.f32 %v438, %v859
      %v861 = vpop.f32.mrf.mxu0
      %v862 = vadd.f32 %v442, %v861
      %v863 = vpop.f32.mrf.mxu0
      %v864 = vadd.f32 %v438, %v863
      %v865 = vpop.f32.mrf.mxu0
      %v866 = vadd.f32 %v442, %v865
      %867 = vmatprep.mubr.bf16.mxu0 0
      %868 = vmatmul.mubr.bf16.gmra.mxu0 %v382
      %v869 = vpop.f32.mrf.mxu0
      %v870 = vadd.f32 %v438, %v869
      %v871 = vpop.f32.mrf.mxu0
      %v872 = vadd.f32 %v442, %v871
      %v873 = vpop.f32.mrf.mxu0
      %v874 = vadd.f32 %v438, %v873
      %v875 = vpop.f32.mrf.mxu0
      %v876 = vadd.f32 %v442, %v875
      %877 = vmatprep.mubr.bf16.mxu0 0
      %878 = vmatmul.mubr.bf16.gmra.mxu0 %v383
      %v879 = vpop.f32.mrf.mxu0
      %v880 = vadd.f32 %v438, %v879
      %v881 = vpop.f32.mrf.mxu0
      %v882 = vadd.f32 %v442, %v881
      %v883 = vpop.f32.mrf.mxu0
      %v884 = vadd.f32 %v438, %v883
      %v885 = vpop.f32.mrf.mxu0
      %v886 = vadd.f32 %v442, %v885
      %887 = vmatprep.mubr.bf16.mxu0 0
      %888 = vmatmul.mubr.bf16.gmra.mxu0 %v384
      %v889 = vpop.f32.mrf.mxu0
      %v890 = vadd.f32 %v438, %v889
      %v891 = vpop.f32.mrf.mxu0
      %v892 = vadd.f32 %v442, %v891
      %v893 = vpop.f32.mrf.mxu0
      %v894 = vadd.f32 %v438, %v893
      %v895 = vpop.f32.mrf.mxu0
      %v896 = vadd.f32 %v442, %v895
      %897 = vdwg.mxu0
      %898 = vmatprep.subr.bf16.mxu0 %v654
      %899 = vmatpush1.bf16.msra.mxu0 %v653
      %900 = vmatprep.subr.bf16.mxu0 %v648
      %901 = vmatpush1.bf16.msra.mxu0 %v647
      %902 = vmatprep.subr.bf16.mxu0 %v642
      %903 = vmatpush1.bf16.msra.mxu0 %v641
      %904 = vmatprep.subr.bf16.mxu0 %v636
      %905 = vmatpush1.bf16.msra.mxu0 %v635
      %906 = vmatprep.subr.bf16.mxu0 %v630
      %907 = vmatpush1.bf16.msra.mxu0 %v629
      %908 = vmatprep.subr.bf16.mxu0 %v624
      %909 = vmatpush1.bf16.msra.mxu0 %v623
      %910 = vmatprep.subr.bf16.mxu0 %v618
      %911 = vmatpush1.bf16.msra.mxu0 %v617
      %912 = vmatprep.subr.bf16.mxu0 %v612
      %913 = vmatpush1.bf16.msra.mxu0 %v611
      %914 = vmatprep.subr.bf16.mxu0 0
      %915 = vmatpush2.bf16.msra.mxu0 0
      %916 = vmatprep.subr.bf16.mxu0 0
      %917 = vmatpush2.bf16.msra.mxu0 0
      %918 = vmatprep.subr.bf16.mxu0 0
      %919 = vmatpush2.bf16.msra.mxu0 0
      %920 = vmatprep.subr.bf16.mxu0 0
      %921 = vmatpush2.bf16.msra.mxu0 0
      %922 = vmatprep.subr.bf16.mxu0 0
      %923 = vmatpush2.bf16.msra.mxu0 0
      %924 = vmatprep.subr.bf16.mxu0 0
      %925 = vmatpush2.bf16.msra.mxu0 0
      %926 = vmatprep.subr.bf16.mxu0 0
      %927 = vmatpush2.bf16.msra.mxu0 0
      %928 = vmatprep.subr.bf16.mxu0 0
      %929 = vmatpush2.bf16.msra.mxu0 0
      %930 = vmatprep.mubr.bf16.mxu0 0
      %931 = vmatmul.mubr.bf16.gmra.mxu0 %v369
      %v932 = vpop.f32.mrf.mxu0
      %v933 = vadd.f32 %v446, %v932
      %v934 = vpop.f32.mrf.mxu0
      %v935 = vadd.f32 %v450, %v934
      %v936 = vpop.f32.mrf.mxu0
      %v937 = vadd.f32 %v446, %v936
      %v938 = vpop.f32.mrf.mxu0
      %v939 = vadd.f32 %v450, %v938
      %940 = vmatprep.mubr.bf16.mxu0 0
      %941 = vmatmul.mubr.bf16.gmra.mxu0 %v370
      %v942 = vpop.f32.mrf.mxu0
      %v943 = vadd.f32 %v446, %v942
      %v944 = vpop.f32.mrf.mxu0
      %v945 = vadd.f32 %v450, %v944
      %v946 = vpop.f32.mrf.mxu0
      %v947 = vadd.f32 %v446, %v946
      %v948 = vpop.f32.mrf.mxu0
      %v949 = vadd.f32 %v450, %v948
      %950 = vmatprep.mubr.bf16.mxu0 0
      %951 = vmatmul.mubr.bf16.gmra.mxu0 %v371
      %v952 = vpop.f32.mrf.mxu0
      %v953 = vadd.f32 %v446, %v952
      %v954 = vpop.f32.mrf.mxu0
      %v955 = vadd.f32 %v450, %v954
      %v956 = vpop.f32.mrf.mxu0
      %v957 = vadd.f32 %v446, %v956
      %v958 = vpop.f32.mrf.mxu0
      %v959 = vadd.f32 %v450, %v958
      %960 = vmatprep.mubr.bf16.mxu0 0
      %961 = vmatmul.mubr.bf16.gmra.mxu0 %v372
      %v962 = vpop.f32.mrf.mxu0
      %v963 = vadd.f32 %v446, %v962
      %v964 = vpop.f32.mrf.mxu0
      %v965 = vadd.f32 %v450, %v964
      %v966 = vpop.f32.mrf.mxu0
      %v967 = vadd.f32 %v446, %v966
      %v968 = vpop.f32.mrf.mxu0
      %v969 = vadd.f32 %v450, %v968
      %970 = vmatprep.mubr.bf16.mxu0 0
      %971 = vmatmul.mubr.bf16.gmra.mxu0 %v373
      %v972 = vpop.f32.mrf.mxu0
      %v973 = vadd.f32 %v446, %v972
      %v974 = vpop.f32.mrf.mxu0
      %v975 = vadd.f32 %v450, %v974
      %v976 = vpop.f32.mrf.mxu0
      %v977 = vadd.f32 %v446, %v976
      %v978 = vpop.f32.mrf.mxu0
      %v979 = vadd.f32 %v450, %v978
      %980 = vmatprep.mubr.bf16.mxu0 0
      %981 = vmatmul.mubr.bf16.gmra.mxu0 %v374
      %v982 = vpop.f32.mrf.mxu0
      %v983 = vadd.f32 %v446, %v982
      %v984 = vpop.f32.mrf.mxu0
      %v985 = vadd.f32 %v450, %v984
      %v986 = vpop.f32.mrf.mxu0
      %v987 = vadd.f32 %v446, %v986
      %v988 = vpop.f32.mrf.mxu0
      %v989 = vadd.f32 %v450, %v988
      %990 = vmatprep.mubr.bf16.mxu0 0
      %991 = vmatmul.mubr.bf16.gmra.mxu0 %v375
      %v992 = vpop.f32.mrf.mxu0
      %v993 = vadd.f32 %v446, %v992
      %v994 = vpop.f32.mrf.mxu0
      %v995 = vadd.f32 %v450, %v994
      %v996 = vpop.f32.mrf.mxu0
      %v997 = vadd.f32 %v446, %v996
      %v998 = vpop.f32.mrf.mxu0
      %v999 = vadd.f32 %v450, %v998
      %1000 = vmatprep.mubr.bf16.mxu0 0
      %1001 = vmatmul.mubr.bf16.gmra.mxu0 %v376
      %v1002 = vpop.f32.mrf.mxu0
      %v1003 = vadd.f32 %v446, %v1002
      %v1004 = vpop.f32.mrf.mxu0
      %v1005 = vadd.f32 %v450, %v1004
      %v1006 = vpop.f32.mrf.mxu0
      %v1007 = vadd.f32 %v446, %v1006
      %v1008 = vpop.f32.mrf.mxu0
      %v1009 = vadd.f32 %v450, %v1008
      %1010 = vmatprep.mubr.bf16.mxu0 0
      %1011 = vmatmul.mubr.bf16.gmra.mxu0 %v377
      %v1012 = vpop.f32.mrf.mxu0
      %v1013 = vadd.f32 %v446, %v1012
      %v1014 = vpop.f32.mrf.mxu0
      %v1015 = vadd.f32 %v450, %v1014
      %v1016 = vpop.f32.mrf.mxu0
      %v1017 = vadd.f32 %v446, %v1016
      %v1018 = vpop.f32.mrf.mxu0
      %v1019 = vadd.f32 %v450, %v1018
      %1020 = vmatprep.mubr.bf16.mxu0 0
      %1021 = vmatmul.mubr.bf16.gmra.mxu0 %v378
      %v1022 = vpop.f32.mrf.mxu0
      %v1023 = vadd.f32 %v446, %v1022
      %v1024 = vpop.f32.mrf.mxu0
      %v1025 = vadd.f32 %v450, %v1024
      %v1026 = vpop.f32.mrf.mxu0
      %v1027 = vadd.f32 %v446, %v1026
      %v1028 = vpop.f32.mrf.mxu0
      %v1029 = vadd.f32 %v450, %v1028
      %1030 = vmatprep.mubr.bf16.mxu0 0
      %1031 = vmatmul.mubr.bf16.gmra.mxu0 %v379
      %v1032 = vpop.f32.mrf.mxu0
      %v1033 = vadd.f32 %v446, %v1032
      %v1034 = vpop.f32.mrf.mxu0
      %v1035 = vadd.f32 %v450, %v1034
      %v1036 = vpop.f32.mrf.mxu0
      %v1037 = vadd.f32 %v446, %v1036
      %v1038 = vpop.f32.mrf.mxu0
      %v1039 = vadd.f32 %v450, %v1038
      %1040 = vmatprep.mubr.bf16.mxu0 0
      %1041 = vmatmul.mubr.bf16.gmra.mxu0 %v380
      %v1042 = vpop.f32.mrf.mxu0
      %v1043 = vadd.f32 %v446, %v1042
      %v1044 = vpop.f32.mrf.mxu0
      %v1045 = vadd.f32 %v450, %v1044
      %v1046 = vpop.f32.mrf.mxu0
      %v1047 = vadd.f32 %v446, %v1046
      %v1048 = vpop.f32.mrf.mxu0
      %v1049 = vadd.f32 %v450, %v1048
      %1050 = vmatprep.mubr.bf16.mxu0 0
      %1051 = vmatmul.mubr.bf16.gmra.mxu0 %v381
      %v1052 = vpop.f32.mrf.mxu0
      %v1053 = vadd.f32 %v446, %v1052
      %v1054 = vpop.f32.mrf.mxu0
      %v1055 = vadd.f32 %v450, %v1054
      %v1056 = vpop.f32.mrf.mxu0
      %v1057 = vadd.f32 %v446, %v1056
      %v1058 = vpop.f32.mrf.mxu0
      %v1059 = vadd.f32 %v450, %v1058
      %1060 = vmatprep.mubr.bf16.mxu0 0
      %1061 = vmatmul.mubr.bf16.gmra.mxu0 %v382
      %v1062 = vpop.f32.mrf.mxu0
      %v1063 = vadd.f32 %v446, %v1062
      %v1064 = vpop.f32.mrf.mxu0
      %v1065 = vadd.f32 %v450, %v1064
      %v1066 = vpop.f32.mrf.mxu0
      %v1067 = vadd.f32 %v446, %v1066
      %v1068 = vpop.f32.mrf.mxu0
      %v1069 = vadd.f32 %v450, %v1068
      %1070 = vmatprep.mubr.bf16.mxu0 0
      %1071 = vmatmul.mubr.bf16.gmra.mxu0 %v383
      %v1072 = vpop.f32.mrf.mxu0
      %v1073 = vadd.f32 %v446, %v1072
      %v1074 = vpop.f32.mrf.mxu0
      %v1075 = vadd.f32 %v450, %v1074
      %v1076 = vpop.f32.mrf.mxu0
      %v1077 = vadd.f32 %v446, %v1076
      %v1078 = vpop.f32.mrf.mxu0
      %v1079 = vadd.f32 %v450, %v1078
      %1080 = vmatprep.mubr.bf16.mxu0 0
      %1081 = vmatmul.mubr.bf16.gmra.mxu0 %v384
      %v1082 = vpop.f32.mrf.mxu0
      %v1083 = vadd.f32 %v446, %v1082
      %v1084 = vpop.f32.mrf.mxu0
      %v1085 = vadd.f32 %v450, %v1084
      %v1086 = vpop.f32.mrf.mxu0
      %v1087 = vadd.f32 %v446, %v1086
      %v1088 = vpop.f32.mrf.mxu0
      %v1089 = vadd.f32 %v450, %v1088
      %1090 = vdwg.mxu0
      %1091 = vmatprep.subr.bf16.mxu0 %v656
      %1092 = vmatpush1.bf16.msra.mxu0 %v655
      %1093 = vmatprep.subr.bf16.mxu0 %v650
      %1094 = vmatpush1.bf16.msra.mxu0 %v649
      %1095 = vmatprep.subr.bf16.mxu0 %v644
      %1096 = vmatpush1.bf16.msra.mxu0 %v643
      %1097 = vmatprep.subr.bf16.mxu0 %v638
      %1098 = vmatpush1.bf16.msra.mxu0 %v637
      %1099 = vmatprep.subr.bf16.mxu0 %v632
      %1100 = vmatpush1.bf16.msra.mxu0 %v631
      %1101 = vmatprep.subr.bf16.mxu0 %v626
      %1102 = vmatpush1.bf16.msra.mxu0 %v625
      %1103 = vmatprep.subr.bf16.mxu0 %v620
      %1104 = vmatpush1.bf16.msra.mxu0 %v619
      %1105 = vmatprep.subr.bf16.mxu0 %v614
      %1106 = vmatpush1.bf16.msra.mxu0 %v613
      %1107 = vmatprep.subr.bf16.mxu0 0
      %1108 = vmatpush2.bf16.msra.mxu0 0
      %1109 = vmatprep.subr.bf16.mxu0 0
      %1110 = vmatpush2.bf16.msra.mxu0 0
      %1111 = vmatprep.subr.bf16.mxu0 0
      %1112 = vmatpush2.bf16.msra.mxu0 0
      %1113 = vmatprep.subr.bf16.mxu0 0
      %1114 = vmatpush2.bf16.msra.mxu0 0
      %1115 = vmatprep.subr.bf16.mxu0 0
      %1116 = vmatpush2.bf16.msra.mxu0 0
      %1117 = vmatprep.subr.bf16.mxu0 0
      %1118 = vmatpush2.bf16.msra.mxu0 0
      %1119 = vmatprep.subr.bf16.mxu0 0
      %1120 = vmatpush2.bf16.msra.mxu0 0
      %1121 = vmatprep.subr.bf16.mxu0 0
      %1122 = vmatpush2.bf16.msra.mxu0 0
      %1123 = vmatprep.mubr.bf16.mxu0 0
      %1124 = vmatmul.mubr.bf16.gmra.mxu0 %v369
      %v1125 = vpop.f32.mrf.mxu0
      %v1126 = vadd.f32 %v454, %v1125
      %v1127 = vpop.f32.mrf.mxu0
      %v1128 = vadd.f32 %v458, %v1127
      %v1129 = vpop.f32.mrf.mxu0
      %v1130 = vadd.f32 %v454, %v1129
      %v1131 = vpop.f32.mrf.mxu0
      %v1132 = vadd.f32 %v458, %v1131
      %1133 = vmatprep.mubr.bf16.mxu0 0
      %1134 = vmatmul.mubr.bf16.gmra.mxu0 %v370
      %v1135 = vpop.f32.mrf.mxu0
      %v1136 = vadd.f32 %v454, %v1135
      %v1137 = vpop.f32.mrf.mxu0
      %v1138 = vadd.f32 %v458, %v1137
      %v1139 = vpop.f32.mrf.mxu0
      %v1140 = vadd.f32 %v454, %v1139
      %v1141 = vpop.f32.mrf.mxu0
      %v1142 = vadd.f32 %v458, %v1141
      %1143 = vmatprep.mubr.bf16.mxu0 0
      %1144 = vmatmul.mubr.bf16.gmra.mxu0 %v371
      %v1145 = vpop.f32.mrf.mxu0
      %v1146 = vadd.f32 %v454, %v1145
      %v1147 = vpop.f32.mrf.mxu0
      %v1148 = vadd.f32 %v458, %v1147
      %v1149 = vpop.f32.mrf.mxu0
      %v1150 = vadd.f32 %v454, %v1149
      %v1151 = vpop.f32.mrf.mxu0
      %v1152 = vadd.f32 %v458, %v1151
      %1153 = vmatprep.mubr.bf16.mxu0 0
      %1154 = vmatmul.mubr.bf16.gmra.mxu0 %v372
      %v1155 = vpop.f32.mrf.mxu0
      %v1156 = vadd.f32 %v454, %v1155
      %v1157 = vpop.f32.mrf.mxu0
      %v1158 = vadd.f32 %v458, %v1157
      %v1159 = vpop.f32.mrf.mxu0
      %v1160 = vadd.f32 %v454, %v1159
      %v1161 = vpop.f32.mrf.mxu0
      %v1162 = vadd.f32 %v458, %v1161
      %1163 = vmatprep.mubr.bf16.mxu0 0
      %1164 = vmatmul.mubr.bf16.gmra.mxu0 %v373
      %v1165 = vpop.f32.mrf.mxu0
      %v1166 = vadd.f32 %v454, %v1165
      %v1167 = vpop.f32.mrf.mxu0
      %v1168 = vadd.f32 %v458, %v1167
      %v1169 = vpop.f32.mrf.mxu0
      %v1170 = vadd.f32 %v454, %v1169
      %v1171 = vpop.f32.mrf.mxu0
      %v1172 = vadd.f32 %v458, %v1171
      %1173 = vmatprep.mubr.bf16.mxu0 0
      %1174 = vmatmul.mubr.bf16.gmra.mxu0 %v374
      %v1175 = vpop.f32.mrf.mxu0
      %v1176 = vadd.f32 %v454, %v1175
      %v1177 = vpop.f32.mrf.mxu0
      %v1178 = vadd.f32 %v458, %v1177
      %v1179 = vpop.f32.mrf.mxu0
      %v1180 = vadd.f32 %v454, %v1179
      %v1181 = vpop.f32.mrf.mxu0
      %v1182 = vadd.f32 %v458, %v1181
      %1183 = vmatprep.mubr.bf16.mxu0 0
      %1184 = vmatmul.mubr.bf16.gmra.mxu0 %v375
      %v1185 = vpop.f32.mrf.mxu0
      %v1186 = vadd.f32 %v454, %v1185
      %v1187 = vpop.f32.mrf.mxu0
      %v1188 = vadd.f32 %v458, %v1187
      %v1189 = vpop.f32.mrf.mxu0
      %v1190 = vadd.f32 %v454, %v1189
      %v1191 = vpop.f32.mrf.mxu0
      %v1192 = vadd.f32 %v458, %v1191
      %1193 = vmatprep.mubr.bf16.mxu0 0
      %1194 = vmatmul.mubr.bf16.gmra.mxu0 %v376
      %v1195 = vpop.f32.mrf.mxu0
      %v1196 = vadd.f32 %v454, %v1195
      %v1197 = vpop.f32.mrf.mxu0
      %v1198 = vadd.f32 %v458, %v1197
      %v1199 = vpop.f32.mrf.mxu0
      %v1200 = vadd.f32 %v454, %v1199
      %v1201 = vpop.f32.mrf.mxu0
      %v1202 = vadd.f32 %v458, %v1201
      %1203 = vmatprep.mubr.bf16.mxu0 0
      %1204 = vmatmul.mubr.bf16.gmra.mxu0 %v377
      %v1205 = vpop.f32.mrf.mxu0
      %v1206 = vadd.f32 %v454, %v1205
      %v1207 = vpop.f32.mrf.mxu0
      %v1208 = vadd.f32 %v458, %v1207
      %v1209 = vpop.f32.mrf.mxu0
      %v1210 = vadd.f32 %v454, %v1209
      %v1211 = vpop.f32.mrf.mxu0
      %v1212 = vadd.f32 %v458, %v1211
      %1213 = vmatprep.mubr.bf16.mxu0 0
      %1214 = vmatmul.mubr.bf16.gmra.mxu0 %v378
      %v1215 = vpop.f32.mrf.mxu0
      %v1216 = vadd.f32 %v454, %v1215
      %v1217 = vpop.f32.mrf.mxu0
      %v1218 = vadd.f32 %v458, %v1217
      %v1219 = vpop.f32.mrf.mxu0
      %v1220 = vadd.f32 %v454, %v1219
      %v1221 = vpop.f32.mrf.mxu0
      %v1222 = vadd.f32 %v458, %v1221
      %1223 = vmatprep.mubr.bf16.mxu0 0
      %1224 = vmatmul.mubr.bf16.gmra.mxu0 %v379
      %v1225 = vpop.f32.mrf.mxu0
      %v1226 = vadd.f32 %v454, %v1225
      %v1227 = vpop.f32.mrf.mxu0
      %v1228 = vadd.f32 %v458, %v1227
      %v1229 = vpop.f32.mrf.mxu0
      %v1230 = vadd.f32 %v454, %v1229
      %v1231 = vpop.f32.mrf.mxu0
      %v1232 = vadd.f32 %v458, %v1231
      %1233 = vmatprep.mubr.bf16.mxu0 0
      %1234 = vmatmul.mubr.bf16.gmra.mxu0 %v380
      %v1235 = vpop.f32.mrf.mxu0
      %v1236 = vadd.f32 %v454, %v1235
      %v1237 = vpop.f32.mrf.mxu0
      %v1238 = vadd.f32 %v458, %v1237
      %v1239 = vpop.f32.mrf.mxu0
      %v1240 = vadd.f32 %v454, %v1239
      %v1241 = vpop.f32.mrf.mxu0
      %v1242 = vadd.f32 %v458, %v1241
      %1243 = vmatprep.mubr.bf16.mxu0 0
      %1244 = vmatmul.mubr.bf16.gmra.mxu0 %v381
      %v1245 = vpop.f32.mrf.mxu0
      %v1246 = vadd.f32 %v454, %v1245
      %v1247 = vpop.f32.mrf.mxu0
      %v1248 = vadd.f32 %v458, %v1247
      %v1249 = vpop.f32.mrf.mxu0
      %v1250 = vadd.f32 %v454, %v1249
      %v1251 = vpop.f32.mrf.mxu0
      %v1252 = vadd.f32 %v458, %v1251
      %1253 = vmatprep.mubr.bf16.mxu0 0
      %1254 = vmatmul.mubr.bf16.gmra.mxu0 %v382
      %v1255 = vpop.f32.mrf.mxu0
      %v1256 = vadd.f32 %v454, %v1255
      %v1257 = vpop.f32.mrf.mxu0
      %v1258 = vadd.f32 %v458, %v1257
      %v1259 = vpop.f32.mrf.mxu0
      %v1260 = vadd.f32 %v454, %v1259
      %v1261 = vpop.f32.mrf.mxu0
      %v1262 = vadd.f32 %v458, %v1261
      %1263 = vmatprep.mubr.bf16.mxu0 0
      %1264 = vmatmul.mubr.bf16.gmra.mxu0 %v383
      %v1265 = vpop.f32.mrf.mxu0
      %v1266 = vadd.f32 %v454, %v1265
      %v1267 = vpop.f32.mrf.mxu0
      %v1268 = vadd.f32 %v458, %v1267
      %v1269 = vpop.f32.mrf.mxu0
      %v1270 = vadd.f32 %v454, %v1269
      %v1271 = vpop.f32.mrf.mxu0
      %v1272 = vadd.f32 %v458, %v1271
      %1273 = vmatprep.mubr.bf16.mxu0 0
      %1274 = vmatmul.mubr.bf16.gmra.mxu0 %v384
      %v1275 = vpop.f32.mrf.mxu0
      %v1276 = vadd.f32 %v454, %v1275
      %v1277 = vpop.f32.mrf.mxu0
      %v1278 = vadd.f32 %v458, %v1277
      %v1279 = vpop.f32.mrf.mxu0
      %v1280 = vadd.f32 %v454, %v1279
      %v1281 = vpop.f32.mrf.mxu0
      %v1282 = vadd.f32 %v458, %v1281
      %1283 = vdwg.mxu0
      %v1284 = vadd.f32 %v740, %v742
      %v1285 = vadd.f32 %v744, %v746
      %v1286 = vadd.f32 %v750, %v752
      %v1287 = vadd.f32 %v754, %v756
      %v1288 = vadd.f32 %v760, %v762
      %v1289 = vadd.f32 %v764, %v766
      %v1290 = vadd.f32 %v770, %v772
      %v1291 = vadd.f32 %v774, %v776
      %v1292 = vadd.f32 %v780, %v782
      %v1293 = vadd.f32 %v784, %v786
      %v1294 = vadd.f32 %v790, %v792
      %v1295 = vadd.f32 %v794, %v796
      %v1296 = vadd.f32 %v800, %v802
      %v1297 = vadd.f32 %v804, %v806
      %v1298 = vadd.f32 %v810, %v812
      %v1299 = vadd.f32 %v814, %v816
      %v1300 = vadd.f32 %v820, %v822
      %v1301 = vadd.f32 %v824, %v826
      %v1302 = vadd.f32 %v830, %v832
      %v1303 = vadd.f32 %v834, %v836
      %v1304 = vadd.f32 %v840, %v842
      %v1305 = vadd.f32 %v844, %v846
      %v1306 = vadd.f32 %v850, %v852
      %v1307 = vadd.f32 %v854, %v856
      %v1308 = vadd.f32 %v860, %v862
      %v1309 = vadd.f32 %v864, %v866
      %v1310 = vadd.f32 %v870, %v872
      %v1311 = vadd.f32 %v874, %v876
      %v1312 = vadd.f32 %v880, %v882
      %v1313 = vadd.f32 %v884, %v886
      %v1314 = vadd.f32 %v890, %v892
      %v1315 = vadd.f32 %v894, %v896
      %v1316 = vmax.f32 %v1284, 0.0
      %v1317 = vmax.f32 %v1285, 0.0
      %v1318 = vmax.f32 %v1286, 0.0
      %v1319 = vmax.f32 %v1287, 0.0
      %v1320 = vmax.f32 %v1288, 0.0
      %v1321 = vmax.f32 %v1289, 0.0
      %v1322 = vmax.f32 %v1290, 0.0
      %v1323 = vmax.f32 %v1291, 0.0
      %v1324 = vmax.f32 %v1292, 0.0
      %v1325 = vmax.f32 %v1293, 0.0
      %v1326 = vmax.f32 %v1294, 0.0
      %v1327 = vmax.f32 %v1295, 0.0
      %v1328 = vmax.f32 %v1296, 0.0
      %v1329 = vmax.f32 %v1297, 0.0
      %v1330 = vmax.f32 %v1298, 0.0
      %v1331 = vmax.f32 %v1299, 0.0
      %v1332 = vmax.f32 %v1300, 0.0
      %v1333 = vmax.f32 %v1301, 0.0
      %v1334 = vmax.f32 %v1302, 0.0
      %v1335 = vmax.f32 %v1303, 0.0
      %v1336 = vmax.f32 %v1304, 0.0
      %v1337 = vmax.f32 %v1305, 0.0
      %v1338 = vmax.f32 %v1306, 0.0
      %v1339 = vmax.f32 %v1307, 0.0
      %v1340 = vmax.f32 %v1308, 0.0
      %v1341 = vmax.f32 %v1309, 0.0
      %v1342 = vmax.f32 %v1310, 0.0
      %v1343 = vmax.f32 %v1311, 0.0
      %v1344 = vmax.f32 %v1312, 0.0
      %v1345 = vmax.f32 %v1313, 0.0
      %v1346 = vmax.f32 %v1314, 0.0
      %v1347 = vmax.f32 %v1315, 0.0
      %v1348 = vpack.c.bf16 %v1317, %v1316
      %v1349 = vpack.c.bf16 %v1319, %v1318
      %v1350 = vpack.c.bf16 %v1321, %v1320
      %v1351 = vpack.c.bf16 %v1323, %v1322
      %v1352 = vpack.c.bf16 %v1325, %v1324
      %v1353 = vpack.c.bf16 %v1327, %v1326
      %v1354 = vpack.c.bf16 %v1329, %v1328
      %v1355 = vpack.c.bf16 %v1331, %v1330
      %v1356 = vpack.c.bf16 %v1333, %v1332
      %v1357 = vpack.c.bf16 %v1335, %v1334
      %v1358 = vpack.c.bf16 %v1337, %v1336
      %v1359 = vpack.c.bf16 %v1339, %v1338
      %v1360 = vpack.c.bf16 %v1341, %v1340
      %v1361 = vpack.c.bf16 %v1343, %v1342
      %v1362 = vpack.c.bf16 %v1345, %v1344
      %v1363 = vpack.c.bf16 %v1347, %v1346
      %v1364 = vld [vmem:[%s3] sm:$0xf]
      %v1365 = vld [vmem:[%s3 + $0x4] sm:$0xf]
      %v1366 = vld [vmem:[%s3 + $0x8] sm:$0xf]
      %v1367 = vld [vmem:[%s3 + $0xc] sm:$0xf]
      %v1368 = vld [vmem:[%s3 + $0x10] sm:$0xf]
      %v1369 = vld [vmem:[%s3 + $0x14] sm:$0xf]
      %v1370 = vld [vmem:[%s3 + $0x18] sm:$0xf]
      %v1371 = vld [vmem:[%s3 + $0x1c] sm:$0xf]
      %v1372 = vld [vmem:[%s3 + $0x20] sm:$0xf]
      %v1373 = vld [vmem:[%s3 + $0x24] sm:$0xf]
      %v1374 = vld [vmem:[%s3 + $0x28] sm:$0xf]
      %v1375 = vld [vmem:[%s3 + $0x2c] sm:$0xf]
      %v1376 = vld [vmem:[%s3 + $0x30] sm:$0xf]
      %v1377 = vld [vmem:[%s3 + $0x34] sm:$0xf]
      %v1378 = vld [vmem:[%s3 + $0x38] sm:$0xf]
      %v1379 = vld [vmem:[%s3 + $0x3c] sm:$0xf]
      %v1380 = vld [vmem:[%s4] sm:$0x1]
      %v1381 = vlaneseq
      %v1382 = vshrl.u32 %v1381, 7
      %v1383 = vsub.s32 0, %v1382
      %v1384 = vrot.slane %v1380, %v1383
      %v1401 = vunpack.c.l.b16 %v1364
      %v1402 = vunpack.c.l.b16 %v1365
      %v1403 = vunpack.c.l.b16 %v1366
      %v1404 = vunpack.c.l.b16 %v1367
      %v1405 = vunpack.c.l.b16 %v1368
      %v1406 = vunpack.c.l.b16 %v1369
      %v1407 = vunpack.c.l.b16 %v1370
      %v1408 = vunpack.c.l.b16 %v1371
      %v1409 = vunpack.c.l.b16 %v1372
      %v1410 = vunpack.c.l.b16 %v1373
      %v1411 = vunpack.c.l.b16 %v1374
      %v1412 = vunpack.c.l.b16 %v1375
      %v1413 = vunpack.c.l.b16 %v1376
      %v1414 = vunpack.c.l.b16 %v1377
      %v1415 = vunpack.c.l.b16 %v1378
      %v1416 = vunpack.c.l.b16 %v1379
      %v1417 = vpack.c.b16 %v1402, %v1401
      %v1418 = vpack.c.b16 %v1404, %v1403
      %v1419 = vpack.c.b16 %v1406, %v1405
      %v1420 = vpack.c.b16 %v1408, %v1407
      %v1421 = vpack.c.b16 %v1410, %v1409
      %v1422 = vpack.c.b16 %v1412, %v1411
      %v1423 = vpack.c.b16 %v1414, %v1413
      %v1424 = vpack.c.b16 %v1416, %v1415
      %1433 = vmatprep.subr.bf16.mxu0 0
      %1434 = vmatpush1.bf16.msra.mxu0 %v1424
      %1435 = vmatprep.subr.bf16.mxu0 0
      %1436 = vmatpush1.bf16.msra.mxu0 %v1423
      %1437 = vmatprep.subr.bf16.mxu0 0
      %1438 = vmatpush1.bf16.msra.mxu0 %v1422
      %1439 = vmatprep.subr.bf16.mxu0 0
      %1440 = vmatpush1.bf16.msra.mxu0 %v1421
      %1441 = vmatprep.subr.bf16.mxu0 0
      %1442 = vmatpush1.bf16.msra.mxu0 %v1420
      %1443 = vmatprep.subr.bf16.mxu0 0
      %1444 = vmatpush1.bf16.msra.mxu0 %v1419
      %1445 = vmatprep.subr.bf16.mxu0 0
      %1446 = vmatpush1.bf16.msra.mxu0 %v1418
      %1447 = vmatprep.subr.bf16.mxu0 0
      %1448 = vmatpush1.bf16.msra.mxu0 %v1417
      %1449 = vmatprep.subr.bf16.mxu0 0
      %1450 = vmatpush2.bf16.msra.mxu0 0
      %1451 = vmatprep.subr.bf16.mxu0 0
      %1452 = vmatpush2.bf16.msra.mxu0 0
      %1453 = vmatprep.subr.bf16.mxu0 0
      %1454 = vmatpush2.bf16.msra.mxu0 0
      %1455 = vmatprep.subr.bf16.mxu0 0
      %1456 = vmatpush2.bf16.msra.mxu0 0
      %1457 = vmatprep.subr.bf16.mxu0 0
      %1458 = vmatpush2.bf16.msra.mxu0 0
      %1459 = vmatprep.subr.bf16.mxu0 0
      %1460 = vmatpush2.bf16.msra.mxu0 0
      %1461 = vmatprep.subr.bf16.mxu0 0
      %1462 = vmatpush2.bf16.msra.mxu0 0
      %1463 = vmatprep.subr.bf16.mxu0 0
      %1464 = vmatpush2.bf16.msra.mxu0 0
      %1465 = vmatprep.mubr.bf16.mxu0 0
      %1466 = vmatmul.mubr.bf16.gmra.mxu0 %v1348
      %v1467 = vpop.f32.mrf.mxu0
      %v1468 = vadd.f32 %v1384, %v1467
      %v1469 = vpop.f32.mrf.mxu0
      %v1470 = vpop.f32.mrf.mxu0
      %v1471 = vadd.f32 %v1384, %v1470
      %v1472 = vpop.f32.mrf.mxu0
      %1473 = vmatprep.mubr.bf16.mxu0 0
      %1474 = vmatmul.mubr.bf16.gmra.mxu0 %v1349
      %v1475 = vpop.f32.mrf.mxu0
      %v1476 = vadd.f32 %v1384, %v1475
      %v1477 = vpop.f32.mrf.mxu0
      %v1478 = vpop.f32.mrf.mxu0
      %v1479 = vadd.f32 %v1384, %v1478
      %v1480 = vpop.f32.mrf.mxu0
      %1481 = vmatprep.mubr.bf16.mxu0 0
      %1482 = vmatmul.mubr.bf16.gmra.mxu0 %v1350
      %v1483 = vpop.f32.mrf.mxu0
      %v1484 = vadd.f32 %v1384, %v1483
      %v1485 = vpop.f32.mrf.mxu0
      %v1486 = vpop.f32.mrf.mxu0
      %v1487 = vadd.f32 %v1384, %v1486
      %v1488 = vpop.f32.mrf.mxu0
      %1489 = vmatprep.mubr.bf16.mxu0 0
      %1490 = vmatmul.mubr.bf16.gmra.mxu0 %v1351
      %v1491 = vpop.f32.mrf.mxu0
      %v1492 = vadd.f32 %v1384, %v1491
      %v1493 = vpop.f32.mrf.mxu0
      %v1494 = vpop.f32.mrf.mxu0
      %v1495 = vadd.f32 %v1384, %v1494
      %v1496 = vpop.f32.mrf.mxu0
      %1497 = vmatprep.mubr.bf16.mxu0 0
      %1498 = vmatmul.mubr.bf16.gmra.mxu0 %v1352
      %v1499 = vpop.f32.mrf.mxu0
      %v1500 = vadd.f32 %v1384, %v1499
      %v1501 = vpop.f32.mrf.mxu0
      %v1502 = vpop.f32.mrf.mxu0
      %v1503 = vadd.f32 %v1384, %v1502
      %v1504 = vpop.f32.mrf.mxu0
      %1505 = vmatprep.mubr.bf16.mxu0 0
      %1506 = vmatmul.mubr.bf16.gmra.mxu0 %v1353
      %v1507 = vpop.f32.mrf.mxu0
      %v1508 = vadd.f32 %v1384, %v1507
      %v1509 = vpop.f32.mrf.mxu0
      %v1510 = vpop.f32.mrf.mxu0
      %v1511 = vadd.f32 %v1384, %v1510
      %v1512 = vpop.f32.mrf.mxu0
      %1513 = vmatprep.mubr.bf16.mxu0 0
      %1514 = vmatmul.mubr.bf16.gmra.mxu0 %v1354
      %v1515 = vpop.f32.mrf.mxu0
      %v1516 = vadd.f32 %v1384, %v1515
      %v1517 = vpop.f32.mrf.mxu0
      %v1518 = vpop.f32.mrf.mxu0
      %v1519 = vadd.f32 %v1384, %v1518
      %v1520 = vpop.f32.mrf.mxu0
      %1521 = vmatprep.mubr.bf16.mxu0 0
      %1522 = vmatmul.mubr.bf16.gmra.mxu0 %v1355
      %v1523 = vpop.f32.mrf.mxu0
      %v1524 = vadd.f32 %v1384, %v1523
      %v1525 = vpop.f32.mrf.mxu0
      %v1526 = vpop.f32.mrf.mxu0
      %v1527 = vadd.f32 %v1384, %v1526
      %v1528 = vpop.f32.mrf.mxu0
      %1529 = vmatprep.mubr.bf16.mxu0 0
      %1530 = vmatmul.mubr.bf16.gmra.mxu0 %v1356
      %v1531 = vpop.f32.mrf.mxu0
      %v1532 = vadd.f32 %v1384, %v1531
      %v1533 = vpop.f32.mrf.mxu0
      %v1534 = vpop.f32.mrf.mxu0
      %v1535 = vadd.f32 %v1384, %v1534
      %v1536 = vpop.f32.mrf.mxu0
      %1537 = vmatprep.mubr.bf16.mxu0 0
      %1538 = vmatmul.mubr.bf16.gmra.mxu0 %v1357
      %v1539 = vpop.f32.mrf.mxu0
      %v1540 = vadd.f32 %v1384, %v1539
      %v1541 = vpop.f32.mrf.mxu0
      %v1542 = vpop.f32.mrf.mxu0
      %v1543 = vadd.f32 %v1384, %v1542
      %v1544 = vpop.f32.mrf.mxu0
      %1545 = vmatprep.mubr.bf16.mxu0 0
      %1546 = vmatmul.mubr.bf16.gmra.mxu0 %v1358
      %v1547 = vpop.f32.mrf.mxu0
      %v1548 = vadd.f32 %v1384, %v1547
      %v1549 = vpop.f32.mrf.mxu0
      %v1550 = vpop.f32.mrf.mxu0
      %v1551 = vadd.f32 %v1384, %v1550
      %v1552 = vpop.f32.mrf.mxu0
      %1553 = vmatprep.mubr.bf16.mxu0 0
      %1554 = vmatmul.mubr.bf16.gmra.mxu0 %v1359
      %v1555 = vpop.f32.mrf.mxu0
      %v1556 = vadd.f32 %v1384, %v1555
      %v1557 = vpop.f32.mrf.mxu0
      %v1558 = vpop.f32.mrf.mxu0
      %v1559 = vadd.f32 %v1384, %v1558
      %v1560 = vpop.f32.mrf.mxu0
      %1561 = vmatprep.mubr.bf16.mxu0 0
      %1562 = vmatmul.mubr.bf16.gmra.mxu0 %v1360
      %v1563 = vpop.f32.mrf.mxu0
      %v1564 = vadd.f32 %v1384, %v1563
      %v1565 = vpop.f32.mrf.mxu0
      %v1566 = vpop.f32.mrf.mxu0
      %v1567 = vadd.f32 %v1384, %v1566
      %v1568 = vpop.f32.mrf.mxu0
      %1569 = vmatprep.mubr.bf16.mxu0 0
      %1570 = vmatmul.mubr.bf16.gmra.mxu0 %v1361
      %v1571 = vpop.f32.mrf.mxu0
      %v1572 = vadd.f32 %v1384, %v1571
      %v1573 = vpop.f32.mrf.mxu0
      %v1574 = vpop.f32.mrf.mxu0
      %v1575 = vadd.f32 %v1384, %v1574
      %v1576 = vpop.f32.mrf.mxu0
      %1577 = vmatprep.mubr.bf16.mxu0 0
      %1578 = vmatmul.mubr.bf16.gmra.mxu0 %v1362
      %v1579 = vpop.f32.mrf.mxu0
      %v1580 = vadd.f32 %v1384, %v1579
      %v1581 = vpop.f32.mrf.mxu0
      %v1582 = vpop.f32.mrf.mxu0
      %v1583 = vadd.f32 %v1384, %v1582
      %v1584 = vpop.f32.mrf.mxu0
      %1585 = vmatprep.mubr.bf16.mxu0 0
      %1586 = vmatmul.mubr.bf16.gmra.mxu0 %v1363
      %v1587 = vpop.f32.mrf.mxu0
      %v1588 = vadd.f32 %v1384, %v1587
      %v1589 = vpop.f32.mrf.mxu0
      %v1590 = vpop.f32.mrf.mxu0
      %v1591 = vadd.f32 %v1384, %v1590
      %v1592 = vpop.f32.mrf.mxu0
      %1593 = vdwg.mxu0
      %v1594 = vmax.f32 %v1468, 0.0
      %v1595 = vmax.f32 %v1471, 0.0
      %v1596 = vmax.f32 %v1476, 0.0
      %v1597 = vmax.f32 %v1479, 0.0
      %v1598 = vmax.f32 %v1484, 0.0
      %v1599 = vmax.f32 %v1487, 0.0
      %v1600 = vmax.f32 %v1492, 0.0
      %v1601 = vmax.f32 %v1495, 0.0
      %v1602 = vmax.f32 %v1500, 0.0
      %v1603 = vmax.f32 %v1503, 0.0
      %v1604 = vmax.f32 %v1508, 0.0
      %v1605 = vmax.f32 %v1511, 0.0
      %v1606 = vmax.f32 %v1516, 0.0
      %v1607 = vmax.f32 %v1519, 0.0
      %v1608 = vmax.f32 %v1524, 0.0
      %v1609 = vmax.f32 %v1527, 0.0
      %v1610 = vmax.f32 %v1532, 0.0
      %v1611 = vmax.f32 %v1535, 0.0
      %v1612 = vmax.f32 %v1540, 0.0
      %v1613 = vmax.f32 %v1543, 0.0
      %v1614 = vmax.f32 %v1548, 0.0
      %v1615 = vmax.f32 %v1551, 0.0
      %v1616 = vmax.f32 %v1556, 0.0
      %v1617 = vmax.f32 %v1559, 0.0
      %v1618 = vmax.f32 %v1564, 0.0
      %v1619 = vmax.f32 %v1567, 0.0
      %v1620 = vmax.f32 %v1572, 0.0
      %v1621 = vmax.f32 %v1575, 0.0
      %v1622 = vmax.f32 %v1580, 0.0
      %v1623 = vmax.f32 %v1583, 0.0
      %v1624 = vmax.f32 %v1588, 0.0
      %v1625 = vmax.f32 %v1591, 0.0
      %v1626 = vpack.c.bf16 %v1595, %v1594
      %v1627 = vpack.c.bf16 %v1597, %v1596
      %v1628 = vpack.c.bf16 %v1599, %v1598
      %v1629 = vpack.c.bf16 %v1601, %v1600
      %v1630 = vpack.c.bf16 %v1603, %v1602
      %v1631 = vpack.c.bf16 %v1605, %v1604
      %v1632 = vpack.c.bf16 %v1607, %v1606
      %v1633 = vpack.c.bf16 %v1609, %v1608
      %v1634 = vpack.c.bf16 %v1611, %v1610
      %v1635 = vpack.c.bf16 %v1613, %v1612
      %v1636 = vpack.c.bf16 %v1615, %v1614
      %v1637 = vpack.c.bf16 %v1617, %v1616
      %v1638 = vpack.c.bf16 %v1619, %v1618
      %v1639 = vpack.c.bf16 %v1621, %v1620
      %v1640 = vpack.c.bf16 %v1623, %v1622
      %v1641 = vpack.c.bf16 %v1625, %v1624
      %v1642 = vld [vmem:[%s5] sm:$0xf]
      %v1643 = vld [vmem:[%s5 + $0x4] sm:$0xf]
      %v1644 = vld [vmem:[%s5 + $0x8] sm:$0xf]
      %v1645 = vld [vmem:[%s5 + $0xc] sm:$0xf]
      %v1646 = vld [vmem:[%s5 + $0x10] sm:$0xf]
      %v1647 = vld [vmem:[%s5 + $0x14] sm:$0xf]
      %v1648 = vld [vmem:[%s5 + $0x18] sm:$0xf]
      %v1649 = vld [vmem:[%s5 + $0x1c] sm:$0xf]
      %v1650 = vld [vmem:[%s5 + $0x20] sm:$0xf]
      %v1651 = vld [vmem:[%s5 + $0x24] sm:$0xf]
      %v1652 = vld [vmem:[%s5 + $0x28] sm:$0xf]
      %v1653 = vld [vmem:[%s5 + $0x2c] sm:$0xf]
      %v1654 = vld [vmem:[%s5 + $0x30] sm:$0xf]
      %v1655 = vld [vmem:[%s5 + $0x34] sm:$0xf]
      %v1656 = vld [vmem:[%s5 + $0x38] sm:$0xf]
      %v1657 = vld [vmem:[%s5 + $0x3c] sm:$0xf]
      %v1658 = vld [vmem:[%s6] sm:$0x1]
      %v1659 = vlaneseq
      %v1660 = vshrl.u32 %v1659, 7
      %v1661 = vsub.s32 0, %v1660
      %v1662 = vrot.slane %v1658, %v1661
      %v1679 = vunpack.c.l.b16 %v1642
      %v1680 = vunpack.c.l.b16 %v1643
      %v1681 = vunpack.c.l.b16 %v1644
      %v1682 = vunpack.c.l.b16 %v1645
      %v1683 = vunpack.c.l.b16 %v1646
      %v1684 = vunpack.c.l.b16 %v1647
      %v1685 = vunpack.c.l.b16 %v1648
      %v1686 = vunpack.c.l.b16 %v1649
      %v1687 = vunpack.c.l.b16 %v1650
      %v1688 = vunpack.c.l.b16 %v1651
      %v1689 = vunpack.c.l.b16 %v1652
      %v1690 = vunpack.c.l.b16 %v1653
      %v1691 = vunpack.c.l.b16 %v1654
      %v1692 = vunpack.c.l.b16 %v1655
      %v1693 = vunpack.c.l.b16 %v1656
      %v1694 = vunpack.c.l.b16 %v1657
      %v1695 = vpack.c.b16 %v1680, %v1679
      %v1696 = vpack.c.b16 %v1682, %v1681
      %v1697 = vpack.c.b16 %v1684, %v1683
      %v1698 = vpack.c.b16 %v1686, %v1685
      %v1699 = vpack.c.b16 %v1688, %v1687
      %v1700 = vpack.c.b16 %v1690, %v1689
      %v1701 = vpack.c.b16 %v1692, %v1691
      %v1702 = vpack.c.b16 %v1694, %v1693
      %1711 = vmatprep.subr.bf16.mxu0 0
      %1712 = vmatpush1.bf16.msra.mxu0 %v1702
      %1713 = vmatprep.subr.bf16.mxu0 0
      %1714 = vmatpush1.bf16.msra.mxu0 %v1701
      %1715 = vmatprep.subr.bf16.mxu0 0
      %1716 = vmatpush1.bf16.msra.mxu0 %v1700
      %1717 = vmatprep.subr.bf16.mxu0 0
      %1718 = vmatpush1.bf16.msra.mxu0 %v1699
      %1719 = vmatprep.subr.bf16.mxu0 0
      %1720 = vmatpush1.bf16.msra.mxu0 %v1698
      %1721 = vmatprep.subr.bf16.mxu0 0
      %1722 = vmatpush1.bf16.msra.mxu0 %v1697
      %1723 = vmatprep.subr.bf16.mxu0 0
      %1724 = vmatpush1.bf16.msra.mxu0 %v1696
      %1725 = vmatprep.subr.bf16.mxu0 0
      %1726 = vmatpush1.bf16.msra.mxu0 %v1695
      %1727 = vmatprep.subr.bf16.mxu0 0
      %1728 = vmatpush2.bf16.msra.mxu0 0
      %1729 = vmatprep.subr.bf16.mxu0 0
      %1730 = vmatpush2.bf16.msra.mxu0 0
      %1731 = vmatprep.subr.bf16.mxu0 0
      %1732 = vmatpush2.bf16.msra.mxu0 0
      %1733 = vmatprep.subr.bf16.mxu0 0
      %1734 = vmatpush2.bf16.msra.mxu0 0
      %1735 = vmatprep.subr.bf16.mxu0 0
      %1736 = vmatpush2.bf16.msra.mxu0 0
      %1737 = vmatprep.subr.bf16.mxu0 0
      %1738 = vmatpush2.bf16.msra.mxu0 0
      %1739 = vmatprep.subr.bf16.mxu0 0
      %1740 = vmatpush2.bf16.msra.mxu0 0
      %1741 = vmatprep.subr.bf16.mxu0 0
      %1742 = vmatpush2.bf16.msra.mxu0 0
      %1743 = vmatprep.mubr.bf16.mxu0 0
      %1744 = vmatmul.mubr.bf16.gmra.mxu0 %v1626
      %v1745 = vpop.f32.mrf.mxu0
      %v1746 = vadd.f32 %v1662, %v1745
      %v1747 = vpop.f32.mrf.mxu0
      %v1748 = vpop.f32.mrf.mxu0
      %v1749 = vadd.f32 %v1662, %v1748
      %v1750 = vpop.f32.mrf.mxu0
      %1751 = vmatprep.mubr.bf16.mxu0 0
      %1752 = vmatmul.mubr.bf16.gmra.mxu0 %v1627
      %v1753 = vpop.f32.mrf.mxu0
      %v1754 = vadd.f32 %v1662, %v1753
      %v1755 = vpop.f32.mrf.mxu0
      %v1756 = vpop.f32.mrf.mxu0
      %v1757 = vadd.f32 %v1662, %v1756
      %v1758 = vpop.f32.mrf.mxu0
      %1759 = vmatprep.mubr.bf16.mxu0 0
      %1760 = vmatmul.mubr.bf16.gmra.mxu0 %v1628
      %v1761 = vpop.f32.mrf.mxu0
      %v1762 = vadd.f32 %v1662, %v1761
      %v1763 = vpop.f32.mrf.mxu0
      %v1764 = vpop.f32.mrf.mxu0
      %v1765 = vadd.f32 %v1662, %v1764
      %v1766 = vpop.f32.mrf.mxu0
      %1767 = vmatprep.mubr.bf16.mxu0 0
      %1768 = vmatmul.mubr.bf16.gmra.mxu0 %v1629
      %v1769 = vpop.f32.mrf.mxu0
      %v1770 = vadd.f32 %v1662, %v1769
      %v1771 = vpop.f32.mrf.mxu0
      %v1772 = vpop.f32.mrf.mxu0
      %v1773 = vadd.f32 %v1662, %v1772
      %v1774 = vpop.f32.mrf.mxu0
      %1775 = vmatprep.mubr.bf16.mxu0 0
      %1776 = vmatmul.mubr.bf16.gmra.mxu0 %v1630
      %v1777 = vpop.f32.mrf.mxu0
      %v1778 = vadd.f32 %v1662, %v1777
      %v1779 = vpop.f32.mrf.mxu0
      %v1780 = vpop.f32.mrf.mxu0
      %v1781 = vadd.f32 %v1662, %v1780
      %v1782 = vpop.f32.mrf.mxu0
      %1783 = vmatprep.mubr.bf16.mxu0 0
      %1784 = vmatmul.mubr.bf16.gmra.mxu0 %v1631
      %v1785 = vpop.f32.mrf.mxu0
      %v1786 = vadd.f32 %v1662, %v1785
      %v1787 = vpop.f32.mrf.mxu0
      %v1788 = vpop.f32.mrf.mxu0
      %v1789 = vadd.f32 %v1662, %v1788
      %v1790 = vpop.f32.mrf.mxu0
      %1791 = vmatprep.mubr.bf16.mxu0 0
      %1792 = vmatmul.mubr.bf16.gmra.mxu0 %v1632
      %v1793 = vpop.f32.mrf.mxu0
      %v1794 = vadd.f32 %v1662, %v1793
      %v1795 = vpop.f32.mrf.mxu0
      %v1796 = vpop.f32.mrf.mxu0
      %v1797 = vadd.f32 %v1662, %v1796
      %v1798 = vpop.f32.mrf.mxu0
      %1799 = vmatprep.mubr.bf16.mxu0 0
      %1800 = vmatmul.mubr.bf16.gmra.mxu0 %v1633
      %v1801 = vpop.f32.mrf.mxu0
      %v1802 = vadd.f32 %v1662, %v1801
      %v1803 = vpop.f32.mrf.mxu0
      %v1804 = vpop.f32.mrf.mxu0
      %v1805 = vadd.f32 %v1662, %v1804
      %v1806 = vpop.f32.mrf.mxu0
      %1807 = vmatprep.mubr.bf16.mxu0 0
      %1808 = vmatmul.mubr.bf16.gmra.mxu0 %v1634
      %v1809 = vpop.f32.mrf.mxu0
      %v1810 = vadd.f32 %v1662, %v1809
      %v1811 = vpop.f32.mrf.mxu0
      %v1812 = vpop.f32.mrf.mxu0
      %v1813 = vadd.f32 %v1662, %v1812
      %v1814 = vpop.f32.mrf.mxu0
      %1815 = vmatprep.mubr.bf16.mxu0 0
      %1816 = vmatmul.mubr.bf16.gmra.mxu0 %v1635
      %v1817 = vpop.f32.mrf.mxu0
      %v1818 = vadd.f32 %v1662, %v1817
      %v1819 = vpop.f32.mrf.mxu0
      %v1820 = vpop.f32.mrf.mxu0
      %v1821 = vadd.f32 %v1662, %v1820
      %v1822 = vpop.f32.mrf.mxu0
      %1823 = vmatprep.mubr.bf16.mxu0 0
      %1824 = vmatmul.mubr.bf16.gmra.mxu0 %v1636
      %v1825 = vpop.f32.mrf.mxu0
      %v1826 = vadd.f32 %v1662, %v1825
      %v1827 = vpop.f32.mrf.mxu0
      %v1828 = vpop.f32.mrf.mxu0
      %v1829 = vadd.f32 %v1662, %v1828
      %v1830 = vpop.f32.mrf.mxu0
      %1831 = vmatprep.mubr.bf16.mxu0 0
      %1832 = vmatmul.mubr.bf16.gmra.mxu0 %v1637
      %v1833 = vpop.f32.mrf.mxu0
      %v1834 = vadd.f32 %v1662, %v1833
      %v1835 = vpop.f32.mrf.mxu0
      %v1836 = vpop.f32.mrf.mxu0
      %v1837 = vadd.f32 %v1662, %v1836
      %v1838 = vpop.f32.mrf.mxu0
      %1839 = vmatprep.mubr.bf16.mxu0 0
      %1840 = vmatmul.mubr.bf16.gmra.mxu0 %v1638
      %v1841 = vpop.f32.mrf.mxu0
      %v1842 = vadd.f32 %v1662, %v1841
      %v1843 = vpop.f32.mrf.mxu0
      %v1844 = vpop.f32.mrf.mxu0
      %v1845 = vadd.f32 %v1662, %v1844
      %v1846 = vpop.f32.mrf.mxu0
      %1847 = vmatprep.mubr.bf16.mxu0 0
      %1848 = vmatmul.mubr.bf16.gmra.mxu0 %v1639
      %v1849 = vpop.f32.mrf.mxu0
      %v1850 = vadd.f32 %v1662, %v1849
      %v1851 = vpop.f32.mrf.mxu0
      %v1852 = vpop.f32.mrf.mxu0
      %v1853 = vadd.f32 %v1662, %v1852
      %v1854 = vpop.f32.mrf.mxu0
      %1855 = vmatprep.mubr.bf16.mxu0 0
      %1856 = vmatmul.mubr.bf16.gmra.mxu0 %v1640
      %v1857 = vpop.f32.mrf.mxu0
      %v1858 = vadd.f32 %v1662, %v1857
      %v1859 = vpop.f32.mrf.mxu0
      %v1860 = vpop.f32.mrf.mxu0
      %v1861 = vadd.f32 %v1662, %v1860
      %v1862 = vpop.f32.mrf.mxu0
      %1863 = vmatprep.mubr.bf16.mxu0 0
      %1864 = vmatmul.mubr.bf16.gmra.mxu0 %v1641
      %v1865 = vpop.f32.mrf.mxu0
      %v1866 = vadd.f32 %v1662, %v1865
      %v1867 = vpop.f32.mrf.mxu0
      %v1868 = vpop.f32.mrf.mxu0
      %v1869 = vadd.f32 %v1662, %v1868
      %v1870 = vpop.f32.mrf.mxu0
      %1871 = vdwg.mxu0
      %v1872 = vadd.f32 %v1284, %v1746
      %v1873 = vadd.f32 %v1285, %v1749
      %v1874 = vadd.f32 %v1286, %v1754
      %v1875 = vadd.f32 %v1287, %v1757
      %v1876 = vadd.f32 %v1288, %v1762
      %v1877 = vadd.f32 %v1289, %v1765
      %v1878 = vadd.f32 %v1290, %v1770
      %v1879 = vadd.f32 %v1291, %v1773
      %v1880 = vadd.f32 %v1292, %v1778
      %v1881 = vadd.f32 %v1293, %v1781
      %v1882 = vadd.f32 %v1294, %v1786
      %v1883 = vadd.f32 %v1295, %v1789
      %v1884 = vadd.f32 %v1296, %v1794
      %v1885 = vadd.f32 %v1297, %v1797
      %v1886 = vadd.f32 %v1298, %v1802
      %v1887 = vadd.f32 %v1299, %v1805
      %v1888 = vadd.f32 %v1300, %v1810
      %v1889 = vadd.f32 %v1301, %v1813
      %v1890 = vadd.f32 %v1302, %v1818
      %v1891 = vadd.f32 %v1303, %v1821
      %v1892 = vadd.f32 %v1304, %v1826
      %v1893 = vadd.f32 %v1305, %v1829
      %v1894 = vadd.f32 %v1306, %v1834
      %v1895 = vadd.f32 %v1307, %v1837
      %v1896 = vadd.f32 %v1308, %v1842
      %v1897 = vadd.f32 %v1309, %v1845
      %v1898 = vadd.f32 %v1310, %v1850
      %v1899 = vadd.f32 %v1311, %v1853
      %v1900 = vadd.f32 %v1312, %v1858
      %v1901 = vadd.f32 %v1313, %v1861
      %v1902 = vadd.f32 %v1314, %v1866
      %v1903 = vadd.f32 %v1315, %v1869
      %v1904 = vadd.f32 %v1872, %v933
      %v1905 = vadd.f32 %v1873, %v937
      %v1906 = vadd.f32 %v1874, %v943
      %v1907 = vadd.f32 %v1875, %v947
      %v1908 = vadd.f32 %v1876, %v953
      %v1909 = vadd.f32 %v1877, %v957
      %v1910 = vadd.f32 %v1878, %v963
      %v1911 = vadd.f32 %v1879, %v967
      %v1912 = vadd.f32 %v1880, %v973
      %v1913 = vadd.f32 %v1881, %v977
      %v1914 = vadd.f32 %v1882, %v983
      %v1915 = vadd.f32 %v1883, %v987
      %v1916 = vadd.f32 %v1884, %v993
      %v1917 = vadd.f32 %v1885, %v997
      %v1918 = vadd.f32 %v1886, %v1003
      %v1919 = vadd.f32 %v1887, %v1007
      %v1920 = vadd.f32 %v1888, %v1013
      %v1921 = vadd.f32 %v1889, %v1017
      %v1922 = vadd.f32 %v1890, %v1023
      %v1923 = vadd.f32 %v1891, %v1027
      %v1924 = vadd.f32 %v1892, %v1033
      %v1925 = vadd.f32 %v1893, %v1037
      %v1926 = vadd.f32 %v1894, %v1043
      %v1927 = vadd.f32 %v1895, %v1047
      %v1928 = vadd.f32 %v1896, %v1053
      %v1929 = vadd.f32 %v1897, %v1057
      %v1930 = vadd.f32 %v1898, %v1063
      %v1931 = vadd.f32 %v1899, %v1067
      %v1932 = vadd.f32 %v1900, %v1073
      %v1933 = vadd.f32 %v1901, %v1077
      %v1934 = vadd.f32 %v1902, %v1083
      %v1935 = vadd.f32 %v1903, %v1087
      %v1936 = vmax.f32 %v1904, 0.0
      %v1937 = vmax.f32 %v1905, 0.0
      %v1938 = vmax.f32 %v1906, 0.0
      %v1939 = vmax.f32 %v1907, 0.0
      %v1940 = vmax.f32 %v1908, 0.0
      %v1941 = vmax.f32 %v1909, 0.0
      %v1942 = vmax.f32 %v1910, 0.0
      %v1943 = vmax.f32 %v1911, 0.0
      %v1944 = vmax.f32 %v1912, 0.0
      %v1945 = vmax.f32 %v1913, 0.0
      %v1946 = vmax.f32 %v1914, 0.0
      %v1947 = vmax.f32 %v1915, 0.0
      %v1948 = vmax.f32 %v1916, 0.0
      %v1949 = vmax.f32 %v1917, 0.0
      %v1950 = vmax.f32 %v1918, 0.0
      %v1951 = vmax.f32 %v1919, 0.0
      %v1952 = vmax.f32 %v1920, 0.0
      %v1953 = vmax.f32 %v1921, 0.0
      %v1954 = vmax.f32 %v1922, 0.0
      %v1955 = vmax.f32 %v1923, 0.0
      %v1956 = vmax.f32 %v1924, 0.0
      %v1957 = vmax.f32 %v1925, 0.0
      %v1958 = vmax.f32 %v1926, 0.0
      %v1959 = vmax.f32 %v1927, 0.0
      %v1960 = vmax.f32 %v1928, 0.0
      %v1961 = vmax.f32 %v1929, 0.0
      %v1962 = vmax.f32 %v1930, 0.0
      %v1963 = vmax.f32 %v1931, 0.0
      %v1964 = vmax.f32 %v1932, 0.0
      %v1965 = vmax.f32 %v1933, 0.0
      %v1966 = vmax.f32 %v1934, 0.0
      %v1967 = vmax.f32 %v1935, 0.0
      %v1968 = vpack.c.bf16 %v1937, %v1936
      %v1969 = vpack.c.bf16 %v1939, %v1938
      %v1970 = vpack.c.bf16 %v1941, %v1940
      %v1971 = vpack.c.bf16 %v1943, %v1942
      %v1972 = vpack.c.bf16 %v1945, %v1944
      %v1973 = vpack.c.bf16 %v1947, %v1946
      %v1974 = vpack.c.bf16 %v1949, %v1948
      %v1975 = vpack.c.bf16 %v1951, %v1950
      %v1976 = vpack.c.bf16 %v1953, %v1952
      %v1977 = vpack.c.bf16 %v1955, %v1954
      %v1978 = vpack.c.bf16 %v1957, %v1956
      %v1979 = vpack.c.bf16 %v1959, %v1958
      %v1980 = vpack.c.bf16 %v1961, %v1960
      %v1981 = vpack.c.bf16 %v1963, %v1962
      %v1982 = vpack.c.bf16 %v1965, %v1964
      %v1983 = vpack.c.bf16 %v1967, %v1966
      %s1984 = scalar_lea.vmem %s3, 64
      %v1985 = vld [vmem:[%s1984] sm:$0xf]
      %v1986 = vld [vmem:[%s1984 + $0x4] sm:$0xf]
      %v1987 = vld [vmem:[%s1984 + $0x8] sm:$0xf]
      %v1988 = vld [vmem:[%s1984 + $0xc] sm:$0xf]
      %v1989 = vld [vmem:[%s1984 + $0x10] sm:$0xf]
      %v1990 = vld [vmem:[%s1984 + $0x14] sm:$0xf]
      %v1991 = vld [vmem:[%s1984 + $0x18] sm:$0xf]
      %v1992 = vld [vmem:[%s1984 + $0x1c] sm:$0xf]
      %v1993 = vld [vmem:[%s1984 + $0x20] sm:$0xf]
      %v1994 = vld [vmem:[%s1984 + $0x24] sm:$0xf]
      %v1995 = vld [vmem:[%s1984 + $0x28] sm:$0xf]
      %v1996 = vld [vmem:[%s1984 + $0x2c] sm:$0xf]
      %v1997 = vld [vmem:[%s1984 + $0x30] sm:$0xf]
      %v1998 = vld [vmem:[%s1984 + $0x34] sm:$0xf]
      %v1999 = vld [vmem:[%s1984 + $0x38] sm:$0xf]
      %v2000 = vld [vmem:[%s1984 + $0x3c] sm:$0xf]
      %v2001 = vld [vmem:[%s4 + $0x1] sm:$0x1]
      %v2002 = vlaneseq
      %v2003 = vshrl.u32 %v2002, 7
      %v2004 = vsub.s32 0, %v2003
      %v2005 = vrot.slane %v2001, %v2004
      %v2022 = vunpack.c.l.b16 %v1985
      %v2023 = vunpack.c.l.b16 %v1986
      %v2024 = vunpack.c.l.b16 %v1987
      %v2025 = vunpack.c.l.b16 %v1988
      %v2026 = vunpack.c.l.b16 %v1989
      %v2027 = vunpack.c.l.b16 %v1990
      %v2028 = vunpack.c.l.b16 %v1991
      %v2029 = vunpack.c.l.b16 %v1992
      %v2030 = vunpack.c.l.b16 %v1993
      %v2031 = vunpack.c.l.b16 %v1994
      %v2032 = vunpack.c.l.b16 %v1995
      %v2033 = vunpack.c.l.b16 %v1996
      %v2034 = vunpack.c.l.b16 %v1997
      %v2035 = vunpack.c.l.b16 %v1998
      %v2036 = vunpack.c.l.b16 %v1999
      %v2037 = vunpack.c.l.b16 %v2000
      %v2038 = vpack.c.b16 %v2023, %v2022
      %v2039 = vpack.c.b16 %v2025, %v2024
      %v2040 = vpack.c.b16 %v2027, %v2026
      %v2041 = vpack.c.b16 %v2029, %v2028
      %v2042 = vpack.c.b16 %v2031, %v2030
      %v2043 = vpack.c.b16 %v2033, %v2032
      %v2044 = vpack.c.b16 %v2035, %v2034
      %v2045 = vpack.c.b16 %v2037, %v2036
      %2054 = vmatprep.subr.bf16.mxu0 0
      %2055 = vmatpush1.bf16.msra.mxu0 %v2045
      %2056 = vmatprep.subr.bf16.mxu0 0
      %2057 = vmatpush1.bf16.msra.mxu0 %v2044
      %2058 = vmatprep.subr.bf16.mxu0 0
      %2059 = vmatpush1.bf16.msra.mxu0 %v2043
      %2060 = vmatprep.subr.bf16.mxu0 0
      %2061 = vmatpush1.bf16.msra.mxu0 %v2042
      %2062 = vmatprep.subr.bf16.mxu0 0
      %2063 = vmatpush1.bf16.msra.mxu0 %v2041
      %2064 = vmatprep.subr.bf16.mxu0 0
      %2065 = vmatpush1.bf16.msra.mxu0 %v2040
      %2066 = vmatprep.subr.bf16.mxu0 0
      %2067 = vmatpush1.bf16.msra.mxu0 %v2039
      %2068 = vmatprep.subr.bf16.mxu0 0
      %2069 = vmatpush1.bf16.msra.mxu0 %v2038
      %2070 = vmatprep.subr.bf16.mxu0 0
      %2071 = vmatpush2.bf16.msra.mxu0 0
      %2072 = vmatprep.subr.bf16.mxu0 0
      %2073 = vmatpush2.bf16.msra.mxu0 0
      %2074 = vmatprep.subr.bf16.mxu0 0
      %2075 = vmatpush2.bf16.msra.mxu0 0
      %2076 = vmatprep.subr.bf16.mxu0 0
      %2077 = vmatpush2.bf16.msra.mxu0 0
      %2078 = vmatprep.subr.bf16.mxu0 0
      %2079 = vmatpush2.bf16.msra.mxu0 0
      %2080 = vmatprep.subr.bf16.mxu0 0
      %2081 = vmatpush2.bf16.msra.mxu0 0
      %2082 = vmatprep.subr.bf16.mxu0 0
      %2083 = vmatpush2.bf16.msra.mxu0 0
      %2084 = vmatprep.subr.bf16.mxu0 0
      %2085 = vmatpush2.bf16.msra.mxu0 0
      %2086 = vmatprep.mubr.bf16.mxu0 0
      %2087 = vmatmul.mubr.bf16.gmra.mxu0 %v1968
      %v2088 = vpop.f32.mrf.mxu0
      %v2089 = vadd.f32 %v2005, %v2088
      %v2090 = vpop.f32.mrf.mxu0
      %v2091 = vpop.f32.mrf.mxu0
      %v2092 = vadd.f32 %v2005, %v2091
      %v2093 = vpop.f32.mrf.mxu0
      %2094 = vmatprep.mubr.bf16.mxu0 0
      %2095 = vmatmul.mubr.bf16.gmra.mxu0 %v1969
      %v2096 = vpop.f32.mrf.mxu0
      %v2097 = vadd.f32 %v2005, %v2096
      %v2098 = vpop.f32.mrf.mxu0
      %v2099 = vpop.f32.mrf.mxu0
      %v2100 = vadd.f32 %v2005, %v2099
      %v2101 = vpop.f32.mrf.mxu0
      %2102 = vmatprep.mubr.bf16.mxu0 0
      %2103 = vmatmul.mubr.bf16.gmra.mxu0 %v1970
      %v2104 = vpop.f32.mrf.mxu0
      %v2105 = vadd.f32 %v2005, %v2104
      %v2106 = vpop.f32.mrf.mxu0
      %v2107 = vpop.f32.mrf.mxu0
      %v2108 = vadd.f32 %v2005, %v2107
      %v2109 = vpop.f32.mrf.mxu0
      %2110 = vmatprep.mubr.bf16.mxu0 0
      %2111 = vmatmul.mubr.bf16.gmra.mxu0 %v1971
      %v2112 = vpop.f32.mrf.mxu0
      %v2113 = vadd.f32 %v2005, %v2112
      %v2114 = vpop.f32.mrf.mxu0
      %v2115 = vpop.f32.mrf.mxu0
      %v2116 = vadd.f32 %v2005, %v2115
      %v2117 = vpop.f32.mrf.mxu0
      %2118 = vmatprep.mubr.bf16.mxu0 0
      %2119 = vmatmul.mubr.bf16.gmra.mxu0 %v1972
      %v2120 = vpop.f32.mrf.mxu0
      %v2121 = vadd.f32 %v2005, %v2120
      %v2122 = vpop.f32.mrf.mxu0
      %v2123 = vpop.f32.mrf.mxu0
      %v2124 = vadd.f32 %v2005, %v2123
      %v2125 = vpop.f32.mrf.mxu0
      %2126 = vmatprep.mubr.bf16.mxu0 0
      %2127 = vmatmul.mubr.bf16.gmra.mxu0 %v1973
      %v2128 = vpop.f32.mrf.mxu0
      %v2129 = vadd.f32 %v2005, %v2128
      %v2130 = vpop.f32.mrf.mxu0
      %v2131 = vpop.f32.mrf.mxu0
      %v2132 = vadd.f32 %v2005, %v2131
      %v2133 = vpop.f32.mrf.mxu0
      %2134 = vmatprep.mubr.bf16.mxu0 0
      %2135 = vmatmul.mubr.bf16.gmra.mxu0 %v1974
      %v2136 = vpop.f32.mrf.mxu0
      %v2137 = vadd.f32 %v2005, %v2136
      %v2138 = vpop.f32.mrf.mxu0
      %v2139 = vpop.f32.mrf.mxu0
      %v2140 = vadd.f32 %v2005, %v2139
      %v2141 = vpop.f32.mrf.mxu0
      %2142 = vmatprep.mubr.bf16.mxu0 0
      %2143 = vmatmul.mubr.bf16.gmra.mxu0 %v1975
      %v2144 = vpop.f32.mrf.mxu0
      %v2145 = vadd.f32 %v2005, %v2144
      %v2146 = vpop.f32.mrf.mxu0
      %v2147 = vpop.f32.mrf.mxu0
      %v2148 = vadd.f32 %v2005, %v2147
      %v2149 = vpop.f32.mrf.mxu0
      %2150 = vmatprep.mubr.bf16.mxu0 0
      %2151 = vmatmul.mubr.bf16.gmra.mxu0 %v1976
      %v2152 = vpop.f32.mrf.mxu0
      %v2153 = vadd.f32 %v2005, %v2152
      %v2154 = vpop.f32.mrf.mxu0
      %v2155 = vpop.f32.mrf.mxu0
      %v2156 = vadd.f32 %v2005, %v2155
      %v2157 = vpop.f32.mrf.mxu0
      %2158 = vmatprep.mubr.bf16.mxu0 0
      %2159 = vmatmul.mubr.bf16.gmra.mxu0 %v1977
      %v2160 = vpop.f32.mrf.mxu0
      %v2161 = vadd.f32 %v2005, %v2160
      %v2162 = vpop.f32.mrf.mxu0
      %v2163 = vpop.f32.mrf.mxu0
      %v2164 = vadd.f32 %v2005, %v2163
      %v2165 = vpop.f32.mrf.mxu0
      %2166 = vmatprep.mubr.bf16.mxu0 0
      %2167 = vmatmul.mubr.bf16.gmra.mxu0 %v1978
      %v2168 = vpop.f32.mrf.mxu0
      %v2169 = vadd.f32 %v2005, %v2168
      %v2170 = vpop.f32.mrf.mxu0
      %v2171 = vpop.f32.mrf.mxu0
      %v2172 = vadd.f32 %v2005, %v2171
      %v2173 = vpop.f32.mrf.mxu0
      %2174 = vmatprep.mubr.bf16.mxu0 0
      %2175 = vmatmul.mubr.bf16.gmra.mxu0 %v1979
      %v2176 = vpop.f32.mrf.mxu0
      %v2177 = vadd.f32 %v2005, %v2176
      %v2178 = vpop.f32.mrf.mxu0
      %v2179 = vpop.f32.mrf.mxu0
      %v2180 = vadd.f32 %v2005, %v2179
      %v2181 = vpop.f32.mrf.mxu0
      %2182 = vmatprep.mubr.bf16.mxu0 0
      %2183 = vmatmul.mubr.bf16.gmra.mxu0 %v1980
      %v2184 = vpop.f32.mrf.mxu0
      %v2185 = vadd.f32 %v2005, %v2184
      %v2186 = vpop.f32.mrf.mxu0
      %v2187 = vpop.f32.mrf.mxu0
      %v2188 = vadd.f32 %v2005, %v2187
      %v2189 = vpop.f32.mrf.mxu0
      %2190 = vmatprep.mubr.bf16.mxu0 0
      %2191 = vmatmul.mubr.bf16.gmra.mxu0 %v1981
      %v2192 = vpop.f32.mrf.mxu0
      %v2193 = vadd.f32 %v2005, %v2192
      %v2194 = vpop.f32.mrf.mxu0
      %v2195 = vpop.f32.mrf.mxu0
      %v2196 = vadd.f32 %v2005, %v2195
      %v2197 = vpop.f32.mrf.mxu0
      %2198 = vmatprep.mubr.bf16.mxu0 0
      %2199 = vmatmul.mubr.bf16.gmra.mxu0 %v1982
      %v2200 = vpop.f32.mrf.mxu0
      %v2201 = vadd.f32 %v2005, %v2200
      %v2202 = vpop.f32.mrf.mxu0
      %v2203 = vpop.f32.mrf.mxu0
      %v2204 = vadd.f32 %v2005, %v2203
      %v2205 = vpop.f32.mrf.mxu0
      %2206 = vmatprep.mubr.bf16.mxu0 0
      %2207 = vmatmul.mubr.bf16.gmra.mxu0 %v1983
      %v2208 = vpop.f32.mrf.mxu0
      %v2209 = vadd.f32 %v2005, %v2208
      %v2210 = vpop.f32.mrf.mxu0
      %v2211 = vpop.f32.mrf.mxu0
      %v2212 = vadd.f32 %v2005, %v2211
      %v2213 = vpop.f32.mrf.mxu0
      %2214 = vdwg.mxu0
      %v2215 = vmax.f32 %v2089, 0.0
      %v2216 = vmax.f32 %v2092, 0.0
      %v2217 = vmax.f32 %v2097, 0.0
      %v2218 = vmax.f32 %v2100, 0.0
      %v2219 = vmax.f32 %v2105, 0.0
      %v2220 = vmax.f32 %v2108, 0.0
      %v2221 = vmax.f32 %v2113, 0.0
      %v2222 = vmax.f32 %v2116, 0.0
      %v2223 = vmax.f32 %v2121, 0.0
      %v2224 = vmax.f32 %v2124, 0.0
      %v2225 = vmax.f32 %v2129, 0.0
      %v2226 = vmax.f32 %v2132, 0.0
      %v2227 = vmax.f32 %v2137, 0.0
      %v2228 = vmax.f32 %v2140, 0.0
      %v2229 = vmax.f32 %v2145, 0.0
      %v2230 = vmax.f32 %v2148, 0.0
      %v2231 = vmax.f32 %v2153, 0.0
      %v2232 = vmax.f32 %v2156, 0.0
      %v2233 = vmax.f32 %v2161, 0.0
      %v2234 = vmax.f32 %v2164, 0.0
      %v2235 = vmax.f32 %v2169, 0.0
      %v2236 = vmax.f32 %v2172, 0.0
      %v2237 = vmax.f32 %v2177, 0.0
      %v2238 = vmax.f32 %v2180, 0.0
      %v2239 = vmax.f32 %v2185, 0.0
      %v2240 = vmax.f32 %v2188, 0.0
      %v2241 = vmax.f32 %v2193, 0.0
      %v2242 = vmax.f32 %v2196, 0.0
      %v2243 = vmax.f32 %v2201, 0.0
      %v2244 = vmax.f32 %v2204, 0.0
      %v2245 = vmax.f32 %v2209, 0.0
      %v2246 = vmax.f32 %v2212, 0.0
      %v2247 = vpack.c.bf16 %v2216, %v2215
      %v2248 = vpack.c.bf16 %v2218, %v2217
      %v2249 = vpack.c.bf16 %v2220, %v2219
      %v2250 = vpack.c.bf16 %v2222, %v2221
      %v2251 = vpack.c.bf16 %v2224, %v2223
      %v2252 = vpack.c.bf16 %v2226, %v2225
      %v2253 = vpack.c.bf16 %v2228, %v2227
      %v2254 = vpack.c.bf16 %v2230, %v2229
      %v2255 = vpack.c.bf16 %v2232, %v2231
      %v2256 = vpack.c.bf16 %v2234, %v2233
      %v2257 = vpack.c.bf16 %v2236, %v2235
      %v2258 = vpack.c.bf16 %v2238, %v2237
      %v2259 = vpack.c.bf16 %v2240, %v2239
      %v2260 = vpack.c.bf16 %v2242, %v2241
      %v2261 = vpack.c.bf16 %v2244, %v2243
      %v2262 = vpack.c.bf16 %v2246, %v2245
      %s2263 = scalar_lea.vmem %s5, 64
      %v2264 = vld [vmem:[%s2263] sm:$0xf]
      %v2265 = vld [vmem:[%s2263 + $0x4] sm:$0xf]
      %v2266 = vld [vmem:[%s2263 + $0x8] sm:$0xf]
      %v2267 = vld [vmem:[%s2263 + $0xc] sm:$0xf]
      %v2268 = vld [vmem:[%s2263 + $0x10] sm:$0xf]
      %v2269 = vld [vmem:[%s2263 + $0x14] sm:$0xf]
      %v2270 = vld [vmem:[%s2263 + $0x18] sm:$0xf]
      %v2271 = vld [vmem:[%s2263 + $0x1c] sm:$0xf]
      %v2272 = vld [vmem:[%s2263 + $0x20] sm:$0xf]
      %v2273 = vld [vmem:[%s2263 + $0x24] sm:$0xf]
      %v2274 = vld [vmem:[%s2263 + $0x28] sm:$0xf]
      %v2275 = vld [vmem:[%s2263 + $0x2c] sm:$0xf]
      %v2276 = vld [vmem:[%s2263 + $0x30] sm:$0xf]
      %v2277 = vld [vmem:[%s2263 + $0x34] sm:$0xf]
      %v2278 = vld [vmem:[%s2263 + $0x38] sm:$0xf]
      %v2279 = vld [vmem:[%s2263 + $0x3c] sm:$0xf]
      %v2280 = vld [vmem:[%s6 + $0x1] sm:$0x1]
      %v2281 = vlaneseq
      %v2282 = vshrl.u32 %v2281, 7
      %v2283 = vsub.s32 0, %v2282
      %v2284 = vrot.slane %v2280, %v2283
      %v2301 = vunpack.c.l.b16 %v2264
      %v2302 = vunpack.c.l.b16 %v2265
      %v2303 = vunpack.c.l.b16 %v2266
      %v2304 = vunpack.c.l.b16 %v2267
      %v2305 = vunpack.c.l.b16 %v2268
      %v2306 = vunpack.c.l.b16 %v2269
      %v2307 = vunpack.c.l.b16 %v2270
      %v2308 = vunpack.c.l.b16 %v2271
      %v2309 = vunpack.c.l.b16 %v2272
      %v2310 = vunpack.c.l.b16 %v2273
      %v2311 = vunpack.c.l.b16 %v2274
      %v2312 = vunpack.c.l.b16 %v2275
      %v2313 = vunpack.c.l.b16 %v2276
      %v2314 = vunpack.c.l.b16 %v2277
      %v2315 = vunpack.c.l.b16 %v2278
      %v2316 = vunpack.c.l.b16 %v2279
      %v2317 = vpack.c.b16 %v2302, %v2301
      %v2318 = vpack.c.b16 %v2304, %v2303
      %v2319 = vpack.c.b16 %v2306, %v2305
      %v2320 = vpack.c.b16 %v2308, %v2307
      %v2321 = vpack.c.b16 %v2310, %v2309
      %v2322 = vpack.c.b16 %v2312, %v2311
      %v2323 = vpack.c.b16 %v2314, %v2313
      %v2324 = vpack.c.b16 %v2316, %v2315
      %2333 = vmatprep.subr.bf16.mxu0 0
      %2334 = vmatpush1.bf16.msra.mxu0 %v2324
      %2335 = vmatprep.subr.bf16.mxu0 0
      %2336 = vmatpush1.bf16.msra.mxu0 %v2323
      %2337 = vmatprep.subr.bf16.mxu0 0
      %2338 = vmatpush1.bf16.msra.mxu0 %v2322
      %2339 = vmatprep.subr.bf16.mxu0 0
      %2340 = vmatpush1.bf16.msra.mxu0 %v2321
      %2341 = vmatprep.subr.bf16.mxu0 0
      %2342 = vmatpush1.bf16.msra.mxu0 %v2320
      %2343 = vmatprep.subr.bf16.mxu0 0
      %2344 = vmatpush1.bf16.msra.mxu0 %v2319
      %2345 = vmatprep.subr.bf16.mxu0 0
      %2346 = vmatpush1.bf16.msra.mxu0 %v2318
      %2347 = vmatprep.subr.bf16.mxu0 0
      %2348 = vmatpush1.bf16.msra.mxu0 %v2317
      %2349 = vmatprep.subr.bf16.mxu0 0
      %2350 = vmatpush2.bf16.msra.mxu0 0
      %2351 = vmatprep.subr.bf16.mxu0 0
      %2352 = vmatpush2.bf16.msra.mxu0 0
      %2353 = vmatprep.subr.bf16.mxu0 0
      %2354 = vmatpush2.bf16.msra.mxu0 0
      %2355 = vmatprep.subr.bf16.mxu0 0
      %2356 = vmatpush2.bf16.msra.mxu0 0
      %2357 = vmatprep.subr.bf16.mxu0 0
      %2358 = vmatpush2.bf16.msra.mxu0 0
      %2359 = vmatprep.subr.bf16.mxu0 0
      %2360 = vmatpush2.bf16.msra.mxu0 0
      %2361 = vmatprep.subr.bf16.mxu0 0
      %2362 = vmatpush2.bf16.msra.mxu0 0
      %2363 = vmatprep.subr.bf16.mxu0 0
      %2364 = vmatpush2.bf16.msra.mxu0 0
      %2365 = vmatprep.mubr.bf16.mxu0 0
      %2366 = vmatmul.mubr.bf16.gmra.mxu0 %v2247
      %v2367 = vpop.f32.mrf.mxu0
      %v2368 = vadd.f32 %v2284, %v2367
      %v2369 = vpop.f32.mrf.mxu0
      %v2370 = vpop.f32.mrf.mxu0
      %v2371 = vadd.f32 %v2284, %v2370
      %v2372 = vpop.f32.mrf.mxu0
      %2373 = vmatprep.mubr.bf16.mxu0 0
      %2374 = vmatmul.mubr.bf16.gmra.mxu0 %v2248
      %v2375 = vpop.f32.mrf.mxu0
      %v2376 = vadd.f32 %v2284, %v2375
      %v2377 = vpop.f32.mrf.mxu0
      %v2378 = vpop.f32.mrf.mxu0
      %v2379 = vadd.f32 %v2284, %v2378
      %v2380 = vpop.f32.mrf.mxu0
      %2381 = vmatprep.mubr.bf16.mxu0 0
      %2382 = vmatmul.mubr.bf16.gmra.mxu0 %v2249
      %v2383 = vpop.f32.mrf.mxu0
      %v2384 = vadd.f32 %v2284, %v2383
      %v2385 = vpop.f32.mrf.mxu0
      %v2386 = vpop.f32.mrf.mxu0
      %v2387 = vadd.f32 %v2284, %v2386
      %v2388 = vpop.f32.mrf.mxu0
      %2389 = vmatprep.mubr.bf16.mxu0 0
      %2390 = vmatmul.mubr.bf16.gmra.mxu0 %v2250
      %v2391 = vpop.f32.mrf.mxu0
      %v2392 = vadd.f32 %v2284, %v2391
      %v2393 = vpop.f32.mrf.mxu0
      %v2394 = vpop.f32.mrf.mxu0
      %v2395 = vadd.f32 %v2284, %v2394
      %v2396 = vpop.f32.mrf.mxu0
      %2397 = vmatprep.mubr.bf16.mxu0 0
      %2398 = vmatmul.mubr.bf16.gmra.mxu0 %v2251
      %v2399 = vpop.f32.mrf.mxu0
      %v2400 = vadd.f32 %v2284, %v2399
      %v2401 = vpop.f32.mrf.mxu0
      %v2402 = vpop.f32.mrf.mxu0
      %v2403 = vadd.f32 %v2284, %v2402
      %v2404 = vpop.f32.mrf.mxu0
      %2405 = vmatprep.mubr.bf16.mxu0 0
      %2406 = vmatmul.mubr.bf16.gmra.mxu0 %v2252
      %v2407 = vpop.f32.mrf.mxu0
      %v2408 = vadd.f32 %v2284, %v2407
      %v2409 = vpop.f32.mrf.mxu0
      %v2410 = vpop.f32.mrf.mxu0
      %v2411 = vadd.f32 %v2284, %v2410
      %v2412 = vpop.f32.mrf.mxu0
      %2413 = vmatprep.mubr.bf16.mxu0 0
      %2414 = vmatmul.mubr.bf16.gmra.mxu0 %v2253
      %v2415 = vpop.f32.mrf.mxu0
      %v2416 = vadd.f32 %v2284, %v2415
      %v2417 = vpop.f32.mrf.mxu0
      %v2418 = vpop.f32.mrf.mxu0
      %v2419 = vadd.f32 %v2284, %v2418
      %v2420 = vpop.f32.mrf.mxu0
      %2421 = vmatprep.mubr.bf16.mxu0 0
      %2422 = vmatmul.mubr.bf16.gmra.mxu0 %v2254
      %v2423 = vpop.f32.mrf.mxu0
      %v2424 = vadd.f32 %v2284, %v2423
      %v2425 = vpop.f32.mrf.mxu0
      %v2426 = vpop.f32.mrf.mxu0
      %v2427 = vadd.f32 %v2284, %v2426
      %v2428 = vpop.f32.mrf.mxu0
      %2429 = vmatprep.mubr.bf16.mxu0 0
      %2430 = vmatmul.mubr.bf16.gmra.mxu0 %v2255
      %v2431 = vpop.f32.mrf.mxu0
      %v2432 = vadd.f32 %v2284, %v2431
      %v2433 = vpop.f32.mrf.mxu0
      %v2434 = vpop.f32.mrf.mxu0
      %v2435 = vadd.f32 %v2284, %v2434
      %v2436 = vpop.f32.mrf.mxu0
      %2437 = vmatprep.mubr.bf16.mxu0 0
      %2438 = vmatmul.mubr.bf16.gmra.mxu0 %v2256
      %v2439 = vpop.f32.mrf.mxu0
      %v2440 = vadd.f32 %v2284, %v2439
      %v2441 = vpop.f32.mrf.mxu0
      %v2442 = vpop.f32.mrf.mxu0
      %v2443 = vadd.f32 %v2284, %v2442
      %v2444 = vpop.f32.mrf.mxu0
      %2445 = vmatprep.mubr.bf16.mxu0 0
      %2446 = vmatmul.mubr.bf16.gmra.mxu0 %v2257
      %v2447 = vpop.f32.mrf.mxu0
      %v2448 = vadd.f32 %v2284, %v2447
      %v2449 = vpop.f32.mrf.mxu0
      %v2450 = vpop.f32.mrf.mxu0
      %v2451 = vadd.f32 %v2284, %v2450
      %v2452 = vpop.f32.mrf.mxu0
      %2453 = vmatprep.mubr.bf16.mxu0 0
      %2454 = vmatmul.mubr.bf16.gmra.mxu0 %v2258
      %v2455 = vpop.f32.mrf.mxu0
      %v2456 = vadd.f32 %v2284, %v2455
      %v2457 = vpop.f32.mrf.mxu0
      %v2458 = vpop.f32.mrf.mxu0
      %v2459 = vadd.f32 %v2284, %v2458
      %v2460 = vpop.f32.mrf.mxu0
      %2461 = vmatprep.mubr.bf16.mxu0 0
      %2462 = vmatmul.mubr.bf16.gmra.mxu0 %v2259
      %v2463 = vpop.f32.mrf.mxu0
      %v2464 = vadd.f32 %v2284, %v2463
      %v2465 = vpop.f32.mrf.mxu0
      %v2466 = vpop.f32.mrf.mxu0
      %v2467 = vadd.f32 %v2284, %v2466
      %v2468 = vpop.f32.mrf.mxu0
      %2469 = vmatprep.mubr.bf16.mxu0 0
      %2470 = vmatmul.mubr.bf16.gmra.mxu0 %v2260
      %v2471 = vpop.f32.mrf.mxu0
      %v2472 = vadd.f32 %v2284, %v2471
      %v2473 = vpop.f32.mrf.mxu0
      %v2474 = vpop.f32.mrf.mxu0
      %v2475 = vadd.f32 %v2284, %v2474
      %v2476 = vpop.f32.mrf.mxu0
      %2477 = vmatprep.mubr.bf16.mxu0 0
      %2478 = vmatmul.mubr.bf16.gmra.mxu0 %v2261
      %v2479 = vpop.f32.mrf.mxu0
      %v2480 = vadd.f32 %v2284, %v2479
      %v2481 = vpop.f32.mrf.mxu0
      %v2482 = vpop.f32.mrf.mxu0
      %v2483 = vadd.f32 %v2284, %v2482
      %v2484 = vpop.f32.mrf.mxu0
      %2485 = vmatprep.mubr.bf16.mxu0 0
      %2486 = vmatmul.mubr.bf16.gmra.mxu0 %v2262
      %v2487 = vpop.f32.mrf.mxu0
      %v2488 = vadd.f32 %v2284, %v2487
      %v2489 = vpop.f32.mrf.mxu0
      %v2490 = vpop.f32.mrf.mxu0
      %v2491 = vadd.f32 %v2284, %v2490
      %v2492 = vpop.f32.mrf.mxu0
      %2493 = vdwg.mxu0
      %v2494 = vadd.f32 %v1904, %v2368
      %v2495 = vadd.f32 %v1905, %v2371
      %v2496 = vadd.f32 %v1906, %v2376
      %v2497 = vadd.f32 %v1907, %v2379
      %v2498 = vadd.f32 %v1908, %v2384
      %v2499 = vadd.f32 %v1909, %v2387
      %v2500 = vadd.f32 %v1910, %v2392
      %v2501 = vadd.f32 %v1911, %v2395
      %v2502 = vadd.f32 %v1912, %v2400
      %v2503 = vadd.f32 %v1913, %v2403
      %v2504 = vadd.f32 %v1914, %v2408
      %v2505 = vadd.f32 %v1915, %v2411
      %v2506 = vadd.f32 %v1916, %v2416
      %v2507 = vadd.f32 %v1917, %v2419
      %v2508 = vadd.f32 %v1918, %v2424
      %v2509 = vadd.f32 %v1919, %v2427
      %v2510 = vadd.f32 %v1920, %v2432
      %v2511 = vadd.f32 %v1921, %v2435
      %v2512 = vadd.f32 %v1922, %v2440
      %v2513 = vadd.f32 %v1923, %v2443
      %v2514 = vadd.f32 %v1924, %v2448
      %v2515 = vadd.f32 %v1925, %v2451
      %v2516 = vadd.f32 %v1926, %v2456
      %v2517 = vadd.f32 %v1927, %v2459
      %v2518 = vadd.f32 %v1928, %v2464
      %v2519 = vadd.f32 %v1929, %v2467
      %v2520 = vadd.f32 %v1930, %v2472
      %v2521 = vadd.f32 %v1931, %v2475
      %v2522 = vadd.f32 %v1932, %v2480
      %v2523 = vadd.f32 %v1933, %v2483
      %v2524 = vadd.f32 %v1934, %v2488
      %v2525 = vadd.f32 %v1935, %v2491
      %v2526 = vadd.f32 %v2494, %v935
      %v2527 = vadd.f32 %v2495, %v939
      %v2528 = vadd.f32 %v2496, %v945
      %v2529 = vadd.f32 %v2497, %v949
      %v2530 = vadd.f32 %v2498, %v955
      %v2531 = vadd.f32 %v2499, %v959
      %v2532 = vadd.f32 %v2500, %v965
      %v2533 = vadd.f32 %v2501, %v969
      %v2534 = vadd.f32 %v2502, %v975
      %v2535 = vadd.f32 %v2503, %v979
      %v2536 = vadd.f32 %v2504, %v985
      %v2537 = vadd.f32 %v2505, %v989
      %v2538 = vadd.f32 %v2506, %v995
      %v2539 = vadd.f32 %v2507, %v999
      %v2540 = vadd.f32 %v2508, %v1005
      %v2541 = vadd.f32 %v2509, %v1009
      %v2542 = vadd.f32 %v2510, %v1015
      %v2543 = vadd.f32 %v2511, %v1019
      %v2544 = vadd.f32 %v2512, %v1025
      %v2545 = vadd.f32 %v2513, %v1029
      %v2546 = vadd.f32 %v2514, %v1035
      %v2547 = vadd.f32 %v2515, %v1039
      %v2548 = vadd.f32 %v2516, %v1045
      %v2549 = vadd.f32 %v2517, %v1049
      %v2550 = vadd.f32 %v2518, %v1055
      %v2551 = vadd.f32 %v2519, %v1059
      %v2552 = vadd.f32 %v2520, %v1065
      %v2553 = vadd.f32 %v2521, %v1069
      %v2554 = vadd.f32 %v2522, %v1075
      %v2555 = vadd.f32 %v2523, %v1079
      %v2556 = vadd.f32 %v2524, %v1085
      %v2557 = vadd.f32 %v2525, %v1089
      %v2558 = vmax.f32 %v2526, 0.0
      %v2559 = vmax.f32 %v2527, 0.0
      %v2560 = vmax.f32 %v2528, 0.0
      %v2561 = vmax.f32 %v2529, 0.0
      %v2562 = vmax.f32 %v2530, 0.0
      %v2563 = vmax.f32 %v2531, 0.0
      %v2564 = vmax.f32 %v2532, 0.0
      %v2565 = vmax.f32 %v2533, 0.0
      %v2566 = vmax.f32 %v2534, 0.0
      %v2567 = vmax.f32 %v2535, 0.0
      %v2568 = vmax.f32 %v2536, 0.0
      %v2569 = vmax.f32 %v2537, 0.0
      %v2570 = vmax.f32 %v2538, 0.0
      %v2571 = vmax.f32 %v2539, 0.0
      %v2572 = vmax.f32 %v2540, 0.0
      %v2573 = vmax.f32 %v2541, 0.0
      %v2574 = vmax.f32 %v2542, 0.0
      %v2575 = vmax.f32 %v2543, 0.0
      %v2576 = vmax.f32 %v2544, 0.0
      %v2577 = vmax.f32 %v2545, 0.0
      %v2578 = vmax.f32 %v2546, 0.0
      %v2579 = vmax.f32 %v2547, 0.0
      %v2580 = vmax.f32 %v2548, 0.0
      %v2581 = vmax.f32 %v2549, 0.0
      %v2582 = vmax.f32 %v2550, 0.0
      %v2583 = vmax.f32 %v2551, 0.0
      %v2584 = vmax.f32 %v2552, 0.0
      %v2585 = vmax.f32 %v2553, 0.0
      %v2586 = vmax.f32 %v2554, 0.0
      %v2587 = vmax.f32 %v2555, 0.0
      %v2588 = vmax.f32 %v2556, 0.0
      %v2589 = vmax.f32 %v2557, 0.0
      %v2590 = vpack.c.bf16 %v2559, %v2558
      %v2591 = vpack.c.bf16 %v2561, %v2560
      %v2592 = vpack.c.bf16 %v2563, %v2562
      %v2593 = vpack.c.bf16 %v2565, %v2564
      %v2594 = vpack.c.bf16 %v2567, %v2566
      %v2595 = vpack.c.bf16 %v2569, %v2568
      %v2596 = vpack.c.bf16 %v2571, %v2570
      %v2597 = vpack.c.bf16 %v2573, %v2572
      %v2598 = vpack.c.bf16 %v2575, %v2574
      %v2599 = vpack.c.bf16 %v2577, %v2576
      %v2600 = vpack.c.bf16 %v2579, %v2578
      %v2601 = vpack.c.bf16 %v2581, %v2580
      %v2602 = vpack.c.bf16 %v2583, %v2582
      %v2603 = vpack.c.bf16 %v2585, %v2584
      %v2604 = vpack.c.bf16 %v2587, %v2586
      %v2605 = vpack.c.bf16 %v2589, %v2588
      %s2606 = scalar_lea.vmem %s3, 128
      %v2607 = vld [vmem:[%s2606] sm:$0xf]
      %v2608 = vld [vmem:[%s2606 + $0x4] sm:$0xf]
      %v2609 = vld [vmem:[%s2606 + $0x8] sm:$0xf]
      %v2610 = vld [vmem:[%s2606 + $0xc] sm:$0xf]
      %v2611 = vld [vmem:[%s2606 + $0x10] sm:$0xf]
      %v2612 = vld [vmem:[%s2606 + $0x14] sm:$0xf]
      %v2613 = vld [vmem:[%s2606 + $0x18] sm:$0xf]
      %v2614 = vld [vmem:[%s2606 + $0x1c] sm:$0xf]
      %v2615 = vld [vmem:[%s2606 + $0x20] sm:$0xf]
      %v2616 = vld [vmem:[%s2606 + $0x24] sm:$0xf]
      %v2617 = vld [vmem:[%s2606 + $0x28] sm:$0xf]
      %v2618 = vld [vmem:[%s2606 + $0x2c] sm:$0xf]
      %v2619 = vld [vmem:[%s2606 + $0x30] sm:$0xf]
      %v2620 = vld [vmem:[%s2606 + $0x34] sm:$0xf]
      %v2621 = vld [vmem:[%s2606 + $0x38] sm:$0xf]
      %v2622 = vld [vmem:[%s2606 + $0x3c] sm:$0xf]
      %v2623 = vld [vmem:[%s4 + $0x2] sm:$0x1]
      %v2624 = vlaneseq
      %v2625 = vshrl.u32 %v2624, 7
      %v2626 = vsub.s32 0, %v2625
      %v2627 = vrot.slane %v2623, %v2626
      %v2644 = vunpack.c.l.b16 %v2607
      %v2645 = vunpack.c.l.b16 %v2608
      %v2646 = vunpack.c.l.b16 %v2609
      %v2647 = vunpack.c.l.b16 %v2610
      %v2648 = vunpack.c.l.b16 %v2611
      %v2649 = vunpack.c.l.b16 %v2612
      %v2650 = vunpack.c.l.b16 %v2613
      %v2651 = vunpack.c.l.b16 %v2614
      %v2652 = vunpack.c.l.b16 %v2615
      %v2653 = vunpack.c.l.b16 %v2616
      %v2654 = vunpack.c.l.b16 %v2617
      %v2655 = vunpack.c.l.b16 %v2618
      %v2656 = vunpack.c.l.b16 %v2619
      %v2657 = vunpack.c.l.b16 %v2620
      %v2658 = vunpack.c.l.b16 %v2621
      %v2659 = vunpack.c.l.b16 %v2622
      %v2660 = vpack.c.b16 %v2645, %v2644
      %v2661 = vpack.c.b16 %v2647, %v2646
      %v2662 = vpack.c.b16 %v2649, %v2648
      %v2663 = vpack.c.b16 %v2651, %v2650
      %v2664 = vpack.c.b16 %v2653, %v2652
      %v2665 = vpack.c.b16 %v2655, %v2654
      %v2666 = vpack.c.b16 %v2657, %v2656
      %v2667 = vpack.c.b16 %v2659, %v2658
      %2676 = vmatprep.subr.bf16.mxu0 0
      %2677 = vmatpush1.bf16.msra.mxu0 %v2667
      %2678 = vmatprep.subr.bf16.mxu0 0
      %2679 = vmatpush1.bf16.msra.mxu0 %v2666
      %2680 = vmatprep.subr.bf16.mxu0 0
      %2681 = vmatpush1.bf16.msra.mxu0 %v2665
      %2682 = vmatprep.subr.bf16.mxu0 0
      %2683 = vmatpush1.bf16.msra.mxu0 %v2664
      %2684 = vmatprep.subr.bf16.mxu0 0
      %2685 = vmatpush1.bf16.msra.mxu0 %v2663
      %2686 = vmatprep.subr.bf16.mxu0 0
      %2687 = vmatpush1.bf16.msra.mxu0 %v2662
      %2688 = vmatprep.subr.bf16.mxu0 0
      %2689 = vmatpush1.bf16.msra.mxu0 %v2661
      %2690 = vmatprep.subr.bf16.mxu0 0
      %2691 = vmatpush1.bf16.msra.mxu0 %v2660
      %2692 = vmatprep.subr.bf16.mxu0 0
      %2693 = vmatpush2.bf16.msra.mxu0 0
      %2694 = vmatprep.subr.bf16.mxu0 0
      %2695 = vmatpush2.bf16.msra.mxu0 0
      %2696 = vmatprep.subr.bf16.mxu0 0
      %2697 = vmatpush2.bf16.msra.mxu0 0
      %2698 = vmatprep.subr.bf16.mxu0 0
      %2699 = vmatpush2.bf16.msra.mxu0 0
      %2700 = vmatprep.subr.bf16.mxu0 0
      %2701 = vmatpush2.bf16.msra.mxu0 0
      %2702 = vmatprep.subr.bf16.mxu0 0
      %2703 = vmatpush2.bf16.msra.mxu0 0
      %2704 = vmatprep.subr.bf16.mxu0 0
      %2705 = vmatpush2.bf16.msra.mxu0 0
      %2706 = vmatprep.subr.bf16.mxu0 0
      %2707 = vmatpush2.bf16.msra.mxu0 0
      %2708 = vmatprep.mubr.bf16.mxu0 0
      %2709 = vmatmul.mubr.bf16.gmra.mxu0 %v2590
      %v2710 = vpop.f32.mrf.mxu0
      %v2711 = vadd.f32 %v2627, %v2710
      %v2712 = vpop.f32.mrf.mxu0
      %v2713 = vpop.f32.mrf.mxu0
      %v2714 = vadd.f32 %v2627, %v2713
      %v2715 = vpop.f32.mrf.mxu0
      %2716 = vmatprep.mubr.bf16.mxu0 0
      %2717 = vmatmul.mubr.bf16.gmra.mxu0 %v2591
      %v2718 = vpop.f32.mrf.mxu0
      %v2719 = vadd.f32 %v2627, %v2718
      %v2720 = vpop.f32.mrf.mxu0
      %v2721 = vpop.f32.mrf.mxu0
      %v2722 = vadd.f32 %v2627, %v2721
      %v2723 = vpop.f32.mrf.mxu0
      %2724 = vmatprep.mubr.bf16.mxu0 0
      %2725 = vmatmul.mubr.bf16.gmra.mxu0 %v2592
      %v2726 = vpop.f32.mrf.mxu0
      %v2727 = vadd.f32 %v2627, %v2726
      %v2728 = vpop.f32.mrf.mxu0
      %v2729 = vpop.f32.mrf.mxu0
      %v2730 = vadd.f32 %v2627, %v2729
      %v2731 = vpop.f32.mrf.mxu0
      %2732 = vmatprep.mubr.bf16.mxu0 0
      %2733 = vmatmul.mubr.bf16.gmra.mxu0 %v2593
      %v2734 = vpop.f32.mrf.mxu0
      %v2735 = vadd.f32 %v2627, %v2734
      %v2736 = vpop.f32.mrf.mxu0
      %v2737 = vpop.f32.mrf.mxu0
      %v2738 = vadd.f32 %v2627, %v2737
      %v2739 = vpop.f32.mrf.mxu0
      %2740 = vmatprep.mubr.bf16.mxu0 0
      %2741 = vmatmul.mubr.bf16.gmra.mxu0 %v2594
      %v2742 = vpop.f32.mrf.mxu0
      %v2743 = vadd.f32 %v2627, %v2742
      %v2744 = vpop.f32.mrf.mxu0
      %v2745 = vpop.f32.mrf.mxu0
      %v2746 = vadd.f32 %v2627, %v2745
      %v2747 = vpop.f32.mrf.mxu0
      %2748 = vmatprep.mubr.bf16.mxu0 0
      %2749 = vmatmul.mubr.bf16.gmra.mxu0 %v2595
      %v2750 = vpop.f32.mrf.mxu0
      %v2751 = vadd.f32 %v2627, %v2750
      %v2752 = vpop.f32.mrf.mxu0
      %v2753 = vpop.f32.mrf.mxu0
      %v2754 = vadd.f32 %v2627, %v2753
      %v2755 = vpop.f32.mrf.mxu0
      %2756 = vmatprep.mubr.bf16.mxu0 0
      %2757 = vmatmul.mubr.bf16.gmra.mxu0 %v2596
      %v2758 = vpop.f32.mrf.mxu0
      %v2759 = vadd.f32 %v2627, %v2758
      %v2760 = vpop.f32.mrf.mxu0
      %v2761 = vpop.f32.mrf.mxu0
      %v2762 = vadd.f32 %v2627, %v2761
      %v2763 = vpop.f32.mrf.mxu0
      %2764 = vmatprep.mubr.bf16.mxu0 0
      %2765 = vmatmul.mubr.bf16.gmra.mxu0 %v2597
      %v2766 = vpop.f32.mrf.mxu0
      %v2767 = vadd.f32 %v2627, %v2766
      %v2768 = vpop.f32.mrf.mxu0
      %v2769 = vpop.f32.mrf.mxu0
      %v2770 = vadd.f32 %v2627, %v2769
      %v2771 = vpop.f32.mrf.mxu0
      %2772 = vmatprep.mubr.bf16.mxu0 0
      %2773 = vmatmul.mubr.bf16.gmra.mxu0 %v2598
      %v2774 = vpop.f32.mrf.mxu0
      %v2775 = vadd.f32 %v2627, %v2774
      %v2776 = vpop.f32.mrf.mxu0
      %v2777 = vpop.f32.mrf.mxu0
      %v2778 = vadd.f32 %v2627, %v2777
      %v2779 = vpop.f32.mrf.mxu0
      %2780 = vmatprep.mubr.bf16.mxu0 0
      %2781 = vmatmul.mubr.bf16.gmra.mxu0 %v2599
      %v2782 = vpop.f32.mrf.mxu0
      %v2783 = vadd.f32 %v2627, %v2782
      %v2784 = vpop.f32.mrf.mxu0
      %v2785 = vpop.f32.mrf.mxu0
      %v2786 = vadd.f32 %v2627, %v2785
      %v2787 = vpop.f32.mrf.mxu0
      %2788 = vmatprep.mubr.bf16.mxu0 0
      %2789 = vmatmul.mubr.bf16.gmra.mxu0 %v2600
      %v2790 = vpop.f32.mrf.mxu0
      %v2791 = vadd.f32 %v2627, %v2790
      %v2792 = vpop.f32.mrf.mxu0
      %v2793 = vpop.f32.mrf.mxu0
      %v2794 = vadd.f32 %v2627, %v2793
      %v2795 = vpop.f32.mrf.mxu0
      %2796 = vmatprep.mubr.bf16.mxu0 0
      %2797 = vmatmul.mubr.bf16.gmra.mxu0 %v2601
      %v2798 = vpop.f32.mrf.mxu0
      %v2799 = vadd.f32 %v2627, %v2798
      %v2800 = vpop.f32.mrf.mxu0
      %v2801 = vpop.f32.mrf.mxu0
      %v2802 = vadd.f32 %v2627, %v2801
      %v2803 = vpop.f32.mrf.mxu0
      %2804 = vmatprep.mubr.bf16.mxu0 0
      %2805 = vmatmul.mubr.bf16.gmra.mxu0 %v2602
      %v2806 = vpop.f32.mrf.mxu0
      %v2807 = vadd.f32 %v2627, %v2806
      %v2808 = vpop.f32.mrf.mxu0
      %v2809 = vpop.f32.mrf.mxu0
      %v2810 = vadd.f32 %v2627, %v2809
      %v2811 = vpop.f32.mrf.mxu0
      %2812 = vmatprep.mubr.bf16.mxu0 0
      %2813 = vmatmul.mubr.bf16.gmra.mxu0 %v2603
      %v2814 = vpop.f32.mrf.mxu0
      %v2815 = vadd.f32 %v2627, %v2814
      %v2816 = vpop.f32.mrf.mxu0
      %v2817 = vpop.f32.mrf.mxu0
      %v2818 = vadd.f32 %v2627, %v2817
      %v2819 = vpop.f32.mrf.mxu0
      %2820 = vmatprep.mubr.bf16.mxu0 0
      %2821 = vmatmul.mubr.bf16.gmra.mxu0 %v2604
      %v2822 = vpop.f32.mrf.mxu0
      %v2823 = vadd.f32 %v2627, %v2822
      %v2824 = vpop.f32.mrf.mxu0
      %v2825 = vpop.f32.mrf.mxu0
      %v2826 = vadd.f32 %v2627, %v2825
      %v2827 = vpop.f32.mrf.mxu0
      %2828 = vmatprep.mubr.bf16.mxu0 0
      %2829 = vmatmul.mubr.bf16.gmra.mxu0 %v2605
      %v2830 = vpop.f32.mrf.mxu0
      %v2831 = vadd.f32 %v2627, %v2830
      %v2832 = vpop.f32.mrf.mxu0
      %v2833 = vpop.f32.mrf.mxu0
      %v2834 = vadd.f32 %v2627, %v2833
      %v2835 = vpop.f32.mrf.mxu0
      %2836 = vdwg.mxu0
      %v2837 = vmax.f32 %v2711, 0.0
      %v2838 = vmax.f32 %v2714, 0.0
      %v2839 = vmax.f32 %v2719, 0.0
      %v2840 = vmax.f32 %v2722, 0.0
      %v2841 = vmax.f32 %v2727, 0.0
      %v2842 = vmax.f32 %v2730, 0.0
      %v2843 = vmax.f32 %v2735, 0.0
      %v2844 = vmax.f32 %v2738, 0.0
      %v2845 = vmax.f32 %v2743, 0.0
      %v2846 = vmax.f32 %v2746, 0.0
      %v2847 = vmax.f32 %v2751, 0.0
      %v2848 = vmax.f32 %v2754, 0.0
      %v2849 = vmax.f32 %v2759, 0.0
      %v2850 = vmax.f32 %v2762, 0.0
      %v2851 = vmax.f32 %v2767, 0.0
      %v2852 = vmax.f32 %v2770, 0.0
      %v2853 = vmax.f32 %v2775, 0.0
      %v2854 = vmax.f32 %v2778, 0.0
      %v2855 = vmax.f32 %v2783, 0.0
      %v2856 = vmax.f32 %v2786, 0.0
      %v2857 = vmax.f32 %v2791, 0.0
      %v2858 = vmax.f32 %v2794, 0.0
      %v2859 = vmax.f32 %v2799, 0.0
      %v2860 = vmax.f32 %v2802, 0.0
      %v2861 = vmax.f32 %v2807, 0.0
      %v2862 = vmax.f32 %v2810, 0.0
      %v2863 = vmax.f32 %v2815, 0.0
      %v2864 = vmax.f32 %v2818, 0.0
      %v2865 = vmax.f32 %v2823, 0.0
      %v2866 = vmax.f32 %v2826, 0.0
      %v2867 = vmax.f32 %v2831, 0.0
      %v2868 = vmax.f32 %v2834, 0.0
      %v2869 = vpack.c.bf16 %v2838, %v2837
      %v2870 = vpack.c.bf16 %v2840, %v2839
      %v2871 = vpack.c.bf16 %v2842, %v2841
      %v2872 = vpack.c.bf16 %v2844, %v2843
      %v2873 = vpack.c.bf16 %v2846, %v2845
      %v2874 = vpack.c.bf16 %v2848, %v2847
      %v2875 = vpack.c.bf16 %v2850, %v2849
      %v2876 = vpack.c.bf16 %v2852, %v2851
      %v2877 = vpack.c.bf16 %v2854, %v2853
      %v2878 = vpack.c.bf16 %v2856, %v2855
      %v2879 = vpack.c.bf16 %v2858, %v2857
      %v2880 = vpack.c.bf16 %v2860, %v2859
      %v2881 = vpack.c.bf16 %v2862, %v2861
      %v2882 = vpack.c.bf16 %v2864, %v2863
      %v2883 = vpack.c.bf16 %v2866, %v2865
      %v2884 = vpack.c.bf16 %v2868, %v2867
      %s2885 = scalar_lea.vmem %s5, 128
      %v2886 = vld [vmem:[%s2885] sm:$0xf]
      %v2887 = vld [vmem:[%s2885 + $0x4] sm:$0xf]
      %v2888 = vld [vmem:[%s2885 + $0x8] sm:$0xf]
      %v2889 = vld [vmem:[%s2885 + $0xc] sm:$0xf]
      %v2890 = vld [vmem:[%s2885 + $0x10] sm:$0xf]
      %v2891 = vld [vmem:[%s2885 + $0x14] sm:$0xf]
      %v2892 = vld [vmem:[%s2885 + $0x18] sm:$0xf]
      %v2893 = vld [vmem:[%s2885 + $0x1c] sm:$0xf]
      %v2894 = vld [vmem:[%s2885 + $0x20] sm:$0xf]
      %v2895 = vld [vmem:[%s2885 + $0x24] sm:$0xf]
      %v2896 = vld [vmem:[%s2885 + $0x28] sm:$0xf]
      %v2897 = vld [vmem:[%s2885 + $0x2c] sm:$0xf]
      %v2898 = vld [vmem:[%s2885 + $0x30] sm:$0xf]
      %v2899 = vld [vmem:[%s2885 + $0x34] sm:$0xf]
      %v2900 = vld [vmem:[%s2885 + $0x38] sm:$0xf]
      %v2901 = vld [vmem:[%s2885 + $0x3c] sm:$0xf]
      %v2902 = vld [vmem:[%s6 + $0x2] sm:$0x1]
      %v2903 = vlaneseq
      %v2904 = vshrl.u32 %v2903, 7
      %v2905 = vsub.s32 0, %v2904
      %v2906 = vrot.slane %v2902, %v2905
      %v2923 = vunpack.c.l.b16 %v2886
      %v2924 = vunpack.c.l.b16 %v2887
      %v2925 = vunpack.c.l.b16 %v2888
      %v2926 = vunpack.c.l.b16 %v2889
      %v2927 = vunpack.c.l.b16 %v2890
      %v2928 = vunpack.c.l.b16 %v2891
      %v2929 = vunpack.c.l.b16 %v2892
      %v2930 = vunpack.c.l.b16 %v2893
      %v2931 = vunpack.c.l.b16 %v2894
      %v2932 = vunpack.c.l.b16 %v2895
      %v2933 = vunpack.c.l.b16 %v2896
      %v2934 = vunpack.c.l.b16 %v2897
      %v2935 = vunpack.c.l.b16 %v2898
      %v2936 = vunpack.c.l.b16 %v2899
      %v2937 = vunpack.c.l.b16 %v2900
      %v2938 = vunpack.c.l.b16 %v2901
      %v2939 = vpack.c.b16 %v2924, %v2923
      %v2940 = vpack.c.b16 %v2926, %v2925
      %v2941 = vpack.c.b16 %v2928, %v2927
      %v2942 = vpack.c.b16 %v2930, %v2929
      %v2943 = vpack.c.b16 %v2932, %v2931
      %v2944 = vpack.c.b16 %v2934, %v2933
      %v2945 = vpack.c.b16 %v2936, %v2935
      %v2946 = vpack.c.b16 %v2938, %v2937
      %2955 = vmatprep.subr.bf16.mxu0 0
      %2956 = vmatpush1.bf16.msra.mxu0 %v2946
      %2957 = vmatprep.subr.bf16.mxu0 0
      %2958 = vmatpush1.bf16.msra.mxu0 %v2945
      %2959 = vmatprep.subr.bf16.mxu0 0
      %2960 = vmatpush1.bf16.msra.mxu0 %v2944
      %2961 = vmatprep.subr.bf16.mxu0 0
      %2962 = vmatpush1.bf16.msra.mxu0 %v2943
      %2963 = vmatprep.subr.bf16.mxu0 0
      %2964 = vmatpush1.bf16.msra.mxu0 %v2942
      %2965 = vmatprep.subr.bf16.mxu0 0
      %2966 = vmatpush1.bf16.msra.mxu0 %v2941
      %2967 = vmatprep.subr.bf16.mxu0 0
      %2968 = vmatpush1.bf16.msra.mxu0 %v2940
      %2969 = vmatprep.subr.bf16.mxu0 0
      %2970 = vmatpush1.bf16.msra.mxu0 %v2939
      %2971 = vmatprep.subr.bf16.mxu0 0
      %2972 = vmatpush2.bf16.msra.mxu0 0
      %2973 = vmatprep.subr.bf16.mxu0 0
      %2974 = vmatpush2.bf16.msra.mxu0 0
      %2975 = vmatprep.subr.bf16.mxu0 0
      %2976 = vmatpush2.bf16.msra.mxu0 0
      %2977 = vmatprep.subr.bf16.mxu0 0
      %2978 = vmatpush2.bf16.msra.mxu0 0
      %2979 = vmatprep.subr.bf16.mxu0 0
      %2980 = vmatpush2.bf16.msra.mxu0 0
      %2981 = vmatprep.subr.bf16.mxu0 0
      %2982 = vmatpush2.bf16.msra.mxu0 0
      %2983 = vmatprep.subr.bf16.mxu0 0
      %2984 = vmatpush2.bf16.msra.mxu0 0
      %2985 = vmatprep.subr.bf16.mxu0 0
      %2986 = vmatpush2.bf16.msra.mxu0 0
      %2987 = vmatprep.mubr.bf16.mxu0 0
      %2988 = vmatmul.mubr.bf16.gmra.mxu0 %v2869
      %v2989 = vpop.f32.mrf.mxu0
      %v2990 = vadd.f32 %v2906, %v2989
      %v2991 = vpop.f32.mrf.mxu0
      %v2992 = vpop.f32.mrf.mxu0
      %v2993 = vadd.f32 %v2906, %v2992
      %v2994 = vpop.f32.mrf.mxu0
      %2995 = vmatprep.mubr.bf16.mxu0 0
      %2996 = vmatmul.mubr.bf16.gmra.mxu0 %v2870
      %v2997 = vpop.f32.mrf.mxu0
      %v2998 = vadd.f32 %v2906, %v2997
      %v2999 = vpop.f32.mrf.mxu0
      %v3000 = vpop.f32.mrf.mxu0
      %v3001 = vadd.f32 %v2906, %v3000
      %v3002 = vpop.f32.mrf.mxu0
      %3003 = vmatprep.mubr.bf16.mxu0 0
      %3004 = vmatmul.mubr.bf16.gmra.mxu0 %v2871
      %v3005 = vpop.f32.mrf.mxu0
      %v3006 = vadd.f32 %v2906, %v3005
      %v3007 = vpop.f32.mrf.mxu0
      %v3008 = vpop.f32.mrf.mxu0
      %v3009 = vadd.f32 %v2906, %v3008
      %v3010 = vpop.f32.mrf.mxu0
      %3011 = vmatprep.mubr.bf16.mxu0 0
      %3012 = vmatmul.mubr.bf16.gmra.mxu0 %v2872
      %v3013 = vpop.f32.mrf.mxu0
      %v3014 = vadd.f32 %v2906, %v3013
      %v3015 = vpop.f32.mrf.mxu0
      %v3016 = vpop.f32.mrf.mxu0
      %v3017 = vadd.f32 %v2906, %v3016
      %v3018 = vpop.f32.mrf.mxu0
      %3019 = vmatprep.mubr.bf16.mxu0 0
      %3020 = vmatmul.mubr.bf16.gmra.mxu0 %v2873
      %v3021 = vpop.f32.mrf.mxu0
      %v3022 = vadd.f32 %v2906, %v3021
      %v3023 = vpop.f32.mrf.mxu0
      %v3024 = vpop.f32.mrf.mxu0
      %v3025 = vadd.f32 %v2906, %v3024
      %v3026 = vpop.f32.mrf.mxu0
      %3027 = vmatprep.mubr.bf16.mxu0 0
      %3028 = vmatmul.mubr.bf16.gmra.mxu0 %v2874
      %v3029 = vpop.f32.mrf.mxu0
      %v3030 = vadd.f32 %v2906, %v3029
      %v3031 = vpop.f32.mrf.mxu0
      %v3032 = vpop.f32.mrf.mxu0
      %v3033 = vadd.f32 %v2906, %v3032
      %v3034 = vpop.f32.mrf.mxu0
      %3035 = vmatprep.mubr.bf16.mxu0 0
      %3036 = vmatmul.mubr.bf16.gmra.mxu0 %v2875
      %v3037 = vpop.f32.mrf.mxu0
      %v3038 = vadd.f32 %v2906, %v3037
      %v3039 = vpop.f32.mrf.mxu0
      %v3040 = vpop.f32.mrf.mxu0
      %v3041 = vadd.f32 %v2906, %v3040
      %v3042 = vpop.f32.mrf.mxu0
      %3043 = vmatprep.mubr.bf16.mxu0 0
      %3044 = vmatmul.mubr.bf16.gmra.mxu0 %v2876
      %v3045 = vpop.f32.mrf.mxu0
      %v3046 = vadd.f32 %v2906, %v3045
      %v3047 = vpop.f32.mrf.mxu0
      %v3048 = vpop.f32.mrf.mxu0
      %v3049 = vadd.f32 %v2906, %v3048
      %v3050 = vpop.f32.mrf.mxu0
      %3051 = vmatprep.mubr.bf16.mxu0 0
      %3052 = vmatmul.mubr.bf16.gmra.mxu0 %v2877
      %v3053 = vpop.f32.mrf.mxu0
      %v3054 = vadd.f32 %v2906, %v3053
      %v3055 = vpop.f32.mrf.mxu0
      %v3056 = vpop.f32.mrf.mxu0
      %v3057 = vadd.f32 %v2906, %v3056
      %v3058 = vpop.f32.mrf.mxu0
      %3059 = vmatprep.mubr.bf16.mxu0 0
      %3060 = vmatmul.mubr.bf16.gmra.mxu0 %v2878
      %v3061 = vpop.f32.mrf.mxu0
      %v3062 = vadd.f32 %v2906, %v3061
      %v3063 = vpop.f32.mrf.mxu0
      %v3064 = vpop.f32.mrf.mxu0
      %v3065 = vadd.f32 %v2906, %v3064
      %v3066 = vpop.f32.mrf.mxu0
      %3067 = vmatprep.mubr.bf16.mxu0 0
      %3068 = vmatmul.mubr.bf16.gmra.mxu0 %v2879
      %v3069 = vpop.f32.mrf.mxu0
      %v3070 = vadd.f32 %v2906, %v3069
      %v3071 = vpop.f32.mrf.mxu0
      %v3072 = vpop.f32.mrf.mxu0
      %v3073 = vadd.f32 %v2906, %v3072
      %v3074 = vpop.f32.mrf.mxu0
      %3075 = vmatprep.mubr.bf16.mxu0 0
      %3076 = vmatmul.mubr.bf16.gmra.mxu0 %v2880
      %v3077 = vpop.f32.mrf.mxu0
      %v3078 = vadd.f32 %v2906, %v3077
      %v3079 = vpop.f32.mrf.mxu0
      %v3080 = vpop.f32.mrf.mxu0
      %v3081 = vadd.f32 %v2906, %v3080
      %v3082 = vpop.f32.mrf.mxu0
      %3083 = vmatprep.mubr.bf16.mxu0 0
      %3084 = vmatmul.mubr.bf16.gmra.mxu0 %v2881
      %v3085 = vpop.f32.mrf.mxu0
      %v3086 = vadd.f32 %v2906, %v3085
      %v3087 = vpop.f32.mrf.mxu0
      %v3088 = vpop.f32.mrf.mxu0
      %v3089 = vadd.f32 %v2906, %v3088
      %v3090 = vpop.f32.mrf.mxu0
      %3091 = vmatprep.mubr.bf16.mxu0 0
      %3092 = vmatmul.mubr.bf16.gmra.mxu0 %v2882
      %v3093 = vpop.f32.mrf.mxu0
      %v3094 = vadd.f32 %v2906, %v3093
      %v3095 = vpop.f32.mrf.mxu0
      %v3096 = vpop.f32.mrf.mxu0
      %v3097 = vadd.f32 %v2906, %v3096
      %v3098 = vpop.f32.mrf.mxu0
      %3099 = vmatprep.mubr.bf16.mxu0 0
      %3100 = vmatmul.mubr.bf16.gmra.mxu0 %v2883
      %v3101 = vpop.f32.mrf.mxu0
      %v3102 = vadd.f32 %v2906, %v3101
      %v3103 = vpop.f32.mrf.mxu0
      %v3104 = vpop.f32.mrf.mxu0
      %v3105 = vadd.f32 %v2906, %v3104
      %v3106 = vpop.f32.mrf.mxu0
      %3107 = vmatprep.mubr.bf16.mxu0 0
      %3108 = vmatmul.mubr.bf16.gmra.mxu0 %v2884
      %v3109 = vpop.f32.mrf.mxu0
      %v3110 = vadd.f32 %v2906, %v3109
      %v3111 = vpop.f32.mrf.mxu0
      %v3112 = vpop.f32.mrf.mxu0
      %v3113 = vadd.f32 %v2906, %v3112
      %v3114 = vpop.f32.mrf.mxu0
      %3115 = vdwg.mxu0
      %v3116 = vadd.f32 %v2526, %v2990
      %v3117 = vadd.f32 %v2527, %v2993
      %v3118 = vadd.f32 %v2528, %v2998
      %v3119 = vadd.f32 %v2529, %v3001
      %v3120 = vadd.f32 %v2530, %v3006
      %v3121 = vadd.f32 %v2531, %v3009
      %v3122 = vadd.f32 %v2532, %v3014
      %v3123 = vadd.f32 %v2533, %v3017
      %v3124 = vadd.f32 %v2534, %v3022
      %v3125 = vadd.f32 %v2535, %v3025
      %v3126 = vadd.f32 %v2536, %v3030
      %v3127 = vadd.f32 %v2537, %v3033
      %v3128 = vadd.f32 %v2538, %v3038
      %v3129 = vadd.f32 %v2539, %v3041
      %v3130 = vadd.f32 %v2540, %v3046
      %v3131 = vadd.f32 %v2541, %v3049
      %v3132 = vadd.f32 %v2542, %v3054
      %v3133 = vadd.f32 %v2543, %v3057
      %v3134 = vadd.f32 %v2544, %v3062
      %v3135 = vadd.f32 %v2545, %v3065
      %v3136 = vadd.f32 %v2546, %v3070
      %v3137 = vadd.f32 %v2547, %v3073
      %v3138 = vadd.f32 %v2548, %v3078
      %v3139 = vadd.f32 %v2549, %v3081
      %v3140 = vadd.f32 %v2550, %v3086
      %v3141 = vadd.f32 %v2551, %v3089
      %v3142 = vadd.f32 %v2552, %v3094
      %v3143 = vadd.f32 %v2553, %v3097
      %v3144 = vadd.f32 %v2554, %v3102
      %v3145 = vadd.f32 %v2555, %v3105
      %v3146 = vadd.f32 %v2556, %v3110
      %v3147 = vadd.f32 %v2557, %v3113
      %v3148 = vadd.f32 %v3116, %v1126
      %v3149 = vadd.f32 %v3117, %v1130
      %v3150 = vadd.f32 %v3118, %v1136
      %v3151 = vadd.f32 %v3119, %v1140
      %v3152 = vadd.f32 %v3120, %v1146
      %v3153 = vadd.f32 %v3121, %v1150
      %v3154 = vadd.f32 %v3122, %v1156
      %v3155 = vadd.f32 %v3123, %v1160
      %v3156 = vadd.f32 %v3124, %v1166
      %v3157 = vadd.f32 %v3125, %v1170
      %v3158 = vadd.f32 %v3126, %v1176
      %v3159 = vadd.f32 %v3127, %v1180
      %v3160 = vadd.f32 %v3128, %v1186
      %v3161 = vadd.f32 %v3129, %v1190
      %v3162 = vadd.f32 %v3130, %v1196
      %v3163 = vadd.f32 %v3131, %v1200
      %v3164 = vadd.f32 %v3132, %v1206
      %v3165 = vadd.f32 %v3133, %v1210
      %v3166 = vadd.f32 %v3134, %v1216
      %v3167 = vadd.f32 %v3135, %v1220
      %v3168 = vadd.f32 %v3136, %v1226
      %v3169 = vadd.f32 %v3137, %v1230
      %v3170 = vadd.f32 %v3138, %v1236
      %v3171 = vadd.f32 %v3139, %v1240
      %v3172 = vadd.f32 %v3140, %v1246
      %v3173 = vadd.f32 %v3141, %v1250
      %v3174 = vadd.f32 %v3142, %v1256
      %v3175 = vadd.f32 %v3143, %v1260
      %v3176 = vadd.f32 %v3144, %v1266
      %v3177 = vadd.f32 %v3145, %v1270
      %v3178 = vadd.f32 %v3146, %v1276
      %v3179 = vadd.f32 %v3147, %v1280
      %v3180 = vmax.f32 %v3148, 0.0
      %v3181 = vmax.f32 %v3149, 0.0
      %v3182 = vmax.f32 %v3150, 0.0
      %v3183 = vmax.f32 %v3151, 0.0
      %v3184 = vmax.f32 %v3152, 0.0
      %v3185 = vmax.f32 %v3153, 0.0
      %v3186 = vmax.f32 %v3154, 0.0
      %v3187 = vmax.f32 %v3155, 0.0
      %v3188 = vmax.f32 %v3156, 0.0
      %v3189 = vmax.f32 %v3157, 0.0
      %v3190 = vmax.f32 %v3158, 0.0
      %v3191 = vmax.f32 %v3159, 0.0
      %v3192 = vmax.f32 %v3160, 0.0
      %v3193 = vmax.f32 %v3161, 0.0
      %v3194 = vmax.f32 %v3162, 0.0
      %v3195 = vmax.f32 %v3163, 0.0
      %v3196 = vmax.f32 %v3164, 0.0
      %v3197 = vmax.f32 %v3165, 0.0
      %v3198 = vmax.f32 %v3166, 0.0
      %v3199 = vmax.f32 %v3167, 0.0
      %v3200 = vmax.f32 %v3168, 0.0
      %v3201 = vmax.f32 %v3169, 0.0
      %v3202 = vmax.f32 %v3170, 0.0
      %v3203 = vmax.f32 %v3171, 0.0
      %v3204 = vmax.f32 %v3172, 0.0
      %v3205 = vmax.f32 %v3173, 0.0
      %v3206 = vmax.f32 %v3174, 0.0
      %v3207 = vmax.f32 %v3175, 0.0
      %v3208 = vmax.f32 %v3176, 0.0
      %v3209 = vmax.f32 %v3177, 0.0
      %v3210 = vmax.f32 %v3178, 0.0
      %v3211 = vmax.f32 %v3179, 0.0
      %v3212 = vpack.c.bf16 %v3181, %v3180
      %v3213 = vpack.c.bf16 %v3183, %v3182
      %v3214 = vpack.c.bf16 %v3185, %v3184
      %v3215 = vpack.c.bf16 %v3187, %v3186
      %v3216 = vpack.c.bf16 %v3189, %v3188
      %v3217 = vpack.c.bf16 %v3191, %v3190
      %v3218 = vpack.c.bf16 %v3193, %v3192
      %v3219 = vpack.c.bf16 %v3195, %v3194
      %v3220 = vpack.c.bf16 %v3197, %v3196
      %v3221 = vpack.c.bf16 %v3199, %v3198
      %v3222 = vpack.c.bf16 %v3201, %v3200
      %v3223 = vpack.c.bf16 %v3203, %v3202
      %v3224 = vpack.c.bf16 %v3205, %v3204
      %v3225 = vpack.c.bf16 %v3207, %v3206
      %v3226 = vpack.c.bf16 %v3209, %v3208
      %v3227 = vpack.c.bf16 %v3211, %v3210
      %s3228 = scalar_lea.vmem %s3, 192
      %v3229 = vld [vmem:[%s3228] sm:$0xf]
      %v3230 = vld [vmem:[%s3228 + $0x4] sm:$0xf]
      %v3231 = vld [vmem:[%s3228 + $0x8] sm:$0xf]
      %v3232 = vld [vmem:[%s3228 + $0xc] sm:$0xf]
      %v3233 = vld [vmem:[%s3228 + $0x10] sm:$0xf]
      %v3234 = vld [vmem:[%s3228 + $0x14] sm:$0xf]
      %v3235 = vld [vmem:[%s3228 + $0x18] sm:$0xf]
      %v3236 = vld [vmem:[%s3228 + $0x1c] sm:$0xf]
      %v3237 = vld [vmem:[%s3228 + $0x20] sm:$0xf]
      %v3238 = vld [vmem:[%s3228 + $0x24] sm:$0xf]
      %v3239 = vld [vmem:[%s3228 + $0x28] sm:$0xf]
      %v3240 = vld [vmem:[%s3228 + $0x2c] sm:$0xf]
      %v3241 = vld [vmem:[%s3228 + $0x30] sm:$0xf]
      %v3242 = vld [vmem:[%s3228 + $0x34] sm:$0xf]
      %v3243 = vld [vmem:[%s3228 + $0x38] sm:$0xf]
      %v3244 = vld [vmem:[%s3228 + $0x3c] sm:$0xf]
      %v3245 = vld [vmem:[%s4 + $0x3] sm:$0x1]
      %v3246 = vlaneseq
      %v3247 = vshrl.u32 %v3246, 7
      %v3248 = vsub.s32 0, %v3247
      %v3249 = vrot.slane %v3245, %v3248
      %v3266 = vunpack.c.l.b16 %v3229
      %v3267 = vunpack.c.l.b16 %v3230
      %v3268 = vunpack.c.l.b16 %v3231
      %v3269 = vunpack.c.l.b16 %v3232
      %v3270 = vunpack.c.l.b16 %v3233
      %v3271 = vunpack.c.l.b16 %v3234
      %v3272 = vunpack.c.l.b16 %v3235
      %v3273 = vunpack.c.l.b16 %v3236
      %v3274 = vunpack.c.l.b16 %v3237
      %v3275 = vunpack.c.l.b16 %v3238
      %v3276 = vunpack.c.l.b16 %v3239
      %v3277 = vunpack.c.l.b16 %v3240
      %v3278 = vunpack.c.l.b16 %v3241
      %v3279 = vunpack.c.l.b16 %v3242
      %v3280 = vunpack.c.l.b16 %v3243
      %v3281 = vunpack.c.l.b16 %v3244
      %v3282 = vpack.c.b16 %v3267, %v3266
      %v3283 = vpack.c.b16 %v3269, %v3268
      %v3284 = vpack.c.b16 %v3271, %v3270
      %v3285 = vpack.c.b16 %v3273, %v3272
      %v3286 = vpack.c.b16 %v3275, %v3274
      %v3287 = vpack.c.b16 %v3277, %v3276
      %v3288 = vpack.c.b16 %v3279, %v3278
      %v3289 = vpack.c.b16 %v3281, %v3280
      %3298 = vmatprep.subr.bf16.mxu0 0
      %3299 = vmatpush1.bf16.msra.mxu0 %v3289
      %3300 = vmatprep.subr.bf16.mxu0 0
      %3301 = vmatpush1.bf16.msra.mxu0 %v3288
      %3302 = vmatprep.subr.bf16.mxu0 0
      %3303 = vmatpush1.bf16.msra.mxu0 %v3287
      %3304 = vmatprep.subr.bf16.mxu0 0
      %3305 = vmatpush1.bf16.msra.mxu0 %v3286
      %3306 = vmatprep.subr.bf16.mxu0 0
      %3307 = vmatpush1.bf16.msra.mxu0 %v3285
      %3308 = vmatprep.subr.bf16.mxu0 0
      %3309 = vmatpush1.bf16.msra.mxu0 %v3284
      %3310 = vmatprep.subr.bf16.mxu0 0
      %3311 = vmatpush1.bf16.msra.mxu0 %v3283
      %3312 = vmatprep.subr.bf16.mxu0 0
      %3313 = vmatpush1.bf16.msra.mxu0 %v3282
      %3314 = vmatprep.subr.bf16.mxu0 0
      %3315 = vmatpush2.bf16.msra.mxu0 0
      %3316 = vmatprep.subr.bf16.mxu0 0
      %3317 = vmatpush2.bf16.msra.mxu0 0
      %3318 = vmatprep.subr.bf16.mxu0 0
      %3319 = vmatpush2.bf16.msra.mxu0 0
      %3320 = vmatprep.subr.bf16.mxu0 0
      %3321 = vmatpush2.bf16.msra.mxu0 0
      %3322 = vmatprep.subr.bf16.mxu0 0
      %3323 = vmatpush2.bf16.msra.mxu0 0
      %3324 = vmatprep.subr.bf16.mxu0 0
      %3325 = vmatpush2.bf16.msra.mxu0 0
      %3326 = vmatprep.subr.bf16.mxu0 0
      %3327 = vmatpush2.bf16.msra.mxu0 0
      %3328 = vmatprep.subr.bf16.mxu0 0
      %3329 = vmatpush2.bf16.msra.mxu0 0
      %3330 = vmatprep.mubr.bf16.mxu0 0
      %3331 = vmatmul.mubr.bf16.gmra.mxu0 %v3212
      %v3332 = vpop.f32.mrf.mxu0
      %v3333 = vadd.f32 %v3249, %v3332
      %v3334 = vpop.f32.mrf.mxu0
      %v3335 = vpop.f32.mrf.mxu0
      %v3336 = vadd.f32 %v3249, %v3335
      %v3337 = vpop.f32.mrf.mxu0
      %3338 = vmatprep.mubr.bf16.mxu0 0
      %3339 = vmatmul.mubr.bf16.gmra.mxu0 %v3213
      %v3340 = vpop.f32.mrf.mxu0
      %v3341 = vadd.f32 %v3249, %v3340
      %v3342 = vpop.f32.mrf.mxu0
      %v3343 = vpop.f32.mrf.mxu0
      %v3344 = vadd.f32 %v3249, %v3343
      %v3345 = vpop.f32.mrf.mxu0
      %3346 = vmatprep.mubr.bf16.mxu0 0
      %3347 = vmatmul.mubr.bf16.gmra.mxu0 %v3214
      %v3348 = vpop.f32.mrf.mxu0
      %v3349 = vadd.f32 %v3249, %v3348
      %v3350 = vpop.f32.mrf.mxu0
      %v3351 = vpop.f32.mrf.mxu0
      %v3352 = vadd.f32 %v3249, %v3351
      %v3353 = vpop.f32.mrf.mxu0
      %3354 = vmatprep.mubr.bf16.mxu0 0
      %3355 = vmatmul.mubr.bf16.gmra.mxu0 %v3215
      %v3356 = vpop.f32.mrf.mxu0
      %v3357 = vadd.f32 %v3249, %v3356
      %v3358 = vpop.f32.mrf.mxu0
      %v3359 = vpop.f32.mrf.mxu0
      %v3360 = vadd.f32 %v3249, %v3359
      %v3361 = vpop.f32.mrf.mxu0
      %3362 = vmatprep.mubr.bf16.mxu0 0
      %3363 = vmatmul.mubr.bf16.gmra.mxu0 %v3216
      %v3364 = vpop.f32.mrf.mxu0
      %v3365 = vadd.f32 %v3249, %v3364
      %v3366 = vpop.f32.mrf.mxu0
      %v3367 = vpop.f32.mrf.mxu0
      %v3368 = vadd.f32 %v3249, %v3367
      %v3369 = vpop.f32.mrf.mxu0
      %3370 = vmatprep.mubr.bf16.mxu0 0
      %3371 = vmatmul.mubr.bf16.gmra.mxu0 %v3217
      %v3372 = vpop.f32.mrf.mxu0
      %v3373 = vadd.f32 %v3249, %v3372
      %v3374 = vpop.f32.mrf.mxu0
      %v3375 = vpop.f32.mrf.mxu0
      %v3376 = vadd.f32 %v3249, %v3375
      %v3377 = vpop.f32.mrf.mxu0
      %3378 = vmatprep.mubr.bf16.mxu0 0
      %3379 = vmatmul.mubr.bf16.gmra.mxu0 %v3218
      %v3380 = vpop.f32.mrf.mxu0
      %v3381 = vadd.f32 %v3249, %v3380
      %v3382 = vpop.f32.mrf.mxu0
      %v3383 = vpop.f32.mrf.mxu0
      %v3384 = vadd.f32 %v3249, %v3383
      %v3385 = vpop.f32.mrf.mxu0
      %3386 = vmatprep.mubr.bf16.mxu0 0
      %3387 = vmatmul.mubr.bf16.gmra.mxu0 %v3219
      %v3388 = vpop.f32.mrf.mxu0
      %v3389 = vadd.f32 %v3249, %v3388
      %v3390 = vpop.f32.mrf.mxu0
      %v3391 = vpop.f32.mrf.mxu0
      %v3392 = vadd.f32 %v3249, %v3391
      %v3393 = vpop.f32.mrf.mxu0
      %3394 = vmatprep.mubr.bf16.mxu0 0
      %3395 = vmatmul.mubr.bf16.gmra.mxu0 %v3220
      %v3396 = vpop.f32.mrf.mxu0
      %v3397 = vadd.f32 %v3249, %v3396
      %v3398 = vpop.f32.mrf.mxu0
      %v3399 = vpop.f32.mrf.mxu0
      %v3400 = vadd.f32 %v3249, %v3399
      %v3401 = vpop.f32.mrf.mxu0
      %3402 = vmatprep.mubr.bf16.mxu0 0
      %3403 = vmatmul.mubr.bf16.gmra.mxu0 %v3221
      %v3404 = vpop.f32.mrf.mxu0
      %v3405 = vadd.f32 %v3249, %v3404
      %v3406 = vpop.f32.mrf.mxu0
      %v3407 = vpop.f32.mrf.mxu0
      %v3408 = vadd.f32 %v3249, %v3407
      %v3409 = vpop.f32.mrf.mxu0
      %3410 = vmatprep.mubr.bf16.mxu0 0
      %3411 = vmatmul.mubr.bf16.gmra.mxu0 %v3222
      %v3412 = vpop.f32.mrf.mxu0
      %v3413 = vadd.f32 %v3249, %v3412
      %v3414 = vpop.f32.mrf.mxu0
      %v3415 = vpop.f32.mrf.mxu0
      %v3416 = vadd.f32 %v3249, %v3415
      %v3417 = vpop.f32.mrf.mxu0
      %3418 = vmatprep.mubr.bf16.mxu0 0
      %3419 = vmatmul.mubr.bf16.gmra.mxu0 %v3223
      %v3420 = vpop.f32.mrf.mxu0
      %v3421 = vadd.f32 %v3249, %v3420
      %v3422 = vpop.f32.mrf.mxu0
      %v3423 = vpop.f32.mrf.mxu0
      %v3424 = vadd.f32 %v3249, %v3423
      %v3425 = vpop.f32.mrf.mxu0
      %3426 = vmatprep.mubr.bf16.mxu0 0
      %3427 = vmatmul.mubr.bf16.gmra.mxu0 %v3224
      %v3428 = vpop.f32.mrf.mxu0
      %v3429 = vadd.f32 %v3249, %v3428
      %v3430 = vpop.f32.mrf.mxu0
      %v3431 = vpop.f32.mrf.mxu0
      %v3432 = vadd.f32 %v3249, %v3431
      %v3433 = vpop.f32.mrf.mxu0
      %3434 = vmatprep.mubr.bf16.mxu0 0
      %3435 = vmatmul.mubr.bf16.gmra.mxu0 %v3225
      %v3436 = vpop.f32.mrf.mxu0
      %v3437 = vadd.f32 %v3249, %v3436
      %v3438 = vpop.f32.mrf.mxu0
      %v3439 = vpop.f32.mrf.mxu0
      %v3440 = vadd.f32 %v3249, %v3439
      %v3441 = vpop.f32.mrf.mxu0
      %3442 = vmatprep.mubr.bf16.mxu0 0
      %3443 = vmatmul.mubr.bf16.gmra.mxu0 %v3226
      %v3444 = vpop.f32.mrf.mxu0
      %v3445 = vadd.f32 %v3249, %v3444
      %v3446 = vpop.f32.mrf.mxu0
      %v3447 = vpop.f32.mrf.mxu0
      %v3448 = vadd.f32 %v3249, %v3447
      %v3449 = vpop.f32.mrf.mxu0
      %3450 = vmatprep.mubr.bf16.mxu0 0
      %3451 = vmatmul.mubr.bf16.gmra.mxu0 %v3227
      %v3452 = vpop.f32.mrf.mxu0
      %v3453 = vadd.f32 %v3249, %v3452
      %v3454 = vpop.f32.mrf.mxu0
      %v3455 = vpop.f32.mrf.mxu0
      %v3456 = vadd.f32 %v3249, %v3455
      %v3457 = vpop.f32.mrf.mxu0
      %3458 = vdwg.mxu0
      %v3459 = vmax.f32 %v3333, 0.0
      %v3460 = vmax.f32 %v3336, 0.0
      %v3461 = vmax.f32 %v3341, 0.0
      %v3462 = vmax.f32 %v3344, 0.0
      %v3463 = vmax.f32 %v3349, 0.0
      %v3464 = vmax.f32 %v3352, 0.0
      %v3465 = vmax.f32 %v3357, 0.0
      %v3466 = vmax.f32 %v3360, 0.0
      %v3467 = vmax.f32 %v3365, 0.0
      %v3468 = vmax.f32 %v3368, 0.0
      %v3469 = vmax.f32 %v3373, 0.0
      %v3470 = vmax.f32 %v3376, 0.0
      %v3471 = vmax.f32 %v3381, 0.0
      %v3472 = vmax.f32 %v3384, 0.0
      %v3473 = vmax.f32 %v3389, 0.0
      %v3474 = vmax.f32 %v3392, 0.0
      %v3475 = vmax.f32 %v3397, 0.0
      %v3476 = vmax.f32 %v3400, 0.0
      %v3477 = vmax.f32 %v3405, 0.0
      %v3478 = vmax.f32 %v3408, 0.0
      %v3479 = vmax.f32 %v3413, 0.0
      %v3480 = vmax.f32 %v3416, 0.0
      %v3481 = vmax.f32 %v3421, 0.0
      %v3482 = vmax.f32 %v3424, 0.0
      %v3483 = vmax.f32 %v3429, 0.0
      %v3484 = vmax.f32 %v3432, 0.0
      %v3485 = vmax.f32 %v3437, 0.0
      %v3486 = vmax.f32 %v3440, 0.0
      %v3487 = vmax.f32 %v3445, 0.0
      %v3488 = vmax.f32 %v3448, 0.0
      %v3489 = vmax.f32 %v3453, 0.0
      %v3490 = vmax.f32 %v3456, 0.0
      %v3491 = vpack.c.bf16 %v3460, %v3459
      %v3492 = vpack.c.bf16 %v3462, %v3461
      %v3493 = vpack.c.bf16 %v3464, %v3463
      %v3494 = vpack.c.bf16 %v3466, %v3465
      %v3495 = vpack.c.bf16 %v3468, %v3467
      %v3496 = vpack.c.bf16 %v3470, %v3469
      %v3497 = vpack.c.bf16 %v3472, %v3471
      %v3498 = vpack.c.bf16 %v3474, %v3473
      %v3499 = vpack.c.bf16 %v3476, %v3475
      %v3500 = vpack.c.bf16 %v3478, %v3477
      %v3501 = vpack.c.bf16 %v3480, %v3479
      %v3502 = vpack.c.bf16 %v3482, %v3481
      %v3503 = vpack.c.bf16 %v3484, %v3483
      %v3504 = vpack.c.bf16 %v3486, %v3485
      %v3505 = vpack.c.bf16 %v3488, %v3487
      %v3506 = vpack.c.bf16 %v3490, %v3489
      %s3507 = scalar_lea.vmem %s5, 192
      %v3508 = vld [vmem:[%s3507] sm:$0xf]
      %v3509 = vld [vmem:[%s3507 + $0x4] sm:$0xf]
      %v3510 = vld [vmem:[%s3507 + $0x8] sm:$0xf]
      %v3511 = vld [vmem:[%s3507 + $0xc] sm:$0xf]
      %v3512 = vld [vmem:[%s3507 + $0x10] sm:$0xf]
      %v3513 = vld [vmem:[%s3507 + $0x14] sm:$0xf]
      %v3514 = vld [vmem:[%s3507 + $0x18] sm:$0xf]
      %v3515 = vld [vmem:[%s3507 + $0x1c] sm:$0xf]
      %v3516 = vld [vmem:[%s3507 + $0x20] sm:$0xf]
      %v3517 = vld [vmem:[%s3507 + $0x24] sm:$0xf]
      %v3518 = vld [vmem:[%s3507 + $0x28] sm:$0xf]
      %v3519 = vld [vmem:[%s3507 + $0x2c] sm:$0xf]
      %v3520 = vld [vmem:[%s3507 + $0x30] sm:$0xf]
      %v3521 = vld [vmem:[%s3507 + $0x34] sm:$0xf]
      %v3522 = vld [vmem:[%s3507 + $0x38] sm:$0xf]
      %v3523 = vld [vmem:[%s3507 + $0x3c] sm:$0xf]
      %v3524 = vld [vmem:[%s6 + $0x3] sm:$0x1]
      %v3525 = vlaneseq
      %v3526 = vshrl.u32 %v3525, 7
      %v3527 = vsub.s32 0, %v3526
      %v3528 = vrot.slane %v3524, %v3527
      %v3545 = vunpack.c.l.b16 %v3508
      %v3546 = vunpack.c.l.b16 %v3509
      %v3547 = vunpack.c.l.b16 %v3510
      %v3548 = vunpack.c.l.b16 %v3511
      %v3549 = vunpack.c.l.b16 %v3512
      %v3550 = vunpack.c.l.b16 %v3513
      %v3551 = vunpack.c.l.b16 %v3514
      %v3552 = vunpack.c.l.b16 %v3515
      %v3553 = vunpack.c.l.b16 %v3516
      %v3554 = vunpack.c.l.b16 %v3517
      %v3555 = vunpack.c.l.b16 %v3518
      %v3556 = vunpack.c.l.b16 %v3519
      %v3557 = vunpack.c.l.b16 %v3520
      %v3558 = vunpack.c.l.b16 %v3521
      %v3559 = vunpack.c.l.b16 %v3522
      %v3560 = vunpack.c.l.b16 %v3523
      %v3561 = vpack.c.b16 %v3546, %v3545
      %v3562 = vpack.c.b16 %v3548, %v3547
      %v3563 = vpack.c.b16 %v3550, %v3549
      %v3564 = vpack.c.b16 %v3552, %v3551
      %v3565 = vpack.c.b16 %v3554, %v3553
      %v3566 = vpack.c.b16 %v3556, %v3555
      %v3567 = vpack.c.b16 %v3558, %v3557
      %v3568 = vpack.c.b16 %v3560, %v3559
      %3577 = vmatprep.subr.bf16.mxu0 0
      %3578 = vmatpush1.bf16.msra.mxu0 %v3568
      %3579 = vmatprep.subr.bf16.mxu0 0
      %3580 = vmatpush1.bf16.msra.mxu0 %v3567
      %3581 = vmatprep.subr.bf16.mxu0 0
      %3582 = vmatpush1.bf16.msra.mxu0 %v3566
      %3583 = vmatprep.subr.bf16.mxu0 0
      %3584 = vmatpush1.bf16.msra.mxu0 %v3565
      %3585 = vmatprep.subr.bf16.mxu0 0
      %3586 = vmatpush1.bf16.msra.mxu0 %v3564
      %3587 = vmatprep.subr.bf16.mxu0 0
      %3588 = vmatpush1.bf16.msra.mxu0 %v3563
      %3589 = vmatprep.subr.bf16.mxu0 0
      %3590 = vmatpush1.bf16.msra.mxu0 %v3562
      %3591 = vmatprep.subr.bf16.mxu0 0
      %3592 = vmatpush1.bf16.msra.mxu0 %v3561
      %3593 = vmatprep.subr.bf16.mxu0 0
      %3594 = vmatpush2.bf16.msra.mxu0 0
      %3595 = vmatprep.subr.bf16.mxu0 0
      %3596 = vmatpush2.bf16.msra.mxu0 0
      %3597 = vmatprep.subr.bf16.mxu0 0
      %3598 = vmatpush2.bf16.msra.mxu0 0
      %3599 = vmatprep.subr.bf16.mxu0 0
      %3600 = vmatpush2.bf16.msra.mxu0 0
      %3601 = vmatprep.subr.bf16.mxu0 0
      %3602 = vmatpush2.bf16.msra.mxu0 0
      %3603 = vmatprep.subr.bf16.mxu0 0
      %3604 = vmatpush2.bf16.msra.mxu0 0
      %3605 = vmatprep.subr.bf16.mxu0 0
      %3606 = vmatpush2.bf16.msra.mxu0 0
      %3607 = vmatprep.subr.bf16.mxu0 0
      %3608 = vmatpush2.bf16.msra.mxu0 0
      %3609 = vmatprep.mubr.bf16.mxu0 0
      %3610 = vmatmul.mubr.bf16.gmra.mxu0 %v3491
      %v3611 = vpop.f32.mrf.mxu0
      %v3612 = vadd.f32 %v3528, %v3611
      %v3613 = vpop.f32.mrf.mxu0
      %v3614 = vpop.f32.mrf.mxu0
      %v3615 = vadd.f32 %v3528, %v3614
      %v3616 = vpop.f32.mrf.mxu0
      %3617 = vmatprep.mubr.bf16.mxu0 0
      %3618 = vmatmul.mubr.bf16.gmra.mxu0 %v3492
      %v3619 = vpop.f32.mrf.mxu0
      %v3620 = vadd.f32 %v3528, %v3619
      %v3621 = vpop.f32.mrf.mxu0
      %v3622 = vpop.f32.mrf.mxu0
      %v3623 = vadd.f32 %v3528, %v3622
      %v3624 = vpop.f32.mrf.mxu0
      %3625 = vmatprep.mubr.bf16.mxu0 0
      %3626 = vmatmul.mubr.bf16.gmra.mxu0 %v3493
      %v3627 = vpop.f32.mrf.mxu0
      %v3628 = vadd.f32 %v3528, %v3627
      %v3629 = vpop.f32.mrf.mxu0
      %v3630 = vpop.f32.mrf.mxu0
      %v3631 = vadd.f32 %v3528, %v3630
      %v3632 = vpop.f32.mrf.mxu0
      %3633 = vmatprep.mubr.bf16.mxu0 0
      %3634 = vmatmul.mubr.bf16.gmra.mxu0 %v3494
      %v3635 = vpop.f32.mrf.mxu0
      %v3636 = vadd.f32 %v3528, %v3635
      %v3637 = vpop.f32.mrf.mxu0
      %v3638 = vpop.f32.mrf.mxu0
      %v3639 = vadd.f32 %v3528, %v3638
      %v3640 = vpop.f32.mrf.mxu0
      %3641 = vmatprep.mubr.bf16.mxu0 0
      %3642 = vmatmul.mubr.bf16.gmra.mxu0 %v3495
      %v3643 = vpop.f32.mrf.mxu0
      %v3644 = vadd.f32 %v3528, %v3643
      %v3645 = vpop.f32.mrf.mxu0
      %v3646 = vpop.f32.mrf.mxu0
      %v3647 = vadd.f32 %v3528, %v3646
      %v3648 = vpop.f32.mrf.mxu0
      %3649 = vmatprep.mubr.bf16.mxu0 0
      %3650 = vmatmul.mubr.bf16.gmra.mxu0 %v3496
      %v3651 = vpop.f32.mrf.mxu0
      %v3652 = vadd.f32 %v3528, %v3651
      %v3653 = vpop.f32.mrf.mxu0
      %v3654 = vpop.f32.mrf.mxu0
      %v3655 = vadd.f32 %v3528, %v3654
      %v3656 = vpop.f32.mrf.mxu0
      %3657 = vmatprep.mubr.bf16.mxu0 0
      %3658 = vmatmul.mubr.bf16.gmra.mxu0 %v3497
      %v3659 = vpop.f32.mrf.mxu0
      %v3660 = vadd.f32 %v3528, %v3659
      %v3661 = vpop.f32.mrf.mxu0
      %v3662 = vpop.f32.mrf.mxu0
      %v3663 = vadd.f32 %v3528, %v3662
      %v3664 = vpop.f32.mrf.mxu0
      %3665 = vmatprep.mubr.bf16.mxu0 0
      %3666 = vmatmul.mubr.bf16.gmra.mxu0 %v3498
      %v3667 = vpop.f32.mrf.mxu0
      %v3668 = vadd.f32 %v3528, %v3667
      %v3669 = vpop.f32.mrf.mxu0
      %v3670 = vpop.f32.mrf.mxu0
      %v3671 = vadd.f32 %v3528, %v3670
      %v3672 = vpop.f32.mrf.mxu0
      %3673 = vmatprep.mubr.bf16.mxu0 0
      %3674 = vmatmul.mubr.bf16.gmra.mxu0 %v3499
      %v3675 = vpop.f32.mrf.mxu0
      %v3676 = vadd.f32 %v3528, %v3675
      %v3677 = vpop.f32.mrf.mxu0
      %v3678 = vpop.f32.mrf.mxu0
      %v3679 = vadd.f32 %v3528, %v3678
      %v3680 = vpop.f32.mrf.mxu0
      %3681 = vmatprep.mubr.bf16.mxu0 0
      %3682 = vmatmul.mubr.bf16.gmra.mxu0 %v3500
      %v3683 = vpop.f32.mrf.mxu0
      %v3684 = vadd.f32 %v3528, %v3683
      %v3685 = vpop.f32.mrf.mxu0
      %v3686 = vpop.f32.mrf.mxu0
      %v3687 = vadd.f32 %v3528, %v3686
      %v3688 = vpop.f32.mrf.mxu0
      %3689 = vmatprep.mubr.bf16.mxu0 0
      %3690 = vmatmul.mubr.bf16.gmra.mxu0 %v3501
      %v3691 = vpop.f32.mrf.mxu0
      %v3692 = vadd.f32 %v3528, %v3691
      %v3693 = vpop.f32.mrf.mxu0
      %v3694 = vpop.f32.mrf.mxu0
      %v3695 = vadd.f32 %v3528, %v3694
      %v3696 = vpop.f32.mrf.mxu0
      %3697 = vmatprep.mubr.bf16.mxu0 0
      %3698 = vmatmul.mubr.bf16.gmra.mxu0 %v3502
      %v3699 = vpop.f32.mrf.mxu0
      %v3700 = vadd.f32 %v3528, %v3699
      %v3701 = vpop.f32.mrf.mxu0
      %v3702 = vpop.f32.mrf.mxu0
      %v3703 = vadd.f32 %v3528, %v3702
      %v3704 = vpop.f32.mrf.mxu0
      %3705 = vmatprep.mubr.bf16.mxu0 0
      %3706 = vmatmul.mubr.bf16.gmra.mxu0 %v3503
      %v3707 = vpop.f32.mrf.mxu0
      %v3708 = vadd.f32 %v3528, %v3707
      %v3709 = vpop.f32.mrf.mxu0
      %v3710 = vpop.f32.mrf.mxu0
      %v3711 = vadd.f32 %v3528, %v3710
      %v3712 = vpop.f32.mrf.mxu0
      %3713 = vmatprep.mubr.bf16.mxu0 0
      %3714 = vmatmul.mubr.bf16.gmra.mxu0 %v3504
      %v3715 = vpop.f32.mrf.mxu0
      %v3716 = vadd.f32 %v3528, %v3715
      %v3717 = vpop.f32.mrf.mxu0
      %v3718 = vpop.f32.mrf.mxu0
      %v3719 = vadd.f32 %v3528, %v3718
      %v3720 = vpop.f32.mrf.mxu0
      %3721 = vmatprep.mubr.bf16.mxu0 0
      %3722 = vmatmul.mubr.bf16.gmra.mxu0 %v3505
      %v3723 = vpop.f32.mrf.mxu0
      %v3724 = vadd.f32 %v3528, %v3723
      %v3725 = vpop.f32.mrf.mxu0
      %v3726 = vpop.f32.mrf.mxu0
      %v3727 = vadd.f32 %v3528, %v3726
      %v3728 = vpop.f32.mrf.mxu0
      %3729 = vmatprep.mubr.bf16.mxu0 0
      %3730 = vmatmul.mubr.bf16.gmra.mxu0 %v3506
      %v3731 = vpop.f32.mrf.mxu0
      %v3732 = vadd.f32 %v3528, %v3731
      %v3733 = vpop.f32.mrf.mxu0
      %v3734 = vpop.f32.mrf.mxu0
      %v3735 = vadd.f32 %v3528, %v3734
      %v3736 = vpop.f32.mrf.mxu0
      %3737 = vdwg.mxu0
      %v3738 = vadd.f32 %v3148, %v3612
      %v3739 = vadd.f32 %v3149, %v3615
      %v3740 = vadd.f32 %v3150, %v3620
      %v3741 = vadd.f32 %v3151, %v3623
      %v3742 = vadd.f32 %v3152, %v3628
      %v3743 = vadd.f32 %v3153, %v3631
      %v3744 = vadd.f32 %v3154, %v3636
      %v3745 = vadd.f32 %v3155, %v3639
      %v3746 = vadd.f32 %v3156, %v3644
      %v3747 = vadd.f32 %v3157, %v3647
      %v3748 = vadd.f32 %v3158, %v3652
      %v3749 = vadd.f32 %v3159, %v3655
      %v3750 = vadd.f32 %v3160, %v3660
      %v3751 = vadd.f32 %v3161, %v3663
      %v3752 = vadd.f32 %v3162, %v3668
      %v3753 = vadd.f32 %v3163, %v3671
      %v3754 = vadd.f32 %v3164, %v3676
      %v3755 = vadd.f32 %v3165, %v3679
      %v3756 = vadd.f32 %v3166, %v3684
      %v3757 = vadd.f32 %v3167, %v3687
      %v3758 = vadd.f32 %v3168, %v3692
      %v3759 = vadd.f32 %v3169, %v3695
      %v3760 = vadd.f32 %v3170, %v3700
      %v3761 = vadd.f32 %v3171, %v3703
      %v3762 = vadd.f32 %v3172, %v3708
      %v3763 = vadd.f32 %v3173, %v3711
      %v3764 = vadd.f32 %v3174, %v3716
      %v3765 = vadd.f32 %v3175, %v3719
      %v3766 = vadd.f32 %v3176, %v3724
      %v3767 = vadd.f32 %v3177, %v3727
      %v3768 = vadd.f32 %v3178, %v3732
      %v3769 = vadd.f32 %v3179, %v3735
      %v3770 = vadd.f32 %v3738, %v1128
      %v3771 = vadd.f32 %v3739, %v1132
      %v3772 = vadd.f32 %v3740, %v1138
      %v3773 = vadd.f32 %v3741, %v1142
      %v3774 = vadd.f32 %v3742, %v1148
      %v3775 = vadd.f32 %v3743, %v1152
      %v3776 = vadd.f32 %v3744, %v1158
      %v3777 = vadd.f32 %v3745, %v1162
      %v3778 = vadd.f32 %v3746, %v1168
      %v3779 = vadd.f32 %v3747, %v1172
      %v3780 = vadd.f32 %v3748, %v1178
      %v3781 = vadd.f32 %v3749, %v1182
      %v3782 = vadd.f32 %v3750, %v1188
      %v3783 = vadd.f32 %v3751, %v1192
      %v3784 = vadd.f32 %v3752, %v1198
      %v3785 = vadd.f32 %v3753, %v1202
      %v3786 = vadd.f32 %v3754, %v1208
      %v3787 = vadd.f32 %v3755, %v1212
      %v3788 = vadd.f32 %v3756, %v1218
      %v3789 = vadd.f32 %v3757, %v1222
      %v3790 = vadd.f32 %v3758, %v1228
      %v3791 = vadd.f32 %v3759, %v1232
      %v3792 = vadd.f32 %v3760, %v1238
      %v3793 = vadd.f32 %v3761, %v1242
      %v3794 = vadd.f32 %v3762, %v1248
      %v3795 = vadd.f32 %v3763, %v1252
      %v3796 = vadd.f32 %v3764, %v1258
      %v3797 = vadd.f32 %v3765, %v1262
      %v3798 = vadd.f32 %v3766, %v1268
      %v3799 = vadd.f32 %v3767, %v1272
      %v3800 = vadd.f32 %v3768, %v1278
      %v3801 = vadd.f32 %v3769, %v1282
      %v3802 = vmax.f32 %v3770, 0.0
      %v3803 = vmax.f32 %v3771, 0.0
      %v3804 = vmax.f32 %v3772, 0.0
      %v3805 = vmax.f32 %v3773, 0.0
      %v3806 = vmax.f32 %v3774, 0.0
      %v3807 = vmax.f32 %v3775, 0.0
      %v3808 = vmax.f32 %v3776, 0.0
      %v3809 = vmax.f32 %v3777, 0.0
      %v3810 = vmax.f32 %v3778, 0.0
      %v3811 = vmax.f32 %v3779, 0.0
      %v3812 = vmax.f32 %v3780, 0.0
      %v3813 = vmax.f32 %v3781, 0.0
      %v3814 = vmax.f32 %v3782, 0.0
      %v3815 = vmax.f32 %v3783, 0.0
      %v3816 = vmax.f32 %v3784, 0.0
      %v3817 = vmax.f32 %v3785, 0.0
      %v3818 = vmax.f32 %v3786, 0.0
      %v3819 = vmax.f32 %v3787, 0.0
      %v3820 = vmax.f32 %v3788, 0.0
      %v3821 = vmax.f32 %v3789, 0.0
      %v3822 = vmax.f32 %v3790, 0.0
      %v3823 = vmax.f32 %v3791, 0.0
      %v3824 = vmax.f32 %v3792, 0.0
      %v3825 = vmax.f32 %v3793, 0.0
      %v3826 = vmax.f32 %v3794, 0.0
      %v3827 = vmax.f32 %v3795, 0.0
      %v3828 = vmax.f32 %v3796, 0.0
      %v3829 = vmax.f32 %v3797, 0.0
      %v3830 = vmax.f32 %v3798, 0.0
      %v3831 = vmax.f32 %v3799, 0.0
      %v3832 = vmax.f32 %v3800, 0.0
      %v3833 = vmax.f32 %v3801, 0.0
      %v3834 = vpack.c.bf16 %v3803, %v3802
      %v3835 = vpack.c.bf16 %v3805, %v3804
      %v3836 = vpack.c.bf16 %v3807, %v3806
      %v3837 = vpack.c.bf16 %v3809, %v3808
      %v3838 = vpack.c.bf16 %v3811, %v3810
      %v3839 = vpack.c.bf16 %v3813, %v3812
      %v3840 = vpack.c.bf16 %v3815, %v3814
      %v3841 = vpack.c.bf16 %v3817, %v3816
      %v3842 = vpack.c.bf16 %v3819, %v3818
      %v3843 = vpack.c.bf16 %v3821, %v3820
      %v3844 = vpack.c.bf16 %v3823, %v3822
      %v3845 = vpack.c.bf16 %v3825, %v3824
      %v3846 = vpack.c.bf16 %v3827, %v3826
      %v3847 = vpack.c.bf16 %v3829, %v3828
      %v3848 = vpack.c.bf16 %v3831, %v3830
      %v3849 = vpack.c.bf16 %v3833, %v3832
      %s3850 = scalar_lea.vmem %s3, 256
      %v3851 = vld [vmem:[%s3850] sm:$0xf]
      %v3852 = vld [vmem:[%s3850 + $0x4] sm:$0xf]
      %v3853 = vld [vmem:[%s3850 + $0x8] sm:$0xf]
      %v3854 = vld [vmem:[%s3850 + $0xc] sm:$0xf]
      %v3855 = vld [vmem:[%s3850 + $0x10] sm:$0xf]
      %v3856 = vld [vmem:[%s3850 + $0x14] sm:$0xf]
      %v3857 = vld [vmem:[%s3850 + $0x18] sm:$0xf]
      %v3858 = vld [vmem:[%s3850 + $0x1c] sm:$0xf]
      %v3859 = vld [vmem:[%s3850 + $0x20] sm:$0xf]
      %v3860 = vld [vmem:[%s3850 + $0x24] sm:$0xf]
      %v3861 = vld [vmem:[%s3850 + $0x28] sm:$0xf]
      %v3862 = vld [vmem:[%s3850 + $0x2c] sm:$0xf]
      %v3863 = vld [vmem:[%s3850 + $0x30] sm:$0xf]
      %v3864 = vld [vmem:[%s3850 + $0x34] sm:$0xf]
      %v3865 = vld [vmem:[%s3850 + $0x38] sm:$0xf]
      %v3866 = vld [vmem:[%s3850 + $0x3c] sm:$0xf]
      %v3867 = vld [vmem:[%s4 + $0x4] sm:$0x1]
      %v3868 = vlaneseq
      %v3869 = vshrl.u32 %v3868, 7
      %v3870 = vsub.s32 0, %v3869
      %v3871 = vrot.slane %v3867, %v3870
      %v3888 = vunpack.c.l.b16 %v3851
      %v3889 = vunpack.c.l.b16 %v3852
      %v3890 = vunpack.c.l.b16 %v3853
      %v3891 = vunpack.c.l.b16 %v3854
      %v3892 = vunpack.c.l.b16 %v3855
      %v3893 = vunpack.c.l.b16 %v3856
      %v3894 = vunpack.c.l.b16 %v3857
      %v3895 = vunpack.c.l.b16 %v3858
      %v3896 = vunpack.c.l.b16 %v3859
      %v3897 = vunpack.c.l.b16 %v3860
      %v3898 = vunpack.c.l.b16 %v3861
      %v3899 = vunpack.c.l.b16 %v3862
      %v3900 = vunpack.c.l.b16 %v3863
      %v3901 = vunpack.c.l.b16 %v3864
      %v3902 = vunpack.c.l.b16 %v3865
      %v3903 = vunpack.c.l.b16 %v3866
      %v3904 = vpack.c.b16 %v3889, %v3888
      %v3905 = vpack.c.b16 %v3891, %v3890
      %v3906 = vpack.c.b16 %v3893, %v3892
      %v3907 = vpack.c.b16 %v3895, %v3894
      %v3908 = vpack.c.b16 %v3897, %v3896
      %v3909 = vpack.c.b16 %v3899, %v3898
      %v3910 = vpack.c.b16 %v3901, %v3900
      %v3911 = vpack.c.b16 %v3903, %v3902
      %3920 = vmatprep.subr.bf16.mxu0 0
      %3921 = vmatpush1.bf16.msra.mxu0 %v3911
      %3922 = vmatprep.subr.bf16.mxu0 0
      %3923 = vmatpush1.bf16.msra.mxu0 %v3910
      %3924 = vmatprep.subr.bf16.mxu0 0
      %3925 = vmatpush1.bf16.msra.mxu0 %v3909
      %3926 = vmatprep.subr.bf16.mxu0 0
      %3927 = vmatpush1.bf16.msra.mxu0 %v3908
      %3928 = vmatprep.subr.bf16.mxu0 0
      %3929 = vmatpush1.bf16.msra.mxu0 %v3907
      %3930 = vmatprep.subr.bf16.mxu0 0
      %3931 = vmatpush1.bf16.msra.mxu0 %v3906
      %3932 = vmatprep.subr.bf16.mxu0 0
      %3933 = vmatpush1.bf16.msra.mxu0 %v3905
      %3934 = vmatprep.subr.bf16.mxu0 0
      %3935 = vmatpush1.bf16.msra.mxu0 %v3904
      %3936 = vmatprep.subr.bf16.mxu0 0
      %3937 = vmatpush2.bf16.msra.mxu0 0
      %3938 = vmatprep.subr.bf16.mxu0 0
      %3939 = vmatpush2.bf16.msra.mxu0 0
      %3940 = vmatprep.subr.bf16.mxu0 0
      %3941 = vmatpush2.bf16.msra.mxu0 0
      %3942 = vmatprep.subr.bf16.mxu0 0
      %3943 = vmatpush2.bf16.msra.mxu0 0
      %3944 = vmatprep.subr.bf16.mxu0 0
      %3945 = vmatpush2.bf16.msra.mxu0 0
      %3946 = vmatprep.subr.bf16.mxu0 0
      %3947 = vmatpush2.bf16.msra.mxu0 0
      %3948 = vmatprep.subr.bf16.mxu0 0
      %3949 = vmatpush2.bf16.msra.mxu0 0
      %3950 = vmatprep.subr.bf16.mxu0 0
      %3951 = vmatpush2.bf16.msra.mxu0 0
      %3952 = vmatprep.mubr.bf16.mxu0 0
      %3953 = vmatmul.mubr.bf16.gmra.mxu0 %v3834
      %v3954 = vpop.f32.mrf.mxu0
      %v3955 = vadd.f32 %v3871, %v3954
      %v3956 = vpop.f32.mrf.mxu0
      %v3957 = vpop.f32.mrf.mxu0
      %v3958 = vadd.f32 %v3871, %v3957
      %v3959 = vpop.f32.mrf.mxu0
      %3960 = vmatprep.mubr.bf16.mxu0 0
      %3961 = vmatmul.mubr.bf16.gmra.mxu0 %v3835
      %v3962 = vpop.f32.mrf.mxu0
      %v3963 = vadd.f32 %v3871, %v3962
      %v3964 = vpop.f32.mrf.mxu0
      %v3965 = vpop.f32.mrf.mxu0
      %v3966 = vadd.f32 %v3871, %v3965
      %v3967 = vpop.f32.mrf.mxu0
      %3968 = vmatprep.mubr.bf16.mxu0 0
      %3969 = vmatmul.mubr.bf16.gmra.mxu0 %v3836
      %v3970 = vpop.f32.mrf.mxu0
      %v3971 = vadd.f32 %v3871, %v3970
      %v3972 = vpop.f32.mrf.mxu0
      %v3973 = vpop.f32.mrf.mxu0
      %v3974 = vadd.f32 %v3871, %v3973
      %v3975 = vpop.f32.mrf.mxu0
      %3976 = vmatprep.mubr.bf16.mxu0 0
      %3977 = vmatmul.mubr.bf16.gmra.mxu0 %v3837
      %v3978 = vpop.f32.mrf.mxu0
      %v3979 = vadd.f32 %v3871, %v3978
      %v3980 = vpop.f32.mrf.mxu0
      %v3981 = vpop.f32.mrf.mxu0
      %v3982 = vadd.f32 %v3871, %v3981
      %v3983 = vpop.f32.mrf.mxu0
      %3984 = vmatprep.mubr.bf16.mxu0 0
      %3985 = vmatmul.mubr.bf16.gmra.mxu0 %v3838
      %v3986 = vpop.f32.mrf.mxu0
      %v3987 = vadd.f32 %v3871, %v3986
      %v3988 = vpop.f32.mrf.mxu0
      %v3989 = vpop.f32.mrf.mxu0
      %v3990 = vadd.f32 %v3871, %v3989
      %v3991 = vpop.f32.mrf.mxu0
      %3992 = vmatprep.mubr.bf16.mxu0 0
      %3993 = vmatmul.mubr.bf16.gmra.mxu0 %v3839
      %v3994 = vpop.f32.mrf.mxu0
      %v3995 = vadd.f32 %v3871, %v3994
      %v3996 = vpop.f32.mrf.mxu0
      %v3997 = vpop.f32.mrf.mxu0
      %v3998 = vadd.f32 %v3871, %v3997
      %v3999 = vpop.f32.mrf.mxu0
      %4000 = vmatprep.mubr.bf16.mxu0 0
      %4001 = vmatmul.mubr.bf16.gmra.mxu0 %v3840
      %v4002 = vpop.f32.mrf.mxu0
      %v4003 = vadd.f32 %v3871, %v4002
      %v4004 = vpop.f32.mrf.mxu0
      %v4005 = vpop.f32.mrf.mxu0
      %v4006 = vadd.f32 %v3871, %v4005
      %v4007 = vpop.f32.mrf.mxu0
      %4008 = vmatprep.mubr.bf16.mxu0 0
      %4009 = vmatmul.mubr.bf16.gmra.mxu0 %v3841
      %v4010 = vpop.f32.mrf.mxu0
      %v4011 = vadd.f32 %v3871, %v4010
      %v4012 = vpop.f32.mrf.mxu0
      %v4013 = vpop.f32.mrf.mxu0
      %v4014 = vadd.f32 %v3871, %v4013
      %v4015 = vpop.f32.mrf.mxu0
      %4016 = vmatprep.mubr.bf16.mxu0 0
      %4017 = vmatmul.mubr.bf16.gmra.mxu0 %v3842
      %v4018 = vpop.f32.mrf.mxu0
      %v4019 = vadd.f32 %v3871, %v4018
      %v4020 = vpop.f32.mrf.mxu0
      %v4021 = vpop.f32.mrf.mxu0
      %v4022 = vadd.f32 %v3871, %v4021
      %v4023 = vpop.f32.mrf.mxu0
      %4024 = vmatprep.mubr.bf16.mxu0 0
      %4025 = vmatmul.mubr.bf16.gmra.mxu0 %v3843
      %v4026 = vpop.f32.mrf.mxu0
      %v4027 = vadd.f32 %v3871, %v4026
      %v4028 = vpop.f32.mrf.mxu0
      %v4029 = vpop.f32.mrf.mxu0
      %v4030 = vadd.f32 %v3871, %v4029
      %v4031 = vpop.f32.mrf.mxu0
      %4032 = vmatprep.mubr.bf16.mxu0 0
      %4033 = vmatmul.mubr.bf16.gmra.mxu0 %v3844
      %v4034 = vpop.f32.mrf.mxu0
      %v4035 = vadd.f32 %v3871, %v4034
      %v4036 = vpop.f32.mrf.mxu0
      %v4037 = vpop.f32.mrf.mxu0
      %v4038 = vadd.f32 %v3871, %v4037
      %v4039 = vpop.f32.mrf.mxu0
      %4040 = vmatprep.mubr.bf16.mxu0 0
      %4041 = vmatmul.mubr.bf16.gmra.mxu0 %v3845
      %v4042 = vpop.f32.mrf.mxu0
      %v4043 = vadd.f32 %v3871, %v4042
      %v4044 = vpop.f32.mrf.mxu0
      %v4045 = vpop.f32.mrf.mxu0
      %v4046 = vadd.f32 %v3871, %v4045
      %v4047 = vpop.f32.mrf.mxu0
      %4048 = vmatprep.mubr.bf16.mxu0 0
      %4049 = vmatmul.mubr.bf16.gmra.mxu0 %v3846
      %v4050 = vpop.f32.mrf.mxu0
      %v4051 = vadd.f32 %v3871, %v4050
      %v4052 = vpop.f32.mrf.mxu0
      %v4053 = vpop.f32.mrf.mxu0
      %v4054 = vadd.f32 %v3871, %v4053
      %v4055 = vpop.f32.mrf.mxu0
      %4056 = vmatprep.mubr.bf16.mxu0 0
      %4057 = vmatmul.mubr.bf16.gmra.mxu0 %v3847
      %v4058 = vpop.f32.mrf.mxu0
      %v4059 = vadd.f32 %v3871, %v4058
      %v4060 = vpop.f32.mrf.mxu0
      %v4061 = vpop.f32.mrf.mxu0
      %v4062 = vadd.f32 %v3871, %v4061
      %v4063 = vpop.f32.mrf.mxu0
      %4064 = vmatprep.mubr.bf16.mxu0 0
      %4065 = vmatmul.mubr.bf16.gmra.mxu0 %v3848
      %v4066 = vpop.f32.mrf.mxu0
      %v4067 = vadd.f32 %v3871, %v4066
      %v4068 = vpop.f32.mrf.mxu0
      %v4069 = vpop.f32.mrf.mxu0
      %v4070 = vadd.f32 %v3871, %v4069
      %v4071 = vpop.f32.mrf.mxu0
      %4072 = vmatprep.mubr.bf16.mxu0 0
      %4073 = vmatmul.mubr.bf16.gmra.mxu0 %v3849
      %v4074 = vpop.f32.mrf.mxu0
      %v4075 = vadd.f32 %v3871, %v4074
      %v4076 = vpop.f32.mrf.mxu0
      %v4077 = vpop.f32.mrf.mxu0
      %v4078 = vadd.f32 %v3871, %v4077
      %v4079 = vpop.f32.mrf.mxu0
      %4080 = vdwg.mxu0
      %v4081 = vmax.f32 %v3955, 0.0
      %v4082 = vmax.f32 %v3958, 0.0
      %v4083 = vmax.f32 %v3963, 0.0
      %v4084 = vmax.f32 %v3966, 0.0
      %v4085 = vmax.f32 %v3971, 0.0
      %v4086 = vmax.f32 %v3974, 0.0
      %v4087 = vmax.f32 %v3979, 0.0
      %v4088 = vmax.f32 %v3982, 0.0
      %v4089 = vmax.f32 %v3987, 0.0
      %v4090 = vmax.f32 %v3990, 0.0
      %v4091 = vmax.f32 %v3995, 0.0
      %v4092 = vmax.f32 %v3998, 0.0
      %v4093 = vmax.f32 %v4003, 0.0
      %v4094 = vmax.f32 %v4006, 0.0
      %v4095 = vmax.f32 %v4011, 0.0
      %v4096 = vmax.f32 %v4014, 0.0
      %v4097 = vmax.f32 %v4019, 0.0
      %v4098 = vmax.f32 %v4022, 0.0
      %v4099 = vmax.f32 %v4027, 0.0
      %v4100 = vmax.f32 %v4030, 0.0
      %v4101 = vmax.f32 %v4035, 0.0
      %v4102 = vmax.f32 %v4038, 0.0
      %v4103 = vmax.f32 %v4043, 0.0
      %v4104 = vmax.f32 %v4046, 0.0
      %v4105 = vmax.f32 %v4051, 0.0
      %v4106 = vmax.f32 %v4054, 0.0
      %v4107 = vmax.f32 %v4059, 0.0
      %v4108 = vmax.f32 %v4062, 0.0
      %v4109 = vmax.f32 %v4067, 0.0
      %v4110 = vmax.f32 %v4070, 0.0
      %v4111 = vmax.f32 %v4075, 0.0
      %v4112 = vmax.f32 %v4078, 0.0
      %v4113 = vpack.c.bf16 %v4082, %v4081
      %v4114 = vpack.c.bf16 %v4084, %v4083
      %v4115 = vpack.c.bf16 %v4086, %v4085
      %v4116 = vpack.c.bf16 %v4088, %v4087
      %v4117 = vpack.c.bf16 %v4090, %v4089
      %v4118 = vpack.c.bf16 %v4092, %v4091
      %v4119 = vpack.c.bf16 %v4094, %v4093
      %v4120 = vpack.c.bf16 %v4096, %v4095
      %v4121 = vpack.c.bf16 %v4098, %v4097
      %v4122 = vpack.c.bf16 %v4100, %v4099
      %v4123 = vpack.c.bf16 %v4102, %v4101
      %v4124 = vpack.c.bf16 %v4104, %v4103
      %v4125 = vpack.c.bf16 %v4106, %v4105
      %v4126 = vpack.c.bf16 %v4108, %v4107
      %v4127 = vpack.c.bf16 %v4110, %v4109
      %v4128 = vpack.c.bf16 %v4112, %v4111
      %s4129 = scalar_lea.vmem %s5, 256
      %v4130 = vld [vmem:[%s4129] sm:$0xf]
      %v4131 = vld [vmem:[%s4129 + $0x4] sm:$0xf]
      %v4132 = vld [vmem:[%s4129 + $0x8] sm:$0xf]
      %v4133 = vld [vmem:[%s4129 + $0xc] sm:$0xf]
      %v4134 = vld [vmem:[%s4129 + $0x10] sm:$0xf]
      %v4135 = vld [vmem:[%s4129 + $0x14] sm:$0xf]
      %v4136 = vld [vmem:[%s4129 + $0x18] sm:$0xf]
      %v4137 = vld [vmem:[%s4129 + $0x1c] sm:$0xf]
      %v4138 = vld [vmem:[%s4129 + $0x20] sm:$0xf]
      %v4139 = vld [vmem:[%s4129 + $0x24] sm:$0xf]
      %v4140 = vld [vmem:[%s4129 + $0x28] sm:$0xf]
      %v4141 = vld [vmem:[%s4129 + $0x2c] sm:$0xf]
      %v4142 = vld [vmem:[%s4129 + $0x30] sm:$0xf]
      %v4143 = vld [vmem:[%s4129 + $0x34] sm:$0xf]
      %v4144 = vld [vmem:[%s4129 + $0x38] sm:$0xf]
      %v4145 = vld [vmem:[%s4129 + $0x3c] sm:$0xf]
      %v4146 = vld [vmem:[%s6 + $0x4] sm:$0x1]
      %v4147 = vlaneseq
      %v4148 = vshrl.u32 %v4147, 7
      %v4149 = vsub.s32 0, %v4148
      %v4150 = vrot.slane %v4146, %v4149
      %v4167 = vunpack.c.l.b16 %v4130
      %v4168 = vunpack.c.l.b16 %v4131
      %v4169 = vunpack.c.l.b16 %v4132
      %v4170 = vunpack.c.l.b16 %v4133
      %v4171 = vunpack.c.l.b16 %v4134
      %v4172 = vunpack.c.l.b16 %v4135
      %v4173 = vunpack.c.l.b16 %v4136
      %v4174 = vunpack.c.l.b16 %v4137
      %v4175 = vunpack.c.l.b16 %v4138
      %v4176 = vunpack.c.l.b16 %v4139
      %v4177 = vunpack.c.l.b16 %v4140
      %v4178 = vunpack.c.l.b16 %v4141
      %v4179 = vunpack.c.l.b16 %v4142
      %v4180 = vunpack.c.l.b16 %v4143
      %v4181 = vunpack.c.l.b16 %v4144
      %v4182 = vunpack.c.l.b16 %v4145
      %v4183 = vpack.c.b16 %v4168, %v4167
      %v4184 = vpack.c.b16 %v4170, %v4169
      %v4185 = vpack.c.b16 %v4172, %v4171
      %v4186 = vpack.c.b16 %v4174, %v4173
      %v4187 = vpack.c.b16 %v4176, %v4175
      %v4188 = vpack.c.b16 %v4178, %v4177
      %v4189 = vpack.c.b16 %v4180, %v4179
      %v4190 = vpack.c.b16 %v4182, %v4181
      %4199 = vmatprep.subr.bf16.mxu0 0
      %4200 = vmatpush1.bf16.msra.mxu0 %v4190
      %4201 = vmatprep.subr.bf16.mxu0 0
      %4202 = vmatpush1.bf16.msra.mxu0 %v4189
      %4203 = vmatprep.subr.bf16.mxu0 0
      %4204 = vmatpush1.bf16.msra.mxu0 %v4188
      %4205 = vmatprep.subr.bf16.mxu0 0
      %4206 = vmatpush1.bf16.msra.mxu0 %v4187
      %4207 = vmatprep.subr.bf16.mxu0 0
      %4208 = vmatpush1.bf16.msra.mxu0 %v4186
      %4209 = vmatprep.subr.bf16.mxu0 0
      %4210 = vmatpush1.bf16.msra.mxu0 %v4185
      %4211 = vmatprep.subr.bf16.mxu0 0
      %4212 = vmatpush1.bf16.msra.mxu0 %v4184
      %4213 = vmatprep.subr.bf16.mxu0 0
      %4214 = vmatpush1.bf16.msra.mxu0 %v4183
      %4215 = vmatprep.subr.bf16.mxu0 0
      %4216 = vmatpush2.bf16.msra.mxu0 0
      %4217 = vmatprep.subr.bf16.mxu0 0
      %4218 = vmatpush2.bf16.msra.mxu0 0
      %4219 = vmatprep.subr.bf16.mxu0 0
      %4220 = vmatpush2.bf16.msra.mxu0 0
      %4221 = vmatprep.subr.bf16.mxu0 0
      %4222 = vmatpush2.bf16.msra.mxu0 0
      %4223 = vmatprep.subr.bf16.mxu0 0
      %4224 = vmatpush2.bf16.msra.mxu0 0
      %4225 = vmatprep.subr.bf16.mxu0 0
      %4226 = vmatpush2.bf16.msra.mxu0 0
      %4227 = vmatprep.subr.bf16.mxu0 0
      %4228 = vmatpush2.bf16.msra.mxu0 0
      %4229 = vmatprep.subr.bf16.mxu0 0
      %4230 = vmatpush2.bf16.msra.mxu0 0
      %4231 = vmatprep.mubr.bf16.mxu0 0
      %4232 = vmatmul.mubr.bf16.gmra.mxu0 %v4113
      %v4233 = vpop.f32.mrf.mxu0
      %v4234 = vadd.f32 %v4150, %v4233
      %v4235 = vpop.f32.mrf.mxu0
      %v4236 = vpop.f32.mrf.mxu0
      %v4237 = vadd.f32 %v4150, %v4236
      %v4238 = vpop.f32.mrf.mxu0
      %4239 = vmatprep.mubr.bf16.mxu0 0
      %4240 = vmatmul.mubr.bf16.gmra.mxu0 %v4114
      %v4241 = vpop.f32.mrf.mxu0
      %v4242 = vadd.f32 %v4150, %v4241
      %v4243 = vpop.f32.mrf.mxu0
      %v4244 = vpop.f32.mrf.mxu0
      %v4245 = vadd.f32 %v4150, %v4244
      %v4246 = vpop.f32.mrf.mxu0
      %4247 = vmatprep.mubr.bf16.mxu0 0
      %4248 = vmatmul.mubr.bf16.gmra.mxu0 %v4115
      %v4249 = vpop.f32.mrf.mxu0
      %v4250 = vadd.f32 %v4150, %v4249
      %v4251 = vpop.f32.mrf.mxu0
      %v4252 = vpop.f32.mrf.mxu0
      %v4253 = vadd.f32 %v4150, %v4252
      %v4254 = vpop.f32.mrf.mxu0
      %4255 = vmatprep.mubr.bf16.mxu0 0
      %4256 = vmatmul.mubr.bf16.gmra.mxu0 %v4116
      %v4257 = vpop.f32.mrf.mxu0
      %v4258 = vadd.f32 %v4150, %v4257
      %v4259 = vpop.f32.mrf.mxu0
      %v4260 = vpop.f32.mrf.mxu0
      %v4261 = vadd.f32 %v4150, %v4260
      %v4262 = vpop.f32.mrf.mxu0
      %4263 = vmatprep.mubr.bf16.mxu0 0
      %4264 = vmatmul.mubr.bf16.gmra.mxu0 %v4117
      %v4265 = vpop.f32.mrf.mxu0
      %v4266 = vadd.f32 %v4150, %v4265
      %v4267 = vpop.f32.mrf.mxu0
      %v4268 = vpop.f32.mrf.mxu0
      %v4269 = vadd.f32 %v4150, %v4268
      %v4270 = vpop.f32.mrf.mxu0
      %4271 = vmatprep.mubr.bf16.mxu0 0
      %4272 = vmatmul.mubr.bf16.gmra.mxu0 %v4118
      %v4273 = vpop.f32.mrf.mxu0
      %v4274 = vadd.f32 %v4150, %v4273
      %v4275 = vpop.f32.mrf.mxu0
      %v4276 = vpop.f32.mrf.mxu0
      %v4277 = vadd.f32 %v4150, %v4276
      %v4278 = vpop.f32.mrf.mxu0
      %4279 = vmatprep.mubr.bf16.mxu0 0
      %4280 = vmatmul.mubr.bf16.gmra.mxu0 %v4119
      %v4281 = vpop.f32.mrf.mxu0
      %v4282 = vadd.f32 %v4150, %v4281
      %v4283 = vpop.f32.mrf.mxu0
      %v4284 = vpop.f32.mrf.mxu0
      %v4285 = vadd.f32 %v4150, %v4284
      %v4286 = vpop.f32.mrf.mxu0
      %4287 = vmatprep.mubr.bf16.mxu0 0
      %4288 = vmatmul.mubr.bf16.gmra.mxu0 %v4120
      %v4289 = vpop.f32.mrf.mxu0
      %v4290 = vadd.f32 %v4150, %v4289
      %v4291 = vpop.f32.mrf.mxu0
      %v4292 = vpop.f32.mrf.mxu0
      %v4293 = vadd.f32 %v4150, %v4292
      %v4294 = vpop.f32.mrf.mxu0
      %4295 = vmatprep.mubr.bf16.mxu0 0
      %4296 = vmatmul.mubr.bf16.gmra.mxu0 %v4121
      %v4297 = vpop.f32.mrf.mxu0
      %v4298 = vadd.f32 %v4150, %v4297
      %v4299 = vpop.f32.mrf.mxu0
      %v4300 = vpop.f32.mrf.mxu0
      %v4301 = vadd.f32 %v4150, %v4300
      %v4302 = vpop.f32.mrf.mxu0
      %4303 = vmatprep.mubr.bf16.mxu0 0
      %4304 = vmatmul.mubr.bf16.gmra.mxu0 %v4122
      %v4305 = vpop.f32.mrf.mxu0
      %v4306 = vadd.f32 %v4150, %v4305
      %v4307 = vpop.f32.mrf.mxu0
      %v4308 = vpop.f32.mrf.mxu0
      %v4309 = vadd.f32 %v4150, %v4308
      %v4310 = vpop.f32.mrf.mxu0
      %4311 = vmatprep.mubr.bf16.mxu0 0
      %4312 = vmatmul.mubr.bf16.gmra.mxu0 %v4123
      %v4313 = vpop.f32.mrf.mxu0
      %v4314 = vadd.f32 %v4150, %v4313
      %v4315 = vpop.f32.mrf.mxu0
      %v4316 = vpop.f32.mrf.mxu0
      %v4317 = vadd.f32 %v4150, %v4316
      %v4318 = vpop.f32.mrf.mxu0
      %4319 = vmatprep.mubr.bf16.mxu0 0
      %4320 = vmatmul.mubr.bf16.gmra.mxu0 %v4124
      %v4321 = vpop.f32.mrf.mxu0
      %v4322 = vadd.f32 %v4150, %v4321
      %v4323 = vpop.f32.mrf.mxu0
      %v4324 = vpop.f32.mrf.mxu0
      %v4325 = vadd.f32 %v4150, %v4324
      %v4326 = vpop.f32.mrf.mxu0
      %4327 = vmatprep.mubr.bf16.mxu0 0
      %4328 = vmatmul.mubr.bf16.gmra.mxu0 %v4125
      %v4329 = vpop.f32.mrf.mxu0
      %v4330 = vadd.f32 %v4150, %v4329
      %v4331 = vpop.f32.mrf.mxu0
      %v4332 = vpop.f32.mrf.mxu0
      %v4333 = vadd.f32 %v4150, %v4332
      %v4334 = vpop.f32.mrf.mxu0
      %4335 = vmatprep.mubr.bf16.mxu0 0
      %4336 = vmatmul.mubr.bf16.gmra.mxu0 %v4126
      %v4337 = vpop.f32.mrf.mxu0
      %v4338 = vadd.f32 %v4150, %v4337
      %v4339 = vpop.f32.mrf.mxu0
      %v4340 = vpop.f32.mrf.mxu0
      %v4341 = vadd.f32 %v4150, %v4340
      %v4342 = vpop.f32.mrf.mxu0
      %4343 = vmatprep.mubr.bf16.mxu0 0
      %4344 = vmatmul.mubr.bf16.gmra.mxu0 %v4127
      %v4345 = vpop.f32.mrf.mxu0
      %v4346 = vadd.f32 %v4150, %v4345
      %v4347 = vpop.f32.mrf.mxu0
      %v4348 = vpop.f32.mrf.mxu0
      %v4349 = vadd.f32 %v4150, %v4348
      %v4350 = vpop.f32.mrf.mxu0
      %4351 = vmatprep.mubr.bf16.mxu0 0
      %4352 = vmatmul.mubr.bf16.gmra.mxu0 %v4128
      %v4353 = vpop.f32.mrf.mxu0
      %v4354 = vadd.f32 %v4150, %v4353
      %v4355 = vpop.f32.mrf.mxu0
      %v4356 = vpop.f32.mrf.mxu0
      %v4357 = vadd.f32 %v4150, %v4356
      %v4358 = vpop.f32.mrf.mxu0
      %4359 = vdwg.mxu0
      %v4360 = vadd.f32 %v3770, %v4234
      %v4361 = vadd.f32 %v3771, %v4237
      %v4362 = vadd.f32 %v3772, %v4242
      %v4363 = vadd.f32 %v3773, %v4245
      %v4364 = vadd.f32 %v3774, %v4250
      %v4365 = vadd.f32 %v3775, %v4253
      %v4366 = vadd.f32 %v3776, %v4258
      %v4367 = vadd.f32 %v3777, %v4261
      %v4368 = vadd.f32 %v3778, %v4266
      %v4369 = vadd.f32 %v3779, %v4269
      %v4370 = vadd.f32 %v3780, %v4274
      %v4371 = vadd.f32 %v3781, %v4277
      %v4372 = vadd.f32 %v3782, %v4282
      %v4373 = vadd.f32 %v3783, %v4285
      %v4374 = vadd.f32 %v3784, %v4290
      %v4375 = vadd.f32 %v3785, %v4293
      %v4376 = vadd.f32 %v3786, %v4298
      %v4377 = vadd.f32 %v3787, %v4301
      %v4378 = vadd.f32 %v3788, %v4306
      %v4379 = vadd.f32 %v3789, %v4309
      %v4380 = vadd.f32 %v3790, %v4314
      %v4381 = vadd.f32 %v3791, %v4317
      %v4382 = vadd.f32 %v3792, %v4322
      %v4383 = vadd.f32 %v3793, %v4325
      %v4384 = vadd.f32 %v3794, %v4330
      %v4385 = vadd.f32 %v3795, %v4333
      %v4386 = vadd.f32 %v3796, %v4338
      %v4387 = vadd.f32 %v3797, %v4341
      %v4388 = vadd.f32 %v3798, %v4346
      %v4389 = vadd.f32 %v3799, %v4349
      %v4390 = vadd.f32 %v3800, %v4354
      %v4391 = vadd.f32 %v3801, %v4357
      %v4392 = vmax.f32 %v4360, 0.0
      %v4393 = vmax.f32 %v4361, 0.0
      %v4394 = vmax.f32 %v4362, 0.0
      %v4395 = vmax.f32 %v4363, 0.0
      %v4396 = vmax.f32 %v4364, 0.0
      %v4397 = vmax.f32 %v4365, 0.0
      %v4398 = vmax.f32 %v4366, 0.0
      %v4399 = vmax.f32 %v4367, 0.0
      %v4400 = vmax.f32 %v4368, 0.0
      %v4401 = vmax.f32 %v4369, 0.0
      %v4402 = vmax.f32 %v4370, 0.0
      %v4403 = vmax.f32 %v4371, 0.0
      %v4404 = vmax.f32 %v4372, 0.0
      %v4405 = vmax.f32 %v4373, 0.0
      %v4406 = vmax.f32 %v4374, 0.0
      %v4407 = vmax.f32 %v4375, 0.0
      %v4408 = vmax.f32 %v4376, 0.0
      %v4409 = vmax.f32 %v4377, 0.0
      %v4410 = vmax.f32 %v4378, 0.0
      %v4411 = vmax.f32 %v4379, 0.0
      %v4412 = vmax.f32 %v4380, 0.0
      %v4413 = vmax.f32 %v4381, 0.0
      %v4414 = vmax.f32 %v4382, 0.0
      %v4415 = vmax.f32 %v4383, 0.0
      %v4416 = vmax.f32 %v4384, 0.0
      %v4417 = vmax.f32 %v4385, 0.0
      %v4418 = vmax.f32 %v4386, 0.0
      %v4419 = vmax.f32 %v4387, 0.0
      %v4420 = vmax.f32 %v4388, 0.0
      %v4421 = vmax.f32 %v4389, 0.0
      %v4422 = vmax.f32 %v4390, 0.0
      %v4423 = vmax.f32 %v4391, 0.0
      %v4424 = vpack.c.bf16 %v4393, %v4392
      %v4425 = vpack.c.bf16 %v4395, %v4394
      %v4426 = vpack.c.bf16 %v4397, %v4396
      %v4427 = vpack.c.bf16 %v4399, %v4398
      %v4428 = vpack.c.bf16 %v4401, %v4400
      %v4429 = vpack.c.bf16 %v4403, %v4402
      %v4430 = vpack.c.bf16 %v4405, %v4404
      %v4431 = vpack.c.bf16 %v4407, %v4406
      %v4432 = vpack.c.bf16 %v4409, %v4408
      %v4433 = vpack.c.bf16 %v4411, %v4410
      %v4434 = vpack.c.bf16 %v4413, %v4412
      %v4435 = vpack.c.bf16 %v4415, %v4414
      %v4436 = vpack.c.bf16 %v4417, %v4416
      %v4437 = vpack.c.bf16 %v4419, %v4418
      %v4438 = vpack.c.bf16 %v4421, %v4420
      %v4439 = vpack.c.bf16 %v4423, %v4422
      %v4440 = vld [vmem:[%s7] sm:$0xf]
      %v4441 = vld [vmem:[%s7 + $0x4] sm:$0xf]
      %v4442 = vld [vmem:[%s7 + $0x8] sm:$0xf]
      %v4443 = vld [vmem:[%s7 + $0xc] sm:$0xf]
      %v4444 = vld [vmem:[%s7 + $0x10] sm:$0xf]
      %v4445 = vld [vmem:[%s7 + $0x14] sm:$0xf]
      %v4446 = vld [vmem:[%s7 + $0x18] sm:$0xf]
      %v4447 = vld [vmem:[%s7 + $0x1c] sm:$0xf]
      %v4448 = vld [vmem:[%s7 + $0x20] sm:$0xf]
      %v4449 = vld [vmem:[%s7 + $0x24] sm:$0xf]
      %v4450 = vld [vmem:[%s7 + $0x28] sm:$0xf]
      %v4451 = vld [vmem:[%s7 + $0x2c] sm:$0xf]
      %v4452 = vld [vmem:[%s7 + $0x30] sm:$0xf]
      %v4453 = vld [vmem:[%s7 + $0x34] sm:$0xf]
      %v4454 = vld [vmem:[%s7 + $0x38] sm:$0xf]
      %v4455 = vld [vmem:[%s7 + $0x3c] sm:$0xf]
      %v4456 = vld [vmem:[%s8] sm:$0x1]
      %v4458 = vlaneseq
      %v4459 = vshrl.u32 %v4458, 7
      %v4460 = vsub.s32 0, %v4459
      %v4461 = vrot.slane %v4456, %v4460
      %v4479 = vunpack.c.l.b16 %v4440
      %v4480 = vunpack.c.l.b16 %v4441
      %v4481 = vunpack.c.l.b16 %v4442
      %v4482 = vunpack.c.l.b16 %v4443
      %v4483 = vunpack.c.l.b16 %v4444
      %v4484 = vunpack.c.l.b16 %v4445
      %v4485 = vunpack.c.l.b16 %v4446
      %v4486 = vunpack.c.l.b16 %v4447
      %v4487 = vunpack.c.l.b16 %v4448
      %v4488 = vunpack.c.l.b16 %v4449
      %v4489 = vunpack.c.l.b16 %v4450
      %v4490 = vunpack.c.l.b16 %v4451
      %v4491 = vunpack.c.l.b16 %v4452
      %v4492 = vunpack.c.l.b16 %v4453
      %v4493 = vunpack.c.l.b16 %v4454
      %v4494 = vunpack.c.l.b16 %v4455
      %v4495 = vpack.c.b16 %v4480, %v4479
      %v4496 = vpack.c.b16 %v4482, %v4481
      %v4497 = vpack.c.b16 %v4484, %v4483
      %v4498 = vpack.c.b16 %v4486, %v4485
      %v4499 = vpack.c.b16 %v4488, %v4487
      %v4500 = vpack.c.b16 %v4490, %v4489
      %v4501 = vpack.c.b16 %v4492, %v4491
      %v4502 = vpack.c.b16 %v4494, %v4493
      %4511 = vmatprep.subr.bf16.mxu0 0
      %4512 = vmatpush1.bf16.msra.mxu0 %v4502
      %4513 = vmatprep.subr.bf16.mxu0 0
      %4514 = vmatpush1.bf16.msra.mxu0 %v4501
      %4515 = vmatprep.subr.bf16.mxu0 0
      %4516 = vmatpush1.bf16.msra.mxu0 %v4500
      %4517 = vmatprep.subr.bf16.mxu0 0
      %4518 = vmatpush1.bf16.msra.mxu0 %v4499
      %4519 = vmatprep.subr.bf16.mxu0 0
      %4520 = vmatpush1.bf16.msra.mxu0 %v4498
      %4521 = vmatprep.subr.bf16.mxu0 0
      %4522 = vmatpush1.bf16.msra.mxu0 %v4497
      %4523 = vmatprep.subr.bf16.mxu0 0
      %4524 = vmatpush1.bf16.msra.mxu0 %v4496
      %4525 = vmatprep.subr.bf16.mxu0 0
      %4526 = vmatpush1.bf16.msra.mxu0 %v4495
      %4527 = vmatprep.subr.bf16.mxu0 0
      %4528 = vmatpush2.bf16.msra.mxu0 0
      %4529 = vmatprep.subr.bf16.mxu0 0
      %4530 = vmatpush2.bf16.msra.mxu0 0
      %4531 = vmatprep.subr.bf16.mxu0 0
      %4532 = vmatpush2.bf16.msra.mxu0 0
      %4533 = vmatprep.subr.bf16.mxu0 0
      %4534 = vmatpush2.bf16.msra.mxu0 0
      %4535 = vmatprep.subr.bf16.mxu0 0
      %4536 = vmatpush2.bf16.msra.mxu0 0
      %4537 = vmatprep.subr.bf16.mxu0 0
      %4538 = vmatpush2.bf16.msra.mxu0 0
      %4539 = vmatprep.subr.bf16.mxu0 0
      %4540 = vmatpush2.bf16.msra.mxu0 0
      %4541 = vmatprep.subr.bf16.mxu0 0
      %4542 = vmatpush2.bf16.msra.mxu0 0
      %4543 = vmatprep.mubr.bf16.mxu0 0
      %4544 = vmatmul.mubr.bf16.gmra.mxu0 %v4424
      %v4545 = vpop.f32.mrf.mxu0
      %v4546 = vadd.f32 %v4461, %v4545
      %v4547 = vpop.f32.mrf.mxu0
      %v4548 = vpop.f32.mrf.mxu0
      %v4549 = vadd.f32 %v4461, %v4548
      %v4550 = vpop.f32.mrf.mxu0
      %4551 = vmatprep.mubr.bf16.mxu0 0
      %4552 = vmatmul.mubr.bf16.gmra.mxu0 %v4425
      %v4553 = vpop.f32.mrf.mxu0
      %v4554 = vadd.f32 %v4461, %v4553
      %v4555 = vpop.f32.mrf.mxu0
      %v4556 = vpop.f32.mrf.mxu0
      %v4557 = vadd.f32 %v4461, %v4556
      %v4558 = vpop.f32.mrf.mxu0
      %4559 = vmatprep.mubr.bf16.mxu0 0
      %4560 = vmatmul.mubr.bf16.gmra.mxu0 %v4426
      %v4561 = vpop.f32.mrf.mxu0
      %v4562 = vadd.f32 %v4461, %v4561
      %v4563 = vpop.f32.mrf.mxu0
      %v4564 = vpop.f32.mrf.mxu0
      %v4565 = vadd.f32 %v4461, %v4564
      %v4566 = vpop.f32.mrf.mxu0
      %4567 = vmatprep.mubr.bf16.mxu0 0
      %4568 = vmatmul.mubr.bf16.gmra.mxu0 %v4427
      %v4569 = vpop.f32.mrf.mxu0
      %v4570 = vadd.f32 %v4461, %v4569
      %v4571 = vpop.f32.mrf.mxu0
      %v4572 = vpop.f32.mrf.mxu0
      %v4573 = vadd.f32 %v4461, %v4572
      %v4574 = vpop.f32.mrf.mxu0
      %4575 = vmatprep.mubr.bf16.mxu0 0
      %4576 = vmatmul.mubr.bf16.gmra.mxu0 %v4428
      %v4577 = vpop.f32.mrf.mxu0
      %v4578 = vadd.f32 %v4461, %v4577
      %v4579 = vpop.f32.mrf.mxu0
      %v4580 = vpop.f32.mrf.mxu0
      %v4581 = vadd.f32 %v4461, %v4580
      %v4582 = vpop.f32.mrf.mxu0
      %4583 = vmatprep.mubr.bf16.mxu0 0
      %4584 = vmatmul.mubr.bf16.gmra.mxu0 %v4429
      %v4585 = vpop.f32.mrf.mxu0
      %v4586 = vadd.f32 %v4461, %v4585
      %v4587 = vpop.f32.mrf.mxu0
      %v4588 = vpop.f32.mrf.mxu0
      %v4589 = vadd.f32 %v4461, %v4588
      %v4590 = vpop.f32.mrf.mxu0
      %4591 = vmatprep.mubr.bf16.mxu0 0
      %4592 = vmatmul.mubr.bf16.gmra.mxu0 %v4430
      %v4593 = vpop.f32.mrf.mxu0
      %v4594 = vadd.f32 %v4461, %v4593
      %v4595 = vpop.f32.mrf.mxu0
      %v4596 = vpop.f32.mrf.mxu0
      %v4597 = vadd.f32 %v4461, %v4596
      %v4598 = vpop.f32.mrf.mxu0
      %4599 = vmatprep.mubr.bf16.mxu0 0
      %4600 = vmatmul.mubr.bf16.gmra.mxu0 %v4431
      %v4601 = vpop.f32.mrf.mxu0
      %v4602 = vadd.f32 %v4461, %v4601
      %v4603 = vpop.f32.mrf.mxu0
      %v4604 = vpop.f32.mrf.mxu0
      %v4605 = vadd.f32 %v4461, %v4604
      %v4606 = vpop.f32.mrf.mxu0
      %4607 = vmatprep.mubr.bf16.mxu0 0
      %4608 = vmatmul.mubr.bf16.gmra.mxu0 %v4432
      %v4609 = vpop.f32.mrf.mxu0
      %v4610 = vadd.f32 %v4461, %v4609
      %v4611 = vpop.f32.mrf.mxu0
      %v4612 = vpop.f32.mrf.mxu0
      %v4613 = vadd.f32 %v4461, %v4612
      %v4614 = vpop.f32.mrf.mxu0
      %4615 = vmatprep.mubr.bf16.mxu0 0
      %4616 = vmatmul.mubr.bf16.gmra.mxu0 %v4433
      %v4617 = vpop.f32.mrf.mxu0
      %v4618 = vadd.f32 %v4461, %v4617
      %v4619 = vpop.f32.mrf.mxu0
      %v4620 = vpop.f32.mrf.mxu0
      %v4621 = vadd.f32 %v4461, %v4620
      %v4622 = vpop.f32.mrf.mxu0
      %4623 = vmatprep.mubr.bf16.mxu0 0
      %4624 = vmatmul.mubr.bf16.gmra.mxu0 %v4434
      %v4625 = vpop.f32.mrf.mxu0
      %v4626 = vadd.f32 %v4461, %v4625
      %v4627 = vpop.f32.mrf.mxu0
      %v4628 = vpop.f32.mrf.mxu0
      %v4629 = vadd.f32 %v4461, %v4628
      %v4630 = vpop.f32.mrf.mxu0
      %4631 = vmatprep.mubr.bf16.mxu0 0
      %4632 = vmatmul.mubr.bf16.gmra.mxu0 %v4435
      %v4633 = vpop.f32.mrf.mxu0
      %v4634 = vadd.f32 %v4461, %v4633
      %v4635 = vpop.f32.mrf.mxu0
      %v4636 = vpop.f32.mrf.mxu0
      %v4637 = vadd.f32 %v4461, %v4636
      %v4638 = vpop.f32.mrf.mxu0
      %4639 = vmatprep.mubr.bf16.mxu0 0
      %4640 = vmatmul.mubr.bf16.gmra.mxu0 %v4436
      %v4641 = vpop.f32.mrf.mxu0
      %v4642 = vadd.f32 %v4461, %v4641
      %v4643 = vpop.f32.mrf.mxu0
      %v4644 = vpop.f32.mrf.mxu0
      %v4645 = vadd.f32 %v4461, %v4644
      %v4646 = vpop.f32.mrf.mxu0
      %4647 = vmatprep.mubr.bf16.mxu0 0
      %4648 = vmatmul.mubr.bf16.gmra.mxu0 %v4437
      %v4649 = vpop.f32.mrf.mxu0
      %v4650 = vadd.f32 %v4461, %v4649
      %v4651 = vpop.f32.mrf.mxu0
      %v4652 = vpop.f32.mrf.mxu0
      %v4653 = vadd.f32 %v4461, %v4652
      %v4654 = vpop.f32.mrf.mxu0
      %4655 = vmatprep.mubr.bf16.mxu0 0
      %4656 = vmatmul.mubr.bf16.gmra.mxu0 %v4438
      %v4657 = vpop.f32.mrf.mxu0
      %v4658 = vadd.f32 %v4461, %v4657
      %v4659 = vpop.f32.mrf.mxu0
      %v4660 = vpop.f32.mrf.mxu0
      %v4661 = vadd.f32 %v4461, %v4660
      %v4662 = vpop.f32.mrf.mxu0
      %4663 = vmatprep.mubr.bf16.mxu0 0
      %4664 = vmatmul.mubr.bf16.gmra.mxu0 %v4439
      %v4665 = vpop.f32.mrf.mxu0
      %v4666 = vadd.f32 %v4461, %v4665
      %v4667 = vpop.f32.mrf.mxu0
      %v4668 = vpop.f32.mrf.mxu0
      %v4669 = vadd.f32 %v4461, %v4668
      %v4670 = vpop.f32.mrf.mxu0
      %4671 = vdwg.mxu0
      %4672 = vst [vmem:[%s334] sm:$0xff] %v4546
      %4673 = vst [vmem:[%s334 + $0x8] sm:$0xff] %v4549
      %4674 = vst [vmem:[%s334 + $0x10] sm:$0xff] %v4554
      %4675 = vst [vmem:[%s334 + $0x18] sm:$0xff] %v4557
      %4676 = vst [vmem:[%s334 + $0x20] sm:$0xff] %v4562
      %4677 = vst [vmem:[%s334 + $0x28] sm:$0xff] %v4565
      %4678 = vst [vmem:[%s334 + $0x30] sm:$0xff] %v4570
      %4679 = vst [vmem:[%s334 + $0x38] sm:$0xff] %v4573
      %4680 = vst [vmem:[%s334 + $0x40] sm:$0xff] %v4578
      %4681 = vst [vmem:[%s334 + $0x48] sm:$0xff] %v4581
      %4682 = vst [vmem:[%s334 + $0x50] sm:$0xff] %v4586
      %4683 = vst [vmem:[%s334 + $0x58] sm:$0xff] %v4589
      %4684 = vst [vmem:[%s334 + $0x60] sm:$0xff] %v4594
      %4685 = vst [vmem:[%s334 + $0x68] sm:$0xff] %v4597
      %4686 = vst [vmem:[%s334 + $0x70] sm:$0xff] %v4602
      %4687 = vst [vmem:[%s334 + $0x78] sm:$0xff] %v4605
      %4688 = vst [vmem:[%s334 + $0x80] sm:$0xff] %v4610
      %4689 = vst [vmem:[%s334 + $0x88] sm:$0xff] %v4613
      %4690 = vst [vmem:[%s334 + $0x90] sm:$0xff] %v4618
      %4691 = vst [vmem:[%s334 + $0x98] sm:$0xff] %v4621
      %4692 = vst [vmem:[%s334 + $0xa0] sm:$0xff] %v4626
      %4693 = vst [vmem:[%s334 + $0xa8] sm:$0xff] %v4629
      %4694 = vst [vmem:[%s334 + $0xb0] sm:$0xff] %v4634
      %4695 = vst [vmem:[%s334 + $0xb8] sm:$0xff] %v4637
      %4696 = vst [vmem:[%s334 + $0xc0] sm:$0xff] %v4642
      %4697 = vst [vmem:[%s334 + $0xc8] sm:$0xff] %v4645
      %4698 = vst [vmem:[%s334 + $0xd0] sm:$0xff] %v4650
      %4699 = vst [vmem:[%s334 + $0xd8] sm:$0xff] %v4653
      %4700 = vst [vmem:[%s334 + $0xe0] sm:$0xff] %v4658
      %4701 = vst [vmem:[%s334 + $0xe8] sm:$0xff] %v4661
      %4702 = vst [vmem:[%s334 + $0xf0] sm:$0xff] %v4666
      %4703 = vst [vmem:[%s334 + $0xf8] sm:$0xff] %v4669
      %s4704 = smul.u32 32, %s20
      %p4705 = scmp.lt.s32.totalorder %s4704, 63
      %s4706 = scalar_select %p4705, %s4704, 63
      %s4707 = smul.addr %s4706, 8
      %s4708 = scalar_lea.vmem %s9, %s4707
      // Predicated region
      $region57: #{resnetfc_forward.1} parent=55 // pred_check
        %p4709 = pneg %p232
      $region58: #{resnetfc_forward.1} parent=55 // pred_check_branch
        %4711 = sbr.rel (%p4709) target = $region60
      $region59: #{resnetfc_forward.1} parent=55 // pred_region
        %s4712 = smul.u32 32, %s20
      $region60: #{resnetfc_forward.1} parent=55 // pred_fallthru
        _
    $region56: #{resnetfc_forward.1} parent=5 // pred_fallthru
      _
    %p4713 = scmp.le.s32.totalorder 2, %s15
    // Predicated region
    $region61: #{resnetfc_forward.1} parent=5 // pred_check
      %p4714 = pneg %p4713
    $region62: #{resnetfc_forward.1} parent=5 // pred_check_branch
      %4716 = sbr.rel (%p4714) target = $region64
    $region63: #{resnetfc_forward.1} parent=5 // pred_region
      %s4717 = ssub.s32 %s15, 2
      // Predicated region
      $region65: #{resnetfc_forward.1} parent=63 // pred_check
        %p4718 = pneg %p238
      $region66: #{resnetfc_forward.1} parent=63 // pred_check_branch
        %4720 = sbr.rel (%p4718) target = $region68
      $region67: #{resnetfc_forward.1} parent=63 // pred_region
        %s4721 = smul.u32 32, %s21
        %p4722 = scmp.lt.s32.totalorder %s4721, 63
        %s4723 = scalar_select %p4722, %s4721, 63
        %s4724 = smul.addr %s4723, 8
        %s4725 = scalar_lea.vmem %s9, %s4724
      $region68: #{resnetfc_forward.1} parent=63 // pred_fallthru
        _
    $region64: #{resnetfc_forward.1} parent=5 // pred_fallthru
      _
  $region6: #{resnetfc_forward.1} parent=0 // loop_footer
    %s19 = sadd.s32 1, %s15
  $region7: #{resnetfc_forward.1} parent=0 // loop_footer_branch
    %14 = sbr.rel target = $region3
  $region8: #{resnetfc_forward.1} parent=0 // loop_exit
    _

</llo_original>
